<compile_context>
chip_gen: v7x
topology: tpu7x:2x2x1
jax: 0.10.0
libtpu: 0.0.40
codegen_flags: <defaults>
</compile_context>

<pallas_src>
import jax
import jax.numpy as jnp
from jax.experimental import pallas as pl
from jax.experimental.pallas import tpu as pltpu

NEG_SLOPE = 0.01   # torch.nn.LeakyReLU default
TB = 256           # batch tile (rows per grid step); multiple of 256 for v6e/v7x MXU

D_IN, D_H1, D_H2, D_OUT_PAD = 784, 512, 256, 128


def _leaky_relu(x):
    return jnp.where(x > 0, x, NEG_SLOPE * x)


def discriminator_kernel(x_ref, w1_ref, b1_ref, w2_ref, b2_ref, w3_ref, b3_ref,
                         o_ref):
    # x tile: (TB, 784) bf16.  Weights bf16, biases f32.
    x = x_ref[...]

    h1 = jnp.dot(x, w1_ref[...], preferred_element_type=jnp.float32)
    h1 = _leaky_relu(h1 + b1_ref[...])                       # (TB, 512) f32

    h2 = jnp.dot(h1.astype(jnp.bfloat16), w2_ref[...],
                 preferred_element_type=jnp.float32)
    h2 = _leaky_relu(h2 + b2_ref[...])                       # (TB, 256) f32

    h3 = jnp.dot(h2.astype(jnp.bfloat16), w3_ref[...],
                 preferred_element_type=jnp.float32)
    h3 = h3 + b3_ref[...]                                    # (TB, 128) f32, lane-padded

    o_ref[...] = jax.nn.sigmoid(h3)


def init_params(key):
    """Deterministic init matching nn.Linear's U(-1/sqrt(fan_in), 1/sqrt(fan_in)).

    Weights are stored (in_features, out_features) in bf16 (MXU-native);
    biases stay f32.  The last layer is lane-padded 1 -> 128 output columns
    with zero weights (wrapper slices column 0).
    """
    k1, k2, k3, k4, k5, k6 = jax.random.split(key, 6)

    def u(k, shape, fan_in):
        bound = 1.0 / jnp.sqrt(fan_in)
        return jax.random.uniform(k, shape, jnp.float32, -bound, bound)

    w1 = u(k1, (D_IN, D_H1), float(D_IN))
    b1 = u(k2, (1, D_H1), float(D_IN))
    w2 = u(k3, (D_H1, D_H2), float(D_H1))
    b2 = u(k4, (1, D_H2), float(D_H1))
    w3 = u(k5, (D_H2, 1), float(D_H2))
    b3 = u(k6, (1, 1), float(D_H2))

    w3p = jnp.zeros((D_H2, D_OUT_PAD), jnp.float32).at[:, :1].set(w3)
    b3p = jnp.zeros((1, D_OUT_PAD), jnp.float32).at[:, :1].set(b3)

    return (w1.astype(jnp.bfloat16), b1,
            w2.astype(jnp.bfloat16), b2,
            w3p.astype(jnp.bfloat16), b3p)


def discriminator_forward(x, params):
    """x: (B, 1, 28, 28) or (B, 784) float32.  Returns (B, 1) float32."""
    w1, b1, w2, b2, w3p, b3p = params

    x2d = x.reshape(-1, D_IN)              # same semantics as torch .view(-1, 784)
    B = x2d.shape[0]
    n_tiles = pl.cdiv(B, TB)
    Bp = n_tiles * TB
    if Bp != B:
        x2d = jnp.pad(x2d, ((0, Bp - B), (0, 0)))
    x_bf16 = x2d.astype(jnp.bfloat16)

    # Advisory cost estimate for XLA's scheduler.
    flops = 2 * Bp * (D_IN * D_H1 + D_H1 * D_H2 + D_H2 * D_OUT_PAD)
    transcendentals = Bp * D_OUT_PAD
    bytes_accessed = (Bp * D_IN * 2                                    # x (bf16)
                      + (D_IN * D_H1 + D_H1 * D_H2 + D_H2 * D_OUT_PAD) * 2  # W (bf16)
                      + (D_H1 + D_H2 + D_OUT_PAD) * 4                 # biases (f32)
                      + Bp * D_OUT_PAD * 4)                            # out (f32)

    out_padded = pl.pallas_call(
        discriminator_kernel,
        out_shape=jax.ShapeDtypeStruct((Bp, D_OUT_PAD), jnp.float32),
        grid=(n_tiles,),
        in_specs=[
            pl.BlockSpec((TB, D_IN), lambda i: (i, 0)),          # x tile streams
            pl.BlockSpec((D_IN, D_H1), lambda i: (0, 0)),        # weights resident
            pl.BlockSpec((1, D_H1), lambda i: (0, 0)),
            pl.BlockSpec((D_H1, D_H2), lambda i: (0, 0)),
            pl.BlockSpec((1, D_H2), lambda i: (0, 0)),
            pl.BlockSpec((D_H2, D_OUT_PAD), lambda i: (0, 0)),
            pl.BlockSpec((1, D_OUT_PAD), lambda i: (0, 0)),
        ],
        out_specs=pl.BlockSpec((TB, D_OUT_PAD), lambda i: (i, 0)),
        compiler_params=pltpu.CompilerParams(
            dimension_semantics=("parallel",)),                  # megacore on v7x
        cost_estimate=pl.CostEstimate(
            flops=flops,
            transcendentals=transcendentals,
            bytes_accessed=bytes_accessed),
    )(x_bf16, w1, b1, w2, b2, w3p, b3p)

    return out_padded[:B, :1]              # (B, 1), matches Linear(256, 1) + Sigmoid


def reference_forward(x, params):
    """Pure-JAX reference mirroring the kernel's bf16-operand / f32-accum math."""
    w1, b1, w2, b2, w3p, b3p = params
    x2d = x.reshape(-1, D_IN).astype(jnp.bfloat16)
    h1 = jnp.dot(x2d, w1, preferred_element_type=jnp.float32) + b1
    h1 = jnp.where(h1 > 0, h1, NEG_SLOPE * h1)
    h2 = jnp.dot(h1.astype(jnp.bfloat16), w2, preferred_element_type=jnp.float32) + b2
    h2 = jnp.where(h2 > 0, h2, NEG_SLOPE * h2)
    h3 = jnp.dot(h2.astype(jnp.bfloat16), w3p[:, :1],
                 preferred_element_type=jnp.float32) + b3p[:, :1]
    return jax.nn.sigmoid(h3)


if __name__ == "__main__":
    key = jax.random.PRNGKey(0)
    kp, kx = jax.random.split(key)

    params = init_params(kp)
    # MNIST-like input: batch=2, NCHW (2, 1, 28, 28)
    x = jax.random.normal(kx, (2, 1, 28, 28), jnp.float32)

    out = discriminator_forward(x, params)
    out = jax.block_until_ready(out)

    ref = reference_forward(x, params)
    assert out.shape == (2, 1), out.shape
    # bf16 matmul operands (f32 accumulation) on both paths -> tight but not 1e-5.
    assert jnp.allclose(out, ref, atol=1e-4, rtol=1e-3), (out, ref)

    print("KERNEL_OK")
</pallas_src>

<mosaic_0001>
module attributes {stable_mosaic.version = 11 : i64} {
  func.func @discriminator_kernel(%arg0: i32, %arg1: memref<256x784xbf16, #tpu.memory_space<vmem>>, %arg2: memref<784x512xbf16, #tpu.memory_space<vmem>>, %arg3: memref<1x512xf32, #tpu.memory_space<vmem>>, %arg4: memref<512x256xbf16, #tpu.memory_space<vmem>>, %arg5: memref<1x256xf32, #tpu.memory_space<vmem>>, %arg6: memref<256x128xbf16, #tpu.memory_space<vmem>>, %arg7: memref<1x128xf32, #tpu.memory_space<vmem>>, %arg8: memref<256x128xf32, #tpu.memory_space<vmem>>) attributes {dimension_semantics = [#tpu.dimension_semantics<parallel>], iteration_bounds = array<i64: 1>, scalar_prefetch = 0 : i64, scratch_operands = 0 : i64, tpu.core_type = #tpu.core_type<tc>, window_params = [{transform_indices = @transform_0, window_bounds = array<i64: 256, 784>}, {pipeline_mode = #tpu.pipeline_mode<synchronous>, transform_indices = @transform_1, window_bounds = array<i64: 784, 512>}, {pipeline_mode = #tpu.pipeline_mode<synchronous>, transform_indices = @transform_2, window_bounds = array<i64: 1, 512>}, {pipeline_mode = #tpu.pipeline_mode<synchronous>, transform_indices = @transform_3, window_bounds = array<i64: 512, 256>}, {pipeline_mode = #tpu.pipeline_mode<synchronous>, transform_indices = @transform_4, window_bounds = array<i64: 1, 256>}, {pipeline_mode = #tpu.pipeline_mode<synchronous>, transform_indices = @transform_5, window_bounds = array<i64: 256, 128>}, {pipeline_mode = #tpu.pipeline_mode<synchronous>, transform_indices = @transform_6, window_bounds = array<i64: 1, 128>}, {transform_indices = @transform_7, window_bounds = array<i64: 256, 128>}]} {
    %c0 = arith.constant 0 : index
    %c0_0 = arith.constant 0 : index
    %0 = vector.load %arg1[%c0, %c0_0] : memref<256x784xbf16, #tpu.memory_space<vmem>>, vector<256x784xbf16>
    %c0_1 = arith.constant 0 : index
    %c0_2 = arith.constant 0 : index
    %1 = vector.load %arg2[%c0_1, %c0_2] : memref<784x512xbf16, #tpu.memory_space<vmem>>, vector<784x512xbf16>
    %cst = arith.constant dense<0.000000e+00> : vector<256x512xf32>
    %2 = tpu.matmul %0, %1, %cst {dimension_numbers = #tpu.dot_dimension_numbers<[1], [0], [0], [1], [0, 0, 1, 1], [], []>} : vector<256x784xbf16>, vector<784x512xbf16>, vector<256x512xf32> -> vector<256x512xf32>
    %c0_3 = arith.constant 0 : index
    %c0_4 = arith.constant 0 : index
    %3 = vector.load %arg3[%c0_3, %c0_4] : memref<1x512xf32, #tpu.memory_space<vmem>>, vector<1x512xf32>
    %4 = vector.broadcast %3 : vector<1x512xf32> to vector<256x512xf32>
    %5 = arith.addf %2, %4 : vector<256x512xf32>
    %cst_5 = arith.constant 0.000000e+00 : f32
    %6 = vector.broadcast %cst_5 : f32 to vector<256x512xf32>
    %7 = arith.cmpf ogt, %5, %6 : vector<256x512xf32>
    %cst_6 = arith.constant 0.00999999977 : f32
    %8 = vector.broadcast %cst_6 : f32 to vector<256x512xf32>
    %9 = arith.mulf %8, %5 : vector<256x512xf32>
    %10 = arith.select %7, %5, %9 : vector<256x512xi1>, vector<256x512xf32>
    %11 = arith.truncf %10 : vector<256x512xf32> to vector<256x512xbf16>
    %c0_7 = arith.constant 0 : index
    %c0_8 = arith.constant 0 : index
    %12 = vector.load %arg4[%c0_7, %c0_8] : memref<512x256xbf16, #tpu.memory_space<vmem>>, vector<512x256xbf16>
    %cst_9 = arith.constant dense<0.000000e+00> : vector<256x256xf32>
    %13 = tpu.matmul %11, %12, %cst_9 {dimension_numbers = #tpu.dot_dimension_numbers<[1], [0], [0], [1], [0, 0, 1, 1], [], []>} : vector<256x512xbf16>, vector<512x256xbf16>, vector<256x256xf32> -> vector<256x256xf32>
    %c0_10 = arith.constant 0 : index
    %c0_11 = arith.constant 0 : index
    %14 = vector.load %arg5[%c0_10, %c0_11] : memref<1x256xf32, #tpu.memory_space<vmem>>, vector<1x256xf32>
    %15 = vector.broadcast %14 : vector<1x256xf32> to vector<256x256xf32>
    %16 = arith.addf %13, %15 : vector<256x256xf32>
    %cst_12 = arith.constant 0.000000e+00 : f32
    %17 = vector.broadcast %cst_12 : f32 to vector<256x256xf32>
    %18 = arith.cmpf ogt, %16, %17 : vector<256x256xf32>
    %cst_13 = arith.constant 0.00999999977 : f32
    %19 = vector.broadcast %cst_13 : f32 to vector<256x256xf32>
    %20 = arith.mulf %19, %16 : vector<256x256xf32>
    %21 = arith.select %18, %16, %20 : vector<256x256xi1>, vector<256x256xf32>
    %22 = arith.truncf %21 : vector<256x256xf32> to vector<256x256xbf16>
    %c0_14 = arith.constant 0 : index
    %c0_15 = arith.constant 0 : index
    %23 = vector.load %arg6[%c0_14, %c0_15] : memref<256x128xbf16, #tpu.memory_space<vmem>>, vector<256x128xbf16>
    %cst_16 = arith.constant dense<0.000000e+00> : vector<256x128xf32>
    %24 = tpu.matmul %22, %23, %cst_16 {dimension_numbers = #tpu.dot_dimension_numbers<[1], [0], [0], [1], [0, 0, 1, 1], [], []>} : vector<256x256xbf16>, vector<256x128xbf16>, vector<256x128xf32> -> vector<256x128xf32>
    %c0_17 = arith.constant 0 : index
    %c0_18 = arith.constant 0 : index
    %25 = vector.load %arg7[%c0_17, %c0_18] : memref<1x128xf32, #tpu.memory_space<vmem>>, vector<1x128xf32>
    %26 = vector.broadcast %25 : vector<1x128xf32> to vector<256x128xf32>
    %27 = arith.addf %24, %26 : vector<256x128xf32>
    %28 = arith.negf %27 : vector<256x128xf32>
    %29 = math.exp %28 : vector<256x128xf32>
    %cst_19 = arith.constant 1.000000e+00 : f32
    %30 = vector.broadcast %cst_19 : f32 to vector<256x128xf32>
    %31 = arith.addf %30, %29 : vector<256x128xf32>
    %32 = arith.divf %30, %31 : vector<256x128xf32>
    %c0_20 = arith.constant 0 : index
    %c0_21 = arith.constant 0 : index
    %33 = vector.load %arg8[%c0_20, %c0_21] : memref<256x128xf32, #tpu.memory_space<vmem>>, vector<256x128xf32>
    tpu.vector_store %arg8[%c0_20, %c0_21], %32 {strides = array<i32>} : memref<256x128xf32, #tpu.memory_space<vmem>>, vector<256x128xf32>,
    return
  }
  func.func @transform_0(%arg0: i32) -> (i32, i32) {
    %c0_i32 = arith.constant 0 : i32
    %c0_i32_0 = arith.constant 0 : i32
    return %arg0, %c0_i32 : i32, i32
  }
  func.func @transform_1(%arg0: i32) -> (i32, i32) {
    %c0_i32 = arith.constant 0 : i32
    %c0_i32_0 = arith.constant 0 : i32
    %c0_i32_1 = arith.constant 0 : i32
    return %c0_i32, %c0_i32_0 : i32, i32
  }
  func.func @transform_2(%arg0: i32) -> (i32, i32) {
    %c0_i32 = arith.constant 0 : i32
    %c0_i32_0 = arith.constant 0 : i32
    %c0_i32_1 = arith.constant 0 : i32
    return %c0_i32, %c0_i32_0 : i32, i32
  }
  func.func @transform_3(%arg0: i32) -> (i32, i32) {
    %c0_i32 = arith.constant 0 : i32
    %c0_i32_0 = arith.constant 0 : i32
    %c0_i32_1 = arith.constant 0 : i32
    return %c0_i32, %c0_i32_0 : i32, i32
  }
  func.func @transform_4(%arg0: i32) -> (i32, i32) {
    %c0_i32 = arith.constant 0 : i32
    %c0_i32_0 = arith.constant 0 : i32
    %c0_i32_1 = arith.constant 0 : i32
    return %c0_i32, %c0_i32_0 : i32, i32
  }
  func.func @transform_5(%arg0: i32) -> (i32, i32) {
    %c0_i32 = arith.constant 0 : i32
    %c0_i32_0 = arith.constant 0 : i32
    %c0_i32_1 = arith.constant 0 : i32
    return %c0_i32, %c0_i32_0 : i32, i32
  }
  func.func @transform_6(%arg0: i32) -> (i32, i32) {
    %c0_i32 = arith.constant 0 : i32
    %c0_i32_0 = arith.constant 0 : i32
    %c0_i32_1 = arith.constant 0 : i32
    return %c0_i32, %c0_i32_0 : i32, i32
  }
  func.func @transform_7(%arg0: i32) -> (i32, i32) {
    %c0_i32 = arith.constant 0 : i32
    %c0_i32_0 = arith.constant 0 : i32
    return %arg0, %c0_i32 : i32, i32
  }
}

</mosaic_0001>

<llo_original>
// kernel: tpu_custom_call.1
$region0: #{tpu_custom_call.1}
  #allocation0 [shape = 'u32[]', space=smem, size = 0x4, offset = 0x4, fixed_abs, tag = 'smem constant byte address 0x4 - core index']
  #allocation1 [shape = 'u32[144,128]{1,0:T(1,128)}', space=vmem, size = 0x12000, scoped, tag = 'internal scratch']
  %s0 = inlined_call_operand.vmem [shape: bf16[256,784], index: 0, kind: input, shape index: {}]
  %s1 = inlined_call_operand.vmem [shape: bf16[784,512], index: 1, kind: input, shape index: {}]
  %s2 = inlined_call_operand.hbm [shape: f32[1,512], index: 2, kind: input, shape index: {}]
  %s3 = inlined_call_operand.hbm [shape: bf16[512,256], index: 3, kind: input, shape index: {}]
  %s4 = inlined_call_operand.vmem [shape: f32[1,256], index: 4, kind: input, shape index: {}]
  %s5 = inlined_call_operand.vmem [shape: bf16[256,128], index: 5, kind: input, shape index: {}]
  %s6 = inlined_call_operand.hbm [shape: f32[1,128], index: 6, kind: input, shape index: {}]
  %s7 = inlined_call_operand.hbm [shape: f32[256,128], index: 7, kind: output, shape index: {}]
  %s8 = sld [smem:[#allocation0]]
  $region50: #{tpu_custom_call.1} parent=0
    _
  %s10 = ssub.s32 1, %s8
  %s11 = scalar_select 0, %s10, %s8
  $region1: #{tpu_custom_call.1} parent=0
    #allocation2 [shape = 'u8[2048]{0}', space=vmem, size = 0x800, scoped, tag = 'input window, operand 2, single buffered']
    #allocation3 [shape = 's32[1]{0}', space=sflag, size = 0x4, scoped, tag = 'scoped memory for tpu_custom_call.1']
    #allocation4 [shape = 's32[1]{0}', space=sflag, size = 0x4, scoped, tag = 'scoped memory for tpu_custom_call.1']
    #allocation5 [shape = 'u8[262144]{0}', space=vmem, size = 0x40000, scoped, tag = 'input window, operand 3, single buffered']
    #allocation6 [shape = 's32[1]{0}', space=sflag, size = 0x4, scoped, tag = 'scoped memory for tpu_custom_call.1']
    #allocation7 [shape = 'u8[512]{0}', space=vmem, size = 0x400, scoped, tag = 'input window, operand 6, single buffered']
    #allocation8 [shape = 'u8[131072]{0}', space=vmem, size = 0x20000, scoped, tag = 'output window, operand 0, single buffered']
    %12 = vsyncpa [#allocation3], 0
    %13 = vsyncpa [#allocation6], 0
    %14 = vsyncpa [#allocation4], 0
    // Predicated region
    $region2: #{tpu_custom_call.1} parent=1 // pred_check
      _
    $region3: #{tpu_custom_call.1} parent=1 // pred_check_branch
      %16 = sbr.rel (0) target = $region5
    $region4: #{tpu_custom_call.1} parent=1 // pred_region
      _
    $region5: #{tpu_custom_call.1} parent=1 // pred_fallthru
      _
    // Predicated region
    $region6: #{tpu_custom_call.1} parent=1 // pred_check
      _
    $region7: #{tpu_custom_call.1} parent=1 // pred_check_branch
      %18 = sbr.rel (0) target = $region9
    $region8: #{tpu_custom_call.1} parent=1 // pred_region
      _
    $region9: #{tpu_custom_call.1} parent=1 // pred_fallthru
      _
    // Predicated region
    $region10: #{tpu_custom_call.1} parent=1 // pred_check
      _
    $region11: #{tpu_custom_call.1} parent=1 // pred_check_branch
      %20 = sbr.rel (0) target = $region13
    $region12: #{tpu_custom_call.1} parent=1 // pred_region
      %s22 = ssub.s32 64, 64
      %23 = vsyncadd [#allocation3], %s22
      %s25 = sshll.u32 [#allocation2], 4
      %s26 = int_to_ptr.vmem [resolvable:$true] %s25
      %28 = dma.hbm_to_vmem [thread:$0]  %s2, 64, %s26, [#allocation3]
    $region13: #{tpu_custom_call.1} parent=1 // pred_fallthru
      _
    // Predicated region
    $region14: #{tpu_custom_call.1} parent=1 // pred_check
      _
    $region15: #{tpu_custom_call.1} parent=1 // pred_check_branch
      %30 = sbr.rel (0) target = $region17
    $region16: #{tpu_custom_call.1} parent=1 // pred_region
      %s32 = ssub.s32 8192, 8192
      %33 = vsyncadd [#allocation6], %s32
      %s34 = sshll.u32 [#allocation5], 4
      %s35 = int_to_ptr.vmem [resolvable:$true] %s34
      %40 = dma.hbm_to_vmem [thread:$0]  %s3, 8192, %s35, [#allocation6], 128, 128, 8
    $region17: #{tpu_custom_call.1} parent=1 // pred_fallthru
      _
    // Predicated region
    $region18: #{tpu_custom_call.1} parent=1 // pred_check
      _
    $region19: #{tpu_custom_call.1} parent=1 // pred_check_branch
      %42 = sbr.rel (0) target = $region21
    $region20: #{tpu_custom_call.1} parent=1 // pred_region
      _
    $region21: #{tpu_custom_call.1} parent=1 // pred_fallthru
      _
    // Predicated region
    $region22: #{tpu_custom_call.1} parent=1 // pred_check
      _
    $region23: #{tpu_custom_call.1} parent=1 // pred_check_branch
      %44 = sbr.rel (0) target = $region25
    $region24: #{tpu_custom_call.1} parent=1 // pred_region
      _
    $region25: #{tpu_custom_call.1} parent=1 // pred_fallthru
      _
    // Predicated region
    $region26: #{tpu_custom_call.1} parent=1 // pred_check
      _
    $region27: #{tpu_custom_call.1} parent=1 // pred_check_branch
      %46 = sbr.rel (0) target = $region29
    $region28: #{tpu_custom_call.1} parent=1 // pred_region
      %s48 = ssub.s32 16, 16
      %49 = vsyncadd [#allocation6], %s48
      %s51 = sshll.u32 [#allocation7], 4
      %s52 = int_to_ptr.vmem [resolvable:$true] %s51
      %54 = dma.hbm_to_vmem [thread:$0]  %s6, 16, %s52, [#allocation6]
    $region29: #{tpu_custom_call.1} parent=1 // pred_fallthru
      _
    // Predicated region
    $region30: #{tpu_custom_call.1} parent=1 // pred_check
      _
    $region31: #{tpu_custom_call.1} parent=1 // pred_check_branch
      %56 = sbr.rel (0) target = $region33
    $region32: #{tpu_custom_call.1} parent=1 // pred_region
      %57 = dma.done [#allocation3], 64
    $region33: #{tpu_custom_call.1} parent=1 // pred_fallthru
      _
    // Predicated region
    $region34: #{tpu_custom_call.1} parent=1 // pred_check
      _
    $region35: #{tpu_custom_call.1} parent=1 // pred_check_branch
      %59 = sbr.rel (0) target = $region37
    $region36: #{tpu_custom_call.1} parent=1 // pred_region
      %60 = dma.done [#allocation6], 8192
    $region37: #{tpu_custom_call.1} parent=1 // pred_fallthru
      _
    // Predicated region
    $region38: #{tpu_custom_call.1} parent=1 // pred_check
      _
    $region39: #{tpu_custom_call.1} parent=1 // pred_check_branch
      %62 = sbr.rel (0) target = $region41
    $region40: #{tpu_custom_call.1} parent=1 // pred_region
      %63 = dma.done [#allocation6], 16
    $region41: #{tpu_custom_call.1} parent=1 // pred_fallthru
      _
    %v65 = vld [vmem:[%s0] sm:$0xff]
    %v66 = vld [vmem:[%s0 + $0x8] sm:$0xff]
    %v67 = vld [vmem:[%s0 + $0x10] sm:$0xff]
    %v68 = vld [vmem:[%s0 + $0x18] sm:$0xf]
    %v69 = vld [vmem:[%s0 + $0x1c] sm:$0xff]
    %v70 = vld [vmem:[%s0 + $0x24] sm:$0xff]
    %v71 = vld [vmem:[%s0 + $0x2c] sm:$0xff]
    %v72 = vld [vmem:[%s0 + $0x34] sm:$0xf]
    %v73 = vld [vmem:[%s0 + $0x38] sm:$0xff]
    %v74 = vld [vmem:[%s0 + $0x40] sm:$0xff]
    %v75 = vld [vmem:[%s0 + $0x48] sm:$0xff]
    %v76 = vld [vmem:[%s0 + $0x50] sm:$0xf]
    %v77 = vld [vmem:[%s0 + $0x54] sm:$0xff]
    %v78 = vld [vmem:[%s0 + $0x5c] sm:$0xff]
    %v79 = vld [vmem:[%s0 + $0x64] sm:$0xff]
    %v80 = vld [vmem:[%s0 + $0x6c] sm:$0xf]
    %v81 = vld [vmem:[%s0 + $0x70] sm:$0xff]
    %v82 = vld [vmem:[%s0 + $0x78] sm:$0xff]
    %v83 = vld [vmem:[%s0 + $0x80] sm:$0xff]
    %v84 = vld [vmem:[%s0 + $0x88] sm:$0xf]
    %v85 = vld [vmem:[%s0 + $0x8c] sm:$0xff]
    %v86 = vld [vmem:[%s0 + $0x94] sm:$0xff]
    %v87 = vld [vmem:[%s0 + $0x9c] sm:$0xff]
    %v88 = vld [vmem:[%s0 + $0xa4] sm:$0xf]
    %v89 = vld [vmem:[%s0 + $0xa8] sm:$0xff]
    %v90 = vld [vmem:[%s0 + $0xb0] sm:$0xff]
    %v91 = vld [vmem:[%s0 + $0xb8] sm:$0xff]
    %v92 = vld [vmem:[%s0 + $0xc0] sm:$0xf]
    %v93 = vld [vmem:[%s0 + $0xc4] sm:$0xff]
    %v94 = vld [vmem:[%s0 + $0xcc] sm:$0xff]
    %v95 = vld [vmem:[%s0 + $0xd4] sm:$0xff]
    %v96 = vld [vmem:[%s0 + $0xdc] sm:$0xf]
    %v97 = vld [vmem:[%s0 + $0xe0] sm:$0xff]
    %v98 = vld [vmem:[%s0 + $0xe8] sm:$0xff]
    %v99 = vld [vmem:[%s0 + $0xf0] sm:$0xff]
    %v100 = vld [vmem:[%s0 + $0xf8] sm:$0xf]
    %v101 = vld [vmem:[%s0 + $0xfc] sm:$0xff]
    %v102 = vld [vmem:[%s0 + $0x104] sm:$0xff]
    %v103 = vld [vmem:[%s0 + $0x10c] sm:$0xff]
    %v104 = vld [vmem:[%s0 + $0x114] sm:$0xf]
    %v105 = vld [vmem:[%s0 + $0x118] sm:$0xff]
    %v106 = vld [vmem:[%s0 + $0x120] sm:$0xff]
    %v107 = vld [vmem:[%s0 + $0x128] sm:$0xff]
    %v108 = vld [vmem:[%s0 + $0x130] sm:$0xf]
    %v109 = vld [vmem:[%s0 + $0x134] sm:$0xff]
    %v110 = vld [vmem:[%s0 + $0x13c] sm:$0xff]
    %v111 = vld [vmem:[%s0 + $0x144] sm:$0xff]
    %v112 = vld [vmem:[%s0 + $0x14c] sm:$0xf]
    %v113 = vld [vmem:[%s0 + $0x150] sm:$0xff]
    %v114 = vld [vmem:[%s0 + $0x158] sm:$0xff]
    %v115 = vld [vmem:[%s0 + $0x160] sm:$0xff]
    %v116 = vld [vmem:[%s0 + $0x168] sm:$0xf]
    %v117 = vld [vmem:[%s0 + $0x16c] sm:$0xff]
    %v118 = vld [vmem:[%s0 + $0x174] sm:$0xff]
    %v119 = vld [vmem:[%s0 + $0x17c] sm:$0xff]
    %v120 = vld [vmem:[%s0 + $0x184] sm:$0xf]
    %v121 = vld [vmem:[%s0 + $0x188] sm:$0xff]
    %v122 = vld [vmem:[%s0 + $0x190] sm:$0xff]
    %v123 = vld [vmem:[%s0 + $0x198] sm:$0xff]
    %v124 = vld [vmem:[%s0 + $0x1a0] sm:$0xf]
    %v125 = vld [vmem:[%s0 + $0x1a4] sm:$0xff]
    %v126 = vld [vmem:[%s0 + $0x1ac] sm:$0xff]
    %v127 = vld [vmem:[%s0 + $0x1b4] sm:$0xff]
    %v128 = vld [vmem:[%s0 + $0x1bc] sm:$0xf]
    %v129 = vld [vmem:[%s0 + $0x1c0] sm:$0xff]
    %v130 = vld [vmem:[%s0 + $0x1c8] sm:$0xff]
    %v131 = vld [vmem:[%s0 + $0x1d0] sm:$0xff]
    %v132 = vld [vmem:[%s0 + $0x1d8] sm:$0xf]
    %v133 = vld [vmem:[%s0 + $0x1dc] sm:$0xff]
    %v134 = vld [vmem:[%s0 + $0x1e4] sm:$0xff]
    %v135 = vld [vmem:[%s0 + $0x1ec] sm:$0xff]
    %v136 = vld [vmem:[%s0 + $0x1f4] sm:$0xf]
    %v137 = vld [vmem:[%s0 + $0x1f8] sm:$0xff]
    %v138 = vld [vmem:[%s0 + $0x200] sm:$0xff]
    %v139 = vld [vmem:[%s0 + $0x208] sm:$0xff]
    %v140 = vld [vmem:[%s0 + $0x210] sm:$0xf]
    %v141 = vld [vmem:[%s0 + $0x214] sm:$0xff]
    %v142 = vld [vmem:[%s0 + $0x21c] sm:$0xff]
    %v143 = vld [vmem:[%s0 + $0x224] sm:$0xff]
    %v144 = vld [vmem:[%s0 + $0x22c] sm:$0xf]
    %v145 = vld [vmem:[%s0 + $0x230] sm:$0xff]
    %v146 = vld [vmem:[%s0 + $0x238] sm:$0xff]
    %v147 = vld [vmem:[%s0 + $0x240] sm:$0xff]
    %v148 = vld [vmem:[%s0 + $0x248] sm:$0xf]
    %v149 = vld [vmem:[%s0 + $0x24c] sm:$0xff]
    %v150 = vld [vmem:[%s0 + $0x254] sm:$0xff]
    %v151 = vld [vmem:[%s0 + $0x25c] sm:$0xff]
    %v152 = vld [vmem:[%s0 + $0x264] sm:$0xf]
    %v153 = vld [vmem:[%s0 + $0x268] sm:$0xff]
    %v154 = vld [vmem:[%s0 + $0x270] sm:$0xff]
    %v155 = vld [vmem:[%s0 + $0x278] sm:$0xff]
    %v156 = vld [vmem:[%s0 + $0x280] sm:$0xf]
    %v157 = vld [vmem:[%s0 + $0x284] sm:$0xff]
    %v158 = vld [vmem:[%s0 + $0x28c] sm:$0xff]
    %v159 = vld [vmem:[%s0 + $0x294] sm:$0xff]
    %v160 = vld [vmem:[%s0 + $0x29c] sm:$0xf]
    %v161 = vld [vmem:[%s0 + $0x2a0] sm:$0xff]
    %v162 = vld [vmem:[%s0 + $0x2a8] sm:$0xff]
    %v163 = vld [vmem:[%s0 + $0x2b0] sm:$0xff]
    %v164 = vld [vmem:[%s0 + $0x2b8] sm:$0xf]
    %v165 = vld [vmem:[%s0 + $0x2bc] sm:$0xff]
    %v166 = vld [vmem:[%s0 + $0x2c4] sm:$0xff]
    %v167 = vld [vmem:[%s0 + $0x2cc] sm:$0xff]
    %v168 = vld [vmem:[%s0 + $0x2d4] sm:$0xf]
    %v169 = vld [vmem:[%s0 + $0x2d8] sm:$0xff]
    %v170 = vld [vmem:[%s0 + $0x2e0] sm:$0xff]
    %v171 = vld [vmem:[%s0 + $0x2e8] sm:$0xff]
    %v172 = vld [vmem:[%s0 + $0x2f0] sm:$0xf]
    %v173 = vld [vmem:[%s0 + $0x2f4] sm:$0xff]
    %v174 = vld [vmem:[%s0 + $0x2fc] sm:$0xff]
    %v175 = vld [vmem:[%s0 + $0x304] sm:$0xff]
    %v176 = vld [vmem:[%s0 + $0x30c] sm:$0xf]
    %v177 = vld [vmem:[%s0 + $0x310] sm:$0xff]
    %v178 = vld [vmem:[%s0 + $0x318] sm:$0xff]
    %v179 = vld [vmem:[%s0 + $0x320] sm:$0xff]
    %v180 = vld [vmem:[%s0 + $0x328] sm:$0xf]
    %v181 = vld [vmem:[%s0 + $0x32c] sm:$0xff]
    %v182 = vld [vmem:[%s0 + $0x334] sm:$0xff]
    %v183 = vld [vmem:[%s0 + $0x33c] sm:$0xff]
    %v184 = vld [vmem:[%s0 + $0x344] sm:$0xf]
    %v185 = vld [vmem:[%s0 + $0x348] sm:$0xff]
    %v186 = vld [vmem:[%s0 + $0x350] sm:$0xff]
    %v187 = vld [vmem:[%s0 + $0x358] sm:$0xff]
    %v188 = vld [vmem:[%s0 + $0x360] sm:$0xf]
    %v189 = vld [vmem:[%s0 + $0x364] sm:$0xff]
    %v190 = vld [vmem:[%s0 + $0x36c] sm:$0xff]
    %v191 = vld [vmem:[%s0 + $0x374] sm:$0xff]
    %v192 = vld [vmem:[%s0 + $0x37c] sm:$0xf]
    %v193 = vld [vmem:[%s1] sm:$0xff]
    %v194 = vld [vmem:[%s1 + $0x8] sm:$0xff]
    %v195 = vld [vmem:[%s1 + $0x10] sm:$0xff]
    %v196 = vld [vmem:[%s1 + $0x18] sm:$0xff]
    %v197 = vld [vmem:[%s1 + $0x20] sm:$0xff]
    %v198 = vld [vmem:[%s1 + $0x28] sm:$0xff]
    %v199 = vld [vmem:[%s1 + $0x30] sm:$0xff]
    %v200 = vld [vmem:[%s1 + $0x38] sm:$0xff]
    %v201 = vld [vmem:[%s1 + $0x40] sm:$0xff]
    %v202 = vld [vmem:[%s1 + $0x48] sm:$0xff]
    %v203 = vld [vmem:[%s1 + $0x50] sm:$0xff]
    %v204 = vld [vmem:[%s1 + $0x58] sm:$0xff]
    %v205 = vld [vmem:[%s1 + $0x60] sm:$0xff]
    %v206 = vld [vmem:[%s1 + $0x68] sm:$0xff]
    %v207 = vld [vmem:[%s1 + $0x70] sm:$0xff]
    %v208 = vld [vmem:[%s1 + $0x78] sm:$0xff]
    %v209 = vld [vmem:[%s1 + $0x80] sm:$0xff]
    %v210 = vld [vmem:[%s1 + $0x88] sm:$0xff]
    %v211 = vld [vmem:[%s1 + $0x90] sm:$0xff]
    %v212 = vld [vmem:[%s1 + $0x98] sm:$0xff]
    %v213 = vld [vmem:[%s1 + $0xa0] sm:$0xff]
    %v214 = vld [vmem:[%s1 + $0xa8] sm:$0xff]
    %v215 = vld [vmem:[%s1 + $0xb0] sm:$0xff]
    %v216 = vld [vmem:[%s1 + $0xb8] sm:$0xff]
    %v217 = vld [vmem:[%s1 + $0xc0] sm:$0xff]
    %v218 = vld [vmem:[%s1 + $0xc8] sm:$0xff]
    %v219 = vld [vmem:[%s1 + $0xd0] sm:$0xff]
    %v220 = vld [vmem:[%s1 + $0xd8] sm:$0xff]
    %v221 = vld [vmem:[%s1 + $0xe0] sm:$0xff]
    %v222 = vld [vmem:[%s1 + $0xe8] sm:$0xff]
    %v223 = vld [vmem:[%s1 + $0xf0] sm:$0xff]
    %v224 = vld [vmem:[%s1 + $0xf8] sm:$0xff]
    %v225 = vld [vmem:[%s1 + $0x100] sm:$0xff]
    %v226 = vld [vmem:[%s1 + $0x108] sm:$0xff]
    %v227 = vld [vmem:[%s1 + $0x110] sm:$0xff]
    %v228 = vld [vmem:[%s1 + $0x118] sm:$0xff]
    %v229 = vld [vmem:[%s1 + $0x120] sm:$0xff]
    %v230 = vld [vmem:[%s1 + $0x128] sm:$0xff]
    %v231 = vld [vmem:[%s1 + $0x130] sm:$0xff]
    %v232 = vld [vmem:[%s1 + $0x138] sm:$0xff]
    %v233 = vld [vmem:[%s1 + $0x140] sm:$0xff]
    %v234 = vld [vmem:[%s1 + $0x148] sm:$0xff]
    %v235 = vld [vmem:[%s1 + $0x150] sm:$0xff]
    %v236 = vld [vmem:[%s1 + $0x158] sm:$0xff]
    %v237 = vld [vmem:[%s1 + $0x160] sm:$0xff]
    %v238 = vld [vmem:[%s1 + $0x168] sm:$0xff]
    %v239 = vld [vmem:[%s1 + $0x170] sm:$0xff]
    %v240 = vld [vmem:[%s1 + $0x178] sm:$0xff]
    %v241 = vld [vmem:[%s1 + $0x180] sm:$0xff]
    %v242 = vld [vmem:[%s1 + $0x188] sm:$0xff]
    %v243 = vld [vmem:[%s1 + $0x190] sm:$0xff]
    %v244 = vld [vmem:[%s1 + $0x198] sm:$0xff]
    %v245 = vld [vmem:[%s1 + $0x1a0] sm:$0xff]
    %v246 = vld [vmem:[%s1 + $0x1a8] sm:$0xff]
    %v247 = vld [vmem:[%s1 + $0x1b0] sm:$0xff]
    %v248 = vld [vmem:[%s1 + $0x1b8] sm:$0xff]
    %v249 = vld [vmem:[%s1 + $0x1c0] sm:$0xff]
    %v250 = vld [vmem:[%s1 + $0x1c8] sm:$0xff]
    %v251 = vld [vmem:[%s1 + $0x1d0] sm:$0xff]
    %v252 = vld [vmem:[%s1 + $0x1d8] sm:$0xff]
    %v253 = vld [vmem:[%s1 + $0x1e0] sm:$0xff]
    %v254 = vld [vmem:[%s1 + $0x1e8] sm:$0xff]
    %v255 = vld [vmem:[%s1 + $0x1f0] sm:$0xff]
    %v256 = vld [vmem:[%s1 + $0x1f8] sm:$0xff]
    %v257 = vld [vmem:[%s1 + $0x200] sm:$0xff]
    %v258 = vld [vmem:[%s1 + $0x208] sm:$0xff]
    %v259 = vld [vmem:[%s1 + $0x210] sm:$0xff]
    %v260 = vld [vmem:[%s1 + $0x218] sm:$0xff]
    %v261 = vld [vmem:[%s1 + $0x220] sm:$0xff]
    %v262 = vld [vmem:[%s1 + $0x228] sm:$0xff]
    %v263 = vld [vmem:[%s1 + $0x230] sm:$0xff]
    %v264 = vld [vmem:[%s1 + $0x238] sm:$0xff]
    %v265 = vld [vmem:[%s1 + $0x240] sm:$0xff]
    %v266 = vld [vmem:[%s1 + $0x248] sm:$0xff]
    %v267 = vld [vmem:[%s1 + $0x250] sm:$0xff]
    %v268 = vld [vmem:[%s1 + $0x258] sm:$0xff]
    %v269 = vld [vmem:[%s1 + $0x260] sm:$0xff]
    %v270 = vld [vmem:[%s1 + $0x268] sm:$0xff]
    %v271 = vld [vmem:[%s1 + $0x270] sm:$0xff]
    %v272 = vld [vmem:[%s1 + $0x278] sm:$0xff]
    %v273 = vld [vmem:[%s1 + $0x280] sm:$0xff]
    %v274 = vld [vmem:[%s1 + $0x288] sm:$0xff]
    %v275 = vld [vmem:[%s1 + $0x290] sm:$0xff]
    %v276 = vld [vmem:[%s1 + $0x298] sm:$0xff]
    %v277 = vld [vmem:[%s1 + $0x2a0] sm:$0xff]
    %v278 = vld [vmem:[%s1 + $0x2a8] sm:$0xff]
    %v279 = vld [vmem:[%s1 + $0x2b0] sm:$0xff]
    %v280 = vld [vmem:[%s1 + $0x2b8] sm:$0xff]
    %v281 = vld [vmem:[%s1 + $0x2c0] sm:$0xff]
    %v282 = vld [vmem:[%s1 + $0x2c8] sm:$0xff]
    %v283 = vld [vmem:[%s1 + $0x2d0] sm:$0xff]
    %v284 = vld [vmem:[%s1 + $0x2d8] sm:$0xff]
    %v285 = vld [vmem:[%s1 + $0x2e0] sm:$0xff]
    %v286 = vld [vmem:[%s1 + $0x2e8] sm:$0xff]
    %v287 = vld [vmem:[%s1 + $0x2f0] sm:$0xff]
    %v288 = vld [vmem:[%s1 + $0x2f8] sm:$0xff]
    %v289 = vld [vmem:[%s1 + $0x300] sm:$0xff]
    %v290 = vld [vmem:[%s1 + $0x308] sm:$0xff]
    %v291 = vld [vmem:[%s1 + $0x310] sm:$0xff]
    %v292 = vld [vmem:[%s1 + $0x318] sm:$0xff]
    %v293 = vld [vmem:[%s1 + $0x320] sm:$0xff]
    %v294 = vld [vmem:[%s1 + $0x328] sm:$0xff]
    %v295 = vld [vmem:[%s1 + $0x330] sm:$0xff]
    %v296 = vld [vmem:[%s1 + $0x338] sm:$0xff]
    %v297 = vld [vmem:[%s1 + $0x340] sm:$0xff]
    %v298 = vld [vmem:[%s1 + $0x348] sm:$0xff]
    %v299 = vld [vmem:[%s1 + $0x350] sm:$0xff]
    %v300 = vld [vmem:[%s1 + $0x358] sm:$0xff]
    %v301 = vld [vmem:[%s1 + $0x360] sm:$0xff]
    %v302 = vld [vmem:[%s1 + $0x368] sm:$0xff]
    %v303 = vld [vmem:[%s1 + $0x370] sm:$0xff]
    %v304 = vld [vmem:[%s1 + $0x378] sm:$0xff]
    %v305 = vld [vmem:[%s1 + $0x380] sm:$0xff]
    %v306 = vld [vmem:[%s1 + $0x388] sm:$0xff]
    %v307 = vld [vmem:[%s1 + $0x390] sm:$0xff]
    %v308 = vld [vmem:[%s1 + $0x398] sm:$0xff]
    %v309 = vld [vmem:[%s1 + $0x3a0] sm:$0xff]
    %v310 = vld [vmem:[%s1 + $0x3a8] sm:$0xff]
    %v311 = vld [vmem:[%s1 + $0x3b0] sm:$0xff]
    %v312 = vld [vmem:[%s1 + $0x3b8] sm:$0xff]
    %v313 = vld [vmem:[%s1 + $0x3c0] sm:$0xff]
    %v314 = vld [vmem:[%s1 + $0x3c8] sm:$0xff]
    %v315 = vld [vmem:[%s1 + $0x3d0] sm:$0xff]
    %v316 = vld [vmem:[%s1 + $0x3d8] sm:$0xff]
    %v317 = vld [vmem:[%s1 + $0x3e0] sm:$0xff]
    %v318 = vld [vmem:[%s1 + $0x3e8] sm:$0xff]
    %v319 = vld [vmem:[%s1 + $0x3f0] sm:$0xff]
    %v320 = vld [vmem:[%s1 + $0x3f8] sm:$0xff]
    %v321 = vld [vmem:[%s1 + $0x400] sm:$0xff]
    %v322 = vld [vmem:[%s1 + $0x408] sm:$0xff]
    %v323 = vld [vmem:[%s1 + $0x410] sm:$0xff]
    %v324 = vld [vmem:[%s1 + $0x418] sm:$0xff]
    %v325 = vld [vmem:[%s1 + $0x420] sm:$0xff]
    %v326 = vld [vmem:[%s1 + $0x428] sm:$0xff]
    %v327 = vld [vmem:[%s1 + $0x430] sm:$0xff]
    %v328 = vld [vmem:[%s1 + $0x438] sm:$0xff]
    %v329 = vld [vmem:[%s1 + $0x440] sm:$0xff]
    %v330 = vld [vmem:[%s1 + $0x448] sm:$0xff]
    %v331 = vld [vmem:[%s1 + $0x450] sm:$0xff]
    %v332 = vld [vmem:[%s1 + $0x458] sm:$0xff]
    %v333 = vld [vmem:[%s1 + $0x460] sm:$0xff]
    %v334 = vld [vmem:[%s1 + $0x468] sm:$0xff]
    %v335 = vld [vmem:[%s1 + $0x470] sm:$0xff]
    %v336 = vld [vmem:[%s1 + $0x478] sm:$0xff]
    %v337 = vld [vmem:[%s1 + $0x480] sm:$0xff]
    %v338 = vld [vmem:[%s1 + $0x488] sm:$0xff]
    %v339 = vld [vmem:[%s1 + $0x490] sm:$0xff]
    %v340 = vld [vmem:[%s1 + $0x498] sm:$0xff]
    %v341 = vld [vmem:[%s1 + $0x4a0] sm:$0xff]
    %v342 = vld [vmem:[%s1 + $0x4a8] sm:$0xff]
    %v343 = vld [vmem:[%s1 + $0x4b0] sm:$0xff]
    %v344 = vld [vmem:[%s1 + $0x4b8] sm:$0xff]
    %v345 = vld [vmem:[%s1 + $0x4c0] sm:$0xff]
    %v346 = vld [vmem:[%s1 + $0x4c8] sm:$0xff]
    %v347 = vld [vmem:[%s1 + $0x4d0] sm:$0xff]
    %v348 = vld [vmem:[%s1 + $0x4d8] sm:$0xff]
    %v349 = vld [vmem:[%s1 + $0x4e0] sm:$0xff]
    %v350 = vld [vmem:[%s1 + $0x4e8] sm:$0xff]
    %v351 = vld [vmem:[%s1 + $0x4f0] sm:$0xff]
    %v352 = vld [vmem:[%s1 + $0x4f8] sm:$0xff]
    %v353 = vld [vmem:[%s1 + $0x500] sm:$0xff]
    %v354 = vld [vmem:[%s1 + $0x508] sm:$0xff]
    %v355 = vld [vmem:[%s1 + $0x510] sm:$0xff]
    %v356 = vld [vmem:[%s1 + $0x518] sm:$0xff]
    %v357 = vld [vmem:[%s1 + $0x520] sm:$0xff]
    %v358 = vld [vmem:[%s1 + $0x528] sm:$0xff]
    %v359 = vld [vmem:[%s1 + $0x530] sm:$0xff]
    %v360 = vld [vmem:[%s1 + $0x538] sm:$0xff]
    %v361 = vld [vmem:[%s1 + $0x540] sm:$0xff]
    %v362 = vld [vmem:[%s1 + $0x548] sm:$0xff]
    %v363 = vld [vmem:[%s1 + $0x550] sm:$0xff]
    %v364 = vld [vmem:[%s1 + $0x558] sm:$0xff]
    %v365 = vld [vmem:[%s1 + $0x560] sm:$0xff]
    %v366 = vld [vmem:[%s1 + $0x568] sm:$0xff]
    %v367 = vld [vmem:[%s1 + $0x570] sm:$0xff]
    %v368 = vld [vmem:[%s1 + $0x578] sm:$0xff]
    %v369 = vld [vmem:[%s1 + $0x580] sm:$0xff]
    %v370 = vld [vmem:[%s1 + $0x588] sm:$0xff]
    %v371 = vld [vmem:[%s1 + $0x590] sm:$0xff]
    %v372 = vld [vmem:[%s1 + $0x598] sm:$0xff]
    %v373 = vld [vmem:[%s1 + $0x5a0] sm:$0xff]
    %v374 = vld [vmem:[%s1 + $0x5a8] sm:$0xff]
    %v375 = vld [vmem:[%s1 + $0x5b0] sm:$0xff]
    %v376 = vld [vmem:[%s1 + $0x5b8] sm:$0xff]
    %v377 = vld [vmem:[%s1 + $0x5c0] sm:$0xff]
    %v378 = vld [vmem:[%s1 + $0x5c8] sm:$0xff]
    %v379 = vld [vmem:[%s1 + $0x5d0] sm:$0xff]
    %v380 = vld [vmem:[%s1 + $0x5d8] sm:$0xff]
    %v381 = vld [vmem:[%s1 + $0x5e0] sm:$0xff]
    %v382 = vld [vmem:[%s1 + $0x5e8] sm:$0xff]
    %v383 = vld [vmem:[%s1 + $0x5f0] sm:$0xff]
    %v384 = vld [vmem:[%s1 + $0x5f8] sm:$0xff]
    %v385 = vld [vmem:[%s1 + $0x600] sm:$0xff]
    %v386 = vld [vmem:[%s1 + $0x608] sm:$0xff]
    %v387 = vld [vmem:[%s1 + $0x610] sm:$0xff]
    %v388 = vld [vmem:[%s1 + $0x618] sm:$0xff]
    %v389 = vld [vmem:[#allocation2] sm:$0xf]
    %v391 = vlaneseq
    %v392 = vshrl.u32 %v391, 7
    %v393 = vsub.s32 0, %v392
    %v394 = vrot.slane %v389, %v393
    %v395 = vlaneseq
    %v396 = vshrl.u32 %v395, 7
    %v397 = vsub.s32 1, %v396
    %v398 = vrot.slane %v389, %v397
    %v399 = vlaneseq
    %v400 = vshrl.u32 %v399, 7
    %v401 = vsub.s32 2, %v400
    %v402 = vrot.slane %v389, %v401
    %v403 = vlaneseq
    %v404 = vshrl.u32 %v403, 7
    %v405 = vsub.s32 3, %v404
    %v406 = vrot.slane %v389, %v405
    %v539 = vunpack.c.l.b16 %v65
    %v540 = vunpack.c.h.b16 %v65
    %v541 = vunpack.c.l.b16 %v66
    %v542 = vunpack.c.h.b16 %v66
    %v543 = vunpack.c.l.b16 %v67
    %v544 = vunpack.c.h.b16 %v67
    %v545 = vunpack.c.l.b16 %v68
    %v546 = vunpack.c.l.b16 %v69
    %v547 = vunpack.c.h.b16 %v69
    %v548 = vunpack.c.l.b16 %v70
    %v549 = vunpack.c.h.b16 %v70
    %v550 = vunpack.c.l.b16 %v71
    %v551 = vunpack.c.h.b16 %v71
    %v552 = vunpack.c.l.b16 %v72
    %v553 = vunpack.c.l.b16 %v73
    %v554 = vunpack.c.h.b16 %v73
    %v555 = vunpack.c.l.b16 %v74
    %v556 = vunpack.c.h.b16 %v74
    %v557 = vunpack.c.l.b16 %v75
    %v558 = vunpack.c.h.b16 %v75
    %v559 = vunpack.c.l.b16 %v76
    %v560 = vunpack.c.l.b16 %v77
    %v561 = vunpack.c.h.b16 %v77
    %v562 = vunpack.c.l.b16 %v78
    %v563 = vunpack.c.h.b16 %v78
    %v564 = vunpack.c.l.b16 %v79
    %v565 = vunpack.c.h.b16 %v79
    %v566 = vunpack.c.l.b16 %v80
    %v567 = vunpack.c.l.b16 %v81
    %v568 = vunpack.c.h.b16 %v81
    %v569 = vunpack.c.l.b16 %v82
    %v570 = vunpack.c.h.b16 %v82
    %v571 = vunpack.c.l.b16 %v83
    %v572 = vunpack.c.h.b16 %v83
    %v573 = vunpack.c.l.b16 %v84
    %v574 = vunpack.c.l.b16 %v85
    %v575 = vunpack.c.h.b16 %v85
    %v576 = vunpack.c.l.b16 %v86
    %v577 = vunpack.c.h.b16 %v86
    %v578 = vunpack.c.l.b16 %v87
    %v579 = vunpack.c.h.b16 %v87
    %v580 = vunpack.c.l.b16 %v88
    %v581 = vunpack.c.l.b16 %v89
    %v582 = vunpack.c.h.b16 %v89
    %v583 = vunpack.c.l.b16 %v90
    %v584 = vunpack.c.h.b16 %v90
    %v585 = vunpack.c.l.b16 %v91
    %v586 = vunpack.c.h.b16 %v91
    %v587 = vunpack.c.l.b16 %v92
    %v588 = vunpack.c.l.b16 %v93
    %v589 = vunpack.c.h.b16 %v93
    %v590 = vunpack.c.l.b16 %v94
    %v591 = vunpack.c.h.b16 %v94
    %v592 = vunpack.c.l.b16 %v95
    %v593 = vunpack.c.h.b16 %v95
    %v594 = vunpack.c.l.b16 %v96
    %v595 = vunpack.c.l.b16 %v97
    %v596 = vunpack.c.h.b16 %v97
    %v597 = vunpack.c.l.b16 %v98
    %v598 = vunpack.c.h.b16 %v98
    %v599 = vunpack.c.l.b16 %v99
    %v600 = vunpack.c.h.b16 %v99
    %v601 = vunpack.c.l.b16 %v100
    %v602 = vunpack.c.l.b16 %v101
    %v603 = vunpack.c.h.b16 %v101
    %v604 = vunpack.c.l.b16 %v102
    %v605 = vunpack.c.h.b16 %v102
    %v606 = vunpack.c.l.b16 %v103
    %v607 = vunpack.c.h.b16 %v103
    %v608 = vunpack.c.l.b16 %v104
    %v609 = vunpack.c.l.b16 %v105
    %v610 = vunpack.c.h.b16 %v105
    %v611 = vunpack.c.l.b16 %v106
    %v612 = vunpack.c.h.b16 %v106
    %v613 = vunpack.c.l.b16 %v107
    %v614 = vunpack.c.h.b16 %v107
    %v615 = vunpack.c.l.b16 %v108
    %v616 = vunpack.c.l.b16 %v109
    %v617 = vunpack.c.h.b16 %v109
    %v618 = vunpack.c.l.b16 %v110
    %v619 = vunpack.c.h.b16 %v110
    %v620 = vunpack.c.l.b16 %v111
    %v621 = vunpack.c.h.b16 %v111
    %v622 = vunpack.c.l.b16 %v112
    %v623 = vunpack.c.l.b16 %v113
    %v624 = vunpack.c.h.b16 %v113
    %v625 = vunpack.c.l.b16 %v114
    %v626 = vunpack.c.h.b16 %v114
    %v627 = vunpack.c.l.b16 %v115
    %v628 = vunpack.c.h.b16 %v115
    %v629 = vunpack.c.l.b16 %v116
    %v630 = vunpack.c.l.b16 %v117
    %v631 = vunpack.c.h.b16 %v117
    %v632 = vunpack.c.l.b16 %v118
    %v633 = vunpack.c.h.b16 %v118
    %v634 = vunpack.c.l.b16 %v119
    %v635 = vunpack.c.h.b16 %v119
    %v636 = vunpack.c.l.b16 %v120
    %v637 = vunpack.c.l.b16 %v121
    %v638 = vunpack.c.h.b16 %v121
    %v639 = vunpack.c.l.b16 %v122
    %v640 = vunpack.c.h.b16 %v122
    %v641 = vunpack.c.l.b16 %v123
    %v642 = vunpack.c.h.b16 %v123
    %v643 = vunpack.c.l.b16 %v124
    %v644 = vunpack.c.l.b16 %v125
    %v645 = vunpack.c.h.b16 %v125
    %v646 = vunpack.c.l.b16 %v126
    %v647 = vunpack.c.h.b16 %v126
    %v648 = vunpack.c.l.b16 %v127
    %v649 = vunpack.c.h.b16 %v127
    %v650 = vunpack.c.l.b16 %v128
    %v651 = vunpack.c.l.b16 %v129
    %v652 = vunpack.c.h.b16 %v129
    %v653 = vunpack.c.l.b16 %v130
    %v654 = vunpack.c.h.b16 %v130
    %v655 = vunpack.c.l.b16 %v131
    %v656 = vunpack.c.h.b16 %v131
    %v657 = vunpack.c.l.b16 %v132
    %v658 = vunpack.c.l.b16 %v133
    %v659 = vunpack.c.h.b16 %v133
    %v660 = vunpack.c.l.b16 %v134
    %v661 = vunpack.c.h.b16 %v134
    %v662 = vunpack.c.l.b16 %v135
    %v663 = vunpack.c.h.b16 %v135
    %v664 = vunpack.c.l.b16 %v136
    %v665 = vunpack.c.l.b16 %v137
    %v666 = vunpack.c.h.b16 %v137
    %v667 = vunpack.c.l.b16 %v138
    %v668 = vunpack.c.h.b16 %v138
    %v669 = vunpack.c.l.b16 %v139
    %v670 = vunpack.c.h.b16 %v139
    %v671 = vunpack.c.l.b16 %v140
    %v672 = vunpack.c.l.b16 %v141
    %v673 = vunpack.c.h.b16 %v141
    %v674 = vunpack.c.l.b16 %v142
    %v675 = vunpack.c.h.b16 %v142
    %v676 = vunpack.c.l.b16 %v143
    %v677 = vunpack.c.h.b16 %v143
    %v678 = vunpack.c.l.b16 %v144
    %v679 = vunpack.c.l.b16 %v145
    %v680 = vunpack.c.h.b16 %v145
    %v681 = vunpack.c.l.b16 %v146
    %v682 = vunpack.c.h.b16 %v146
    %v683 = vunpack.c.l.b16 %v147
    %v684 = vunpack.c.h.b16 %v147
    %v685 = vunpack.c.l.b16 %v148
    %v686 = vunpack.c.l.b16 %v149
    %v687 = vunpack.c.h.b16 %v149
    %v688 = vunpack.c.l.b16 %v150
    %v689 = vunpack.c.h.b16 %v150
    %v690 = vunpack.c.l.b16 %v151
    %v691 = vunpack.c.h.b16 %v151
    %v692 = vunpack.c.l.b16 %v152
    %v693 = vunpack.c.l.b16 %v153
    %v694 = vunpack.c.h.b16 %v153
    %v695 = vunpack.c.l.b16 %v154
    %v696 = vunpack.c.h.b16 %v154
    %v697 = vunpack.c.l.b16 %v155
    %v698 = vunpack.c.h.b16 %v155
    %v699 = vunpack.c.l.b16 %v156
    %v700 = vunpack.c.l.b16 %v157
    %v701 = vunpack.c.h.b16 %v157
    %v702 = vunpack.c.l.b16 %v158
    %v703 = vunpack.c.h.b16 %v158
    %v704 = vunpack.c.l.b16 %v159
    %v705 = vunpack.c.h.b16 %v159
    %v706 = vunpack.c.l.b16 %v160
    %v707 = vunpack.c.l.b16 %v161
    %v708 = vunpack.c.h.b16 %v161
    %v709 = vunpack.c.l.b16 %v162
    %v710 = vunpack.c.h.b16 %v162
    %v711 = vunpack.c.l.b16 %v163
    %v712 = vunpack.c.h.b16 %v163
    %v713 = vunpack.c.l.b16 %v164
    %v714 = vunpack.c.l.b16 %v165
    %v715 = vunpack.c.h.b16 %v165
    %v716 = vunpack.c.l.b16 %v166
    %v717 = vunpack.c.h.b16 %v166
    %v718 = vunpack.c.l.b16 %v167
    %v719 = vunpack.c.h.b16 %v167
    %v720 = vunpack.c.l.b16 %v168
    %v721 = vunpack.c.l.b16 %v169
    %v722 = vunpack.c.h.b16 %v169
    %v723 = vunpack.c.l.b16 %v170
    %v724 = vunpack.c.h.b16 %v170
    %v725 = vunpack.c.l.b16 %v171
    %v726 = vunpack.c.h.b16 %v171
    %v727 = vunpack.c.l.b16 %v172
    %v728 = vunpack.c.l.b16 %v173
    %v729 = vunpack.c.h.b16 %v173
    %v730 = vunpack.c.l.b16 %v174
    %v731 = vunpack.c.h.b16 %v174
    %v732 = vunpack.c.l.b16 %v175
    %v733 = vunpack.c.h.b16 %v175
    %v734 = vunpack.c.l.b16 %v176
    %v735 = vunpack.c.l.b16 %v177
    %v736 = vunpack.c.h.b16 %v177
    %v737 = vunpack.c.l.b16 %v178
    %v738 = vunpack.c.h.b16 %v178
    %v739 = vunpack.c.l.b16 %v179
    %v740 = vunpack.c.h.b16 %v179
    %v741 = vunpack.c.l.b16 %v180
    %v742 = vunpack.c.l.b16 %v181
    %v743 = vunpack.c.h.b16 %v181
    %v744 = vunpack.c.l.b16 %v182
    %v745 = vunpack.c.h.b16 %v182
    %v746 = vunpack.c.l.b16 %v183
    %v747 = vunpack.c.h.b16 %v183
    %v748 = vunpack.c.l.b16 %v184
    %v749 = vunpack.c.l.b16 %v185
    %v750 = vunpack.c.h.b16 %v185
    %v751 = vunpack.c.l.b16 %v186
    %v752 = vunpack.c.h.b16 %v186
    %v753 = vunpack.c.l.b16 %v187
    %v754 = vunpack.c.h.b16 %v187
    %v755 = vunpack.c.l.b16 %v188
    %v756 = vunpack.c.l.b16 %v189
    %v757 = vunpack.c.h.b16 %v189
    %v758 = vunpack.c.l.b16 %v190
    %v759 = vunpack.c.h.b16 %v190
    %v760 = vunpack.c.l.b16 %v191
    %v761 = vunpack.c.h.b16 %v191
    %v762 = vunpack.c.l.b16 %v192
    %v763 = vpack.c.b16 %v546, %v539
    %v764 = vpack.c.b16 %v547, %v540
    %v765 = vpack.c.b16 %v548, %v541
    %v766 = vpack.c.b16 %v549, %v542
    %v767 = vpack.c.b16 %v550, %v543
    %v768 = vpack.c.b16 %v551, %v544
    %v769 = vpack.c.b16 %v552, %v545
    %v770 = vpack.c.b16 %v560, %v553
    %v771 = vpack.c.b16 %v561, %v554
    %v772 = vpack.c.b16 %v562, %v555
    %v773 = vpack.c.b16 %v563, %v556
    %v774 = vpack.c.b16 %v564, %v557
    %v775 = vpack.c.b16 %v565, %v558
    %v776 = vpack.c.b16 %v566, %v559
    %v777 = vpack.c.b16 %v574, %v567
    %v778 = vpack.c.b16 %v575, %v568
    %v779 = vpack.c.b16 %v576, %v569
    %v780 = vpack.c.b16 %v577, %v570
    %v781 = vpack.c.b16 %v578, %v571
    %v782 = vpack.c.b16 %v579, %v572
    %v783 = vpack.c.b16 %v580, %v573
    %v784 = vpack.c.b16 %v588, %v581
    %v785 = vpack.c.b16 %v589, %v582
    %v786 = vpack.c.b16 %v590, %v583
    %v787 = vpack.c.b16 %v591, %v584
    %v788 = vpack.c.b16 %v592, %v585
    %v789 = vpack.c.b16 %v593, %v586
    %v790 = vpack.c.b16 %v594, %v587
    %v791 = vpack.c.b16 %v602, %v595
    %v792 = vpack.c.b16 %v603, %v596
    %v793 = vpack.c.b16 %v604, %v597
    %v794 = vpack.c.b16 %v605, %v598
    %v795 = vpack.c.b16 %v606, %v599
    %v796 = vpack.c.b16 %v607, %v600
    %v797 = vpack.c.b16 %v608, %v601
    %v798 = vpack.c.b16 %v616, %v609
    %v799 = vpack.c.b16 %v617, %v610
    %v800 = vpack.c.b16 %v618, %v611
    %v801 = vpack.c.b16 %v619, %v612
    %v802 = vpack.c.b16 %v620, %v613
    %v803 = vpack.c.b16 %v621, %v614
    %v804 = vpack.c.b16 %v622, %v615
    %v805 = vpack.c.b16 %v630, %v623
    %v806 = vpack.c.b16 %v631, %v624
    %v807 = vpack.c.b16 %v632, %v625
    %v808 = vpack.c.b16 %v633, %v626
    %v809 = vpack.c.b16 %v634, %v627
    %v810 = vpack.c.b16 %v635, %v628
    %v811 = vpack.c.b16 %v636, %v629
    %v812 = vpack.c.b16 %v644, %v637
    %v813 = vpack.c.b16 %v645, %v638
    %v814 = vpack.c.b16 %v646, %v639
    %v815 = vpack.c.b16 %v647, %v640
    %v816 = vpack.c.b16 %v648, %v641
    %v817 = vpack.c.b16 %v649, %v642
    %v818 = vpack.c.b16 %v650, %v643
    %v819 = vpack.c.b16 %v658, %v651
    %v820 = vpack.c.b16 %v659, %v652
    %v821 = vpack.c.b16 %v660, %v653
    %v822 = vpack.c.b16 %v661, %v654
    %v823 = vpack.c.b16 %v662, %v655
    %v824 = vpack.c.b16 %v663, %v656
    %v825 = vpack.c.b16 %v664, %v657
    %v826 = vpack.c.b16 %v672, %v665
    %v827 = vpack.c.b16 %v673, %v666
    %v828 = vpack.c.b16 %v674, %v667
    %v829 = vpack.c.b16 %v675, %v668
    %v830 = vpack.c.b16 %v676, %v669
    %v831 = vpack.c.b16 %v677, %v670
    %v832 = vpack.c.b16 %v678, %v671
    %v833 = vpack.c.b16 %v686, %v679
    %v834 = vpack.c.b16 %v687, %v680
    %v835 = vpack.c.b16 %v688, %v681
    %v836 = vpack.c.b16 %v689, %v682
    %v837 = vpack.c.b16 %v690, %v683
    %v838 = vpack.c.b16 %v691, %v684
    %v839 = vpack.c.b16 %v692, %v685
    %v840 = vpack.c.b16 %v700, %v693
    %v841 = vpack.c.b16 %v701, %v694
    %v842 = vpack.c.b16 %v702, %v695
    %v843 = vpack.c.b16 %v703, %v696
    %v844 = vpack.c.b16 %v704, %v697
    %v845 = vpack.c.b16 %v705, %v698
    %v846 = vpack.c.b16 %v706, %v699
    %v847 = vpack.c.b16 %v714, %v707
    %v848 = vpack.c.b16 %v715, %v708
    %v849 = vpack.c.b16 %v716, %v709
    %v850 = vpack.c.b16 %v717, %v710
    %v851 = vpack.c.b16 %v718, %v711
    %v852 = vpack.c.b16 %v719, %v712
    %v853 = vpack.c.b16 %v720, %v713
    %v854 = vpack.c.b16 %v728, %v721
    %v855 = vpack.c.b16 %v729, %v722
    %v856 = vpack.c.b16 %v730, %v723
    %v857 = vpack.c.b16 %v731, %v724
    %v858 = vpack.c.b16 %v732, %v725
    %v859 = vpack.c.b16 %v733, %v726
    %v860 = vpack.c.b16 %v734, %v727
    %v861 = vpack.c.b16 %v742, %v735
    %v862 = vpack.c.b16 %v743, %v736
    %v863 = vpack.c.b16 %v744, %v737
    %v864 = vpack.c.b16 %v745, %v738
    %v865 = vpack.c.b16 %v746, %v739
    %v866 = vpack.c.b16 %v747, %v740
    %v867 = vpack.c.b16 %v748, %v741
    %v868 = vpack.c.b16 %v756, %v749
    %v869 = vpack.c.b16 %v757, %v750
    %v870 = vpack.c.b16 %v758, %v751
    %v871 = vpack.c.b16 %v759, %v752
    %v872 = vpack.c.b16 %v760, %v753
    %v873 = vpack.c.b16 %v761, %v754
    %v874 = vpack.c.b16 %v762, %v755
    %v1167 = vunpack.c.l.b16 %v193
    %v1168 = vunpack.c.h.b16 %v193
    %v1169 = vunpack.c.l.b16 %v194
    %v1170 = vunpack.c.h.b16 %v194
    %v1171 = vunpack.c.l.b16 %v195
    %v1172 = vunpack.c.h.b16 %v195
    %v1173 = vunpack.c.l.b16 %v196
    %v1174 = vunpack.c.h.b16 %v196
    %v1175 = vunpack.c.l.b16 %v197
    %v1176 = vunpack.c.h.b16 %v197
    %v1177 = vunpack.c.l.b16 %v198
    %v1178 = vunpack.c.h.b16 %v198
    %v1179 = vunpack.c.l.b16 %v199
    %v1180 = vunpack.c.h.b16 %v199
    %v1181 = vunpack.c.l.b16 %v200
    %v1182 = vunpack.c.h.b16 %v200
    %v1183 = vunpack.c.l.b16 %v201
    %v1184 = vunpack.c.h.b16 %v201
    %v1185 = vunpack.c.l.b16 %v202
    %v1186 = vunpack.c.h.b16 %v202
    %v1187 = vunpack.c.l.b16 %v203
    %v1188 = vunpack.c.h.b16 %v203
    %v1189 = vunpack.c.l.b16 %v204
    %v1190 = vunpack.c.h.b16 %v204
    %v1191 = vunpack.c.l.b16 %v205
    %v1192 = vunpack.c.h.b16 %v205
    %v1193 = vunpack.c.l.b16 %v206
    %v1194 = vunpack.c.h.b16 %v206
    %v1195 = vunpack.c.l.b16 %v207
    %v1196 = vunpack.c.h.b16 %v207
    %v1197 = vunpack.c.l.b16 %v208
    %v1198 = vunpack.c.h.b16 %v208
    %v1199 = vunpack.c.l.b16 %v209
    %v1200 = vunpack.c.h.b16 %v209
    %v1201 = vunpack.c.l.b16 %v210
    %v1202 = vunpack.c.h.b16 %v210
    %v1203 = vunpack.c.l.b16 %v211
    %v1204 = vunpack.c.h.b16 %v211
    %v1205 = vunpack.c.l.b16 %v212
    %v1206 = vunpack.c.h.b16 %v212
    %v1207 = vunpack.c.l.b16 %v213
    %v1208 = vunpack.c.h.b16 %v213
    %v1209 = vunpack.c.l.b16 %v214
    %v1210 = vunpack.c.h.b16 %v214
    %v1211 = vunpack.c.l.b16 %v215
    %v1212 = vunpack.c.h.b16 %v215
    %v1213 = vunpack.c.l.b16 %v216
    %v1214 = vunpack.c.h.b16 %v216
    %v1215 = vunpack.c.l.b16 %v217
    %v1216 = vunpack.c.h.b16 %v217
    %v1217 = vunpack.c.l.b16 %v218
    %v1218 = vunpack.c.h.b16 %v218
    %v1219 = vunpack.c.l.b16 %v219
    %v1220 = vunpack.c.h.b16 %v219
    %v1221 = vunpack.c.l.b16 %v220
    %v1222 = vunpack.c.h.b16 %v220
    %v1223 = vunpack.c.l.b16 %v221
    %v1224 = vunpack.c.h.b16 %v221
    %v1225 = vunpack.c.l.b16 %v222
    %v1226 = vunpack.c.h.b16 %v222
    %v1227 = vunpack.c.l.b16 %v223
    %v1228 = vunpack.c.h.b16 %v223
    %v1229 = vunpack.c.l.b16 %v224
    %v1230 = vunpack.c.h.b16 %v224
    %v1231 = vunpack.c.l.b16 %v225
    %v1232 = vunpack.c.h.b16 %v225
    %v1233 = vunpack.c.l.b16 %v226
    %v1234 = vunpack.c.h.b16 %v226
    %v1235 = vunpack.c.l.b16 %v227
    %v1236 = vunpack.c.h.b16 %v227
    %v1237 = vunpack.c.l.b16 %v228
    %v1238 = vunpack.c.h.b16 %v228
    %v1239 = vunpack.c.l.b16 %v229
    %v1240 = vunpack.c.h.b16 %v229
    %v1241 = vunpack.c.l.b16 %v230
    %v1242 = vunpack.c.h.b16 %v230
    %v1243 = vunpack.c.l.b16 %v231
    %v1244 = vunpack.c.h.b16 %v231
    %v1245 = vunpack.c.l.b16 %v232
    %v1246 = vunpack.c.h.b16 %v232
    %v1247 = vunpack.c.l.b16 %v233
    %v1248 = vunpack.c.h.b16 %v233
    %v1249 = vunpack.c.l.b16 %v234
    %v1250 = vunpack.c.h.b16 %v234
    %v1251 = vunpack.c.l.b16 %v235
    %v1252 = vunpack.c.h.b16 %v235
    %v1253 = vunpack.c.l.b16 %v236
    %v1254 = vunpack.c.h.b16 %v236
    %v1255 = vunpack.c.l.b16 %v237
    %v1256 = vunpack.c.h.b16 %v237
    %v1257 = vunpack.c.l.b16 %v238
    %v1258 = vunpack.c.h.b16 %v238
    %v1259 = vunpack.c.l.b16 %v239
    %v1260 = vunpack.c.h.b16 %v239
    %v1261 = vunpack.c.l.b16 %v240
    %v1262 = vunpack.c.h.b16 %v240
    %v1263 = vunpack.c.l.b16 %v241
    %v1264 = vunpack.c.h.b16 %v241
    %v1265 = vunpack.c.l.b16 %v242
    %v1266 = vunpack.c.h.b16 %v242
    %v1267 = vunpack.c.l.b16 %v243
    %v1268 = vunpack.c.h.b16 %v243
    %v1269 = vunpack.c.l.b16 %v244
    %v1270 = vunpack.c.h.b16 %v244
    %v1271 = vunpack.c.l.b16 %v245
    %v1272 = vunpack.c.h.b16 %v245
    %v1273 = vunpack.c.l.b16 %v246
    %v1274 = vunpack.c.h.b16 %v246
    %v1275 = vunpack.c.l.b16 %v247
    %v1276 = vunpack.c.h.b16 %v247
    %v1277 = vunpack.c.l.b16 %v248
    %v1278 = vunpack.c.h.b16 %v248
    %v1279 = vunpack.c.l.b16 %v249
    %v1280 = vunpack.c.h.b16 %v249
    %v1281 = vunpack.c.l.b16 %v250
    %v1282 = vunpack.c.h.b16 %v250
    %v1283 = vunpack.c.l.b16 %v251
    %v1284 = vunpack.c.h.b16 %v251
    %v1285 = vunpack.c.l.b16 %v252
    %v1286 = vunpack.c.h.b16 %v252
    %v1287 = vunpack.c.l.b16 %v253
    %v1288 = vunpack.c.h.b16 %v253
    %v1289 = vunpack.c.l.b16 %v254
    %v1290 = vunpack.c.h.b16 %v254
    %v1291 = vunpack.c.l.b16 %v255
    %v1292 = vunpack.c.h.b16 %v255
    %v1293 = vunpack.c.l.b16 %v256
    %v1294 = vunpack.c.h.b16 %v256
    %v1295 = vunpack.c.l.b16 %v257
    %v1296 = vunpack.c.h.b16 %v257
    %v1297 = vunpack.c.l.b16 %v258
    %v1298 = vunpack.c.h.b16 %v258
    %v1299 = vunpack.c.l.b16 %v259
    %v1300 = vunpack.c.h.b16 %v259
    %v1301 = vunpack.c.l.b16 %v260
    %v1302 = vunpack.c.h.b16 %v260
    %v1303 = vunpack.c.l.b16 %v261
    %v1304 = vunpack.c.h.b16 %v261
    %v1305 = vunpack.c.l.b16 %v262
    %v1306 = vunpack.c.h.b16 %v262
    %v1307 = vunpack.c.l.b16 %v263
    %v1308 = vunpack.c.h.b16 %v263
    %v1309 = vunpack.c.l.b16 %v264
    %v1310 = vunpack.c.h.b16 %v264
    %v1311 = vunpack.c.l.b16 %v265
    %v1312 = vunpack.c.h.b16 %v265
    %v1313 = vunpack.c.l.b16 %v266
    %v1314 = vunpack.c.h.b16 %v266
    %v1315 = vunpack.c.l.b16 %v267
    %v1316 = vunpack.c.h.b16 %v267
    %v1317 = vunpack.c.l.b16 %v268
    %v1318 = vunpack.c.h.b16 %v268
    %v1319 = vunpack.c.l.b16 %v269
    %v1320 = vunpack.c.h.b16 %v269
    %v1321 = vunpack.c.l.b16 %v270
    %v1322 = vunpack.c.h.b16 %v270
    %v1323 = vunpack.c.l.b16 %v271
    %v1324 = vunpack.c.h.b16 %v271
    %v1325 = vunpack.c.l.b16 %v272
    %v1326 = vunpack.c.h.b16 %v272
    %v1327 = vunpack.c.l.b16 %v273
    %v1328 = vunpack.c.h.b16 %v273
    %v1329 = vunpack.c.l.b16 %v274
    %v1330 = vunpack.c.h.b16 %v274
    %v1331 = vunpack.c.l.b16 %v275
    %v1332 = vunpack.c.h.b16 %v275
    %v1333 = vunpack.c.l.b16 %v276
    %v1334 = vunpack.c.h.b16 %v276
    %v1335 = vunpack.c.l.b16 %v277
    %v1336 = vunpack.c.h.b16 %v277
    %v1337 = vunpack.c.l.b16 %v278
    %v1338 = vunpack.c.h.b16 %v278
    %v1339 = vunpack.c.l.b16 %v279
    %v1340 = vunpack.c.h.b16 %v279
    %v1341 = vunpack.c.l.b16 %v280
    %v1342 = vunpack.c.h.b16 %v280
    %v1343 = vunpack.c.l.b16 %v281
    %v1344 = vunpack.c.h.b16 %v281
    %v1345 = vunpack.c.l.b16 %v282
    %v1346 = vunpack.c.h.b16 %v282
    %v1347 = vunpack.c.l.b16 %v283
    %v1348 = vunpack.c.h.b16 %v283
    %v1349 = vunpack.c.l.b16 %v284
    %v1350 = vunpack.c.h.b16 %v284
    %v1351 = vunpack.c.l.b16 %v285
    %v1352 = vunpack.c.h.b16 %v285
    %v1353 = vunpack.c.l.b16 %v286
    %v1354 = vunpack.c.h.b16 %v286
    %v1355 = vunpack.c.l.b16 %v287
    %v1356 = vunpack.c.h.b16 %v287
    %v1357 = vunpack.c.l.b16 %v288
    %v1358 = vunpack.c.h.b16 %v288
    %v1359 = vunpack.c.l.b16 %v289
    %v1360 = vunpack.c.h.b16 %v289
    %v1361 = vunpack.c.l.b16 %v290
    %v1362 = vunpack.c.h.b16 %v290
    %v1363 = vunpack.c.l.b16 %v291
    %v1364 = vunpack.c.h.b16 %v291
    %v1365 = vunpack.c.l.b16 %v292
    %v1366 = vunpack.c.h.b16 %v292
    %v1367 = vunpack.c.l.b16 %v293
    %v1368 = vunpack.c.h.b16 %v293
    %v1369 = vunpack.c.l.b16 %v294
    %v1370 = vunpack.c.h.b16 %v294
    %v1371 = vunpack.c.l.b16 %v295
    %v1372 = vunpack.c.h.b16 %v295
    %v1373 = vunpack.c.l.b16 %v296
    %v1374 = vunpack.c.h.b16 %v296
    %v1375 = vunpack.c.l.b16 %v297
    %v1376 = vunpack.c.h.b16 %v297
    %v1377 = vunpack.c.l.b16 %v298
    %v1378 = vunpack.c.h.b16 %v298
    %v1379 = vunpack.c.l.b16 %v299
    %v1380 = vunpack.c.h.b16 %v299
    %v1381 = vunpack.c.l.b16 %v300
    %v1382 = vunpack.c.h.b16 %v300
    %v1383 = vunpack.c.l.b16 %v301
    %v1384 = vunpack.c.h.b16 %v301
    %v1385 = vunpack.c.l.b16 %v302
    %v1386 = vunpack.c.h.b16 %v302
    %v1387 = vunpack.c.l.b16 %v303
    %v1388 = vunpack.c.h.b16 %v303
    %v1389 = vunpack.c.l.b16 %v304
    %v1390 = vunpack.c.h.b16 %v304
    %v1391 = vunpack.c.l.b16 %v305
    %v1392 = vunpack.c.h.b16 %v305
    %v1393 = vunpack.c.l.b16 %v306
    %v1394 = vunpack.c.h.b16 %v306
    %v1395 = vunpack.c.l.b16 %v307
    %v1396 = vunpack.c.h.b16 %v307
    %v1397 = vunpack.c.l.b16 %v308
    %v1398 = vunpack.c.h.b16 %v308
    %v1399 = vunpack.c.l.b16 %v309
    %v1400 = vunpack.c.h.b16 %v309
    %v1401 = vunpack.c.l.b16 %v310
    %v1402 = vunpack.c.h.b16 %v310
    %v1403 = vunpack.c.l.b16 %v311
    %v1404 = vunpack.c.h.b16 %v311
    %v1405 = vunpack.c.l.b16 %v312
    %v1406 = vunpack.c.h.b16 %v312
    %v1407 = vunpack.c.l.b16 %v313
    %v1408 = vunpack.c.h.b16 %v313
    %v1409 = vunpack.c.l.b16 %v314
    %v1410 = vunpack.c.h.b16 %v314
    %v1411 = vunpack.c.l.b16 %v315
    %v1412 = vunpack.c.h.b16 %v315
    %v1413 = vunpack.c.l.b16 %v316
    %v1414 = vunpack.c.h.b16 %v316
    %v1415 = vunpack.c.l.b16 %v317
    %v1416 = vunpack.c.h.b16 %v317
    %v1417 = vunpack.c.l.b16 %v318
    %v1418 = vunpack.c.h.b16 %v318
    %v1419 = vunpack.c.l.b16 %v319
    %v1420 = vunpack.c.h.b16 %v319
    %v1421 = vunpack.c.l.b16 %v320
    %v1422 = vunpack.c.h.b16 %v320
    %v1423 = vunpack.c.l.b16 %v321
    %v1424 = vunpack.c.h.b16 %v321
    %v1425 = vunpack.c.l.b16 %v322
    %v1426 = vunpack.c.h.b16 %v322
    %v1427 = vunpack.c.l.b16 %v323
    %v1428 = vunpack.c.h.b16 %v323
    %v1429 = vunpack.c.l.b16 %v324
    %v1430 = vunpack.c.h.b16 %v324
    %v1431 = vunpack.c.l.b16 %v325
    %v1432 = vunpack.c.h.b16 %v325
    %v1433 = vunpack.c.l.b16 %v326
    %v1434 = vunpack.c.h.b16 %v326
    %v1435 = vunpack.c.l.b16 %v327
    %v1436 = vunpack.c.h.b16 %v327
    %v1437 = vunpack.c.l.b16 %v328
    %v1438 = vunpack.c.h.b16 %v328
    %v1439 = vunpack.c.l.b16 %v329
    %v1440 = vunpack.c.h.b16 %v329
    %v1441 = vunpack.c.l.b16 %v330
    %v1442 = vunpack.c.h.b16 %v330
    %v1443 = vunpack.c.l.b16 %v331
    %v1444 = vunpack.c.h.b16 %v331
    %v1445 = vunpack.c.l.b16 %v332
    %v1446 = vunpack.c.h.b16 %v332
    %v1447 = vunpack.c.l.b16 %v333
    %v1448 = vunpack.c.h.b16 %v333
    %v1449 = vunpack.c.l.b16 %v334
    %v1450 = vunpack.c.h.b16 %v334
    %v1451 = vunpack.c.l.b16 %v335
    %v1452 = vunpack.c.h.b16 %v335
    %v1453 = vunpack.c.l.b16 %v336
    %v1454 = vunpack.c.h.b16 %v336
    %v1455 = vunpack.c.l.b16 %v337
    %v1456 = vunpack.c.h.b16 %v337
    %v1457 = vunpack.c.l.b16 %v338
    %v1458 = vunpack.c.h.b16 %v338
    %v1459 = vunpack.c.l.b16 %v339
    %v1460 = vunpack.c.h.b16 %v339
    %v1461 = vunpack.c.l.b16 %v340
    %v1462 = vunpack.c.h.b16 %v340
    %v1463 = vunpack.c.l.b16 %v341
    %v1464 = vunpack.c.h.b16 %v341
    %v1465 = vunpack.c.l.b16 %v342
    %v1466 = vunpack.c.h.b16 %v342
    %v1467 = vunpack.c.l.b16 %v343
    %v1468 = vunpack.c.h.b16 %v343
    %v1469 = vunpack.c.l.b16 %v344
    %v1470 = vunpack.c.h.b16 %v344
    %v1471 = vunpack.c.l.b16 %v345
    %v1472 = vunpack.c.h.b16 %v345
    %v1473 = vunpack.c.l.b16 %v346
    %v1474 = vunpack.c.h.b16 %v346
    %v1475 = vunpack.c.l.b16 %v347
    %v1476 = vunpack.c.h.b16 %v347
    %v1477 = vunpack.c.l.b16 %v348
    %v1478 = vunpack.c.h.b16 %v348
    %v1479 = vunpack.c.l.b16 %v349
    %v1480 = vunpack.c.h.b16 %v349
    %v1481 = vunpack.c.l.b16 %v350
    %v1482 = vunpack.c.h.b16 %v350
    %v1483 = vunpack.c.l.b16 %v351
    %v1484 = vunpack.c.h.b16 %v351
    %v1485 = vunpack.c.l.b16 %v352
    %v1486 = vunpack.c.h.b16 %v352
    %v1487 = vunpack.c.l.b16 %v353
    %v1488 = vunpack.c.h.b16 %v353
    %v1489 = vunpack.c.l.b16 %v354
    %v1490 = vunpack.c.h.b16 %v354
    %v1491 = vunpack.c.l.b16 %v355
    %v1492 = vunpack.c.h.b16 %v355
    %v1493 = vunpack.c.l.b16 %v356
    %v1494 = vunpack.c.h.b16 %v356
    %v1495 = vunpack.c.l.b16 %v357
    %v1496 = vunpack.c.h.b16 %v357
    %v1497 = vunpack.c.l.b16 %v358
    %v1498 = vunpack.c.h.b16 %v358
    %v1499 = vunpack.c.l.b16 %v359
    %v1500 = vunpack.c.h.b16 %v359
    %v1501 = vunpack.c.l.b16 %v360
    %v1502 = vunpack.c.h.b16 %v360
    %v1503 = vunpack.c.l.b16 %v361
    %v1504 = vunpack.c.h.b16 %v361
    %v1505 = vunpack.c.l.b16 %v362
    %v1506 = vunpack.c.h.b16 %v362
    %v1507 = vunpack.c.l.b16 %v363
    %v1508 = vunpack.c.h.b16 %v363
    %v1509 = vunpack.c.l.b16 %v364
    %v1510 = vunpack.c.h.b16 %v364
    %v1511 = vunpack.c.l.b16 %v365
    %v1512 = vunpack.c.h.b16 %v365
    %v1513 = vunpack.c.l.b16 %v366
    %v1514 = vunpack.c.h.b16 %v366
    %v1515 = vunpack.c.l.b16 %v367
    %v1516 = vunpack.c.h.b16 %v367
    %v1517 = vunpack.c.l.b16 %v368
    %v1518 = vunpack.c.h.b16 %v368
    %v1519 = vunpack.c.l.b16 %v369
    %v1520 = vunpack.c.h.b16 %v369
    %v1521 = vunpack.c.l.b16 %v370
    %v1522 = vunpack.c.h.b16 %v370
    %v1523 = vunpack.c.l.b16 %v371
    %v1524 = vunpack.c.h.b16 %v371
    %v1525 = vunpack.c.l.b16 %v372
    %v1526 = vunpack.c.h.b16 %v372
    %v1527 = vunpack.c.l.b16 %v373
    %v1528 = vunpack.c.h.b16 %v373
    %v1529 = vunpack.c.l.b16 %v374
    %v1530 = vunpack.c.h.b16 %v374
    %v1531 = vunpack.c.l.b16 %v375
    %v1532 = vunpack.c.h.b16 %v375
    %v1533 = vunpack.c.l.b16 %v376
    %v1534 = vunpack.c.h.b16 %v376
    %v1535 = vunpack.c.l.b16 %v377
    %v1536 = vunpack.c.h.b16 %v377
    %v1537 = vunpack.c.l.b16 %v378
    %v1538 = vunpack.c.h.b16 %v378
    %v1539 = vunpack.c.l.b16 %v379
    %v1540 = vunpack.c.h.b16 %v379
    %v1541 = vunpack.c.l.b16 %v380
    %v1542 = vunpack.c.h.b16 %v380
    %v1543 = vunpack.c.l.b16 %v381
    %v1544 = vunpack.c.h.b16 %v381
    %v1545 = vunpack.c.l.b16 %v382
    %v1546 = vunpack.c.h.b16 %v382
    %v1547 = vunpack.c.l.b16 %v383
    %v1548 = vunpack.c.h.b16 %v383
    %v1549 = vunpack.c.l.b16 %v384
    %v1550 = vunpack.c.h.b16 %v384
    %v1551 = vunpack.c.l.b16 %v385
    %v1552 = vunpack.c.h.b16 %v385
    %v1553 = vunpack.c.l.b16 %v386
    %v1554 = vunpack.c.h.b16 %v386
    %v1555 = vunpack.c.l.b16 %v387
    %v1556 = vunpack.c.h.b16 %v387
    %v1557 = vunpack.c.l.b16 %v388
    %v1558 = vunpack.c.h.b16 %v388
    %v1559 = vpack.c.b16 %v1171, %v1167
    %v1560 = vpack.c.b16 %v1172, %v1168
    %v1561 = vpack.c.b16 %v1173, %v1169
    %v1562 = vpack.c.b16 %v1174, %v1170
    %v1563 = vpack.c.b16 %v1179, %v1175
    %v1564 = vpack.c.b16 %v1180, %v1176
    %v1565 = vpack.c.b16 %v1181, %v1177
    %v1566 = vpack.c.b16 %v1182, %v1178
    %v1567 = vpack.c.b16 %v1187, %v1183
    %v1568 = vpack.c.b16 %v1188, %v1184
    %v1569 = vpack.c.b16 %v1189, %v1185
    %v1570 = vpack.c.b16 %v1190, %v1186
    %v1571 = vpack.c.b16 %v1195, %v1191
    %v1572 = vpack.c.b16 %v1196, %v1192
    %v1573 = vpack.c.b16 %v1197, %v1193
    %v1574 = vpack.c.b16 %v1198, %v1194
    %v1575 = vpack.c.b16 %v1203, %v1199
    %v1576 = vpack.c.b16 %v1204, %v1200
    %v1577 = vpack.c.b16 %v1205, %v1201
    %v1578 = vpack.c.b16 %v1206, %v1202
    %v1579 = vpack.c.b16 %v1211, %v1207
    %v1580 = vpack.c.b16 %v1212, %v1208
    %v1581 = vpack.c.b16 %v1213, %v1209
    %v1582 = vpack.c.b16 %v1214, %v1210
    %v1583 = vpack.c.b16 %v1219, %v1215
    %v1584 = vpack.c.b16 %v1220, %v1216
    %v1585 = vpack.c.b16 %v1221, %v1217
    %v1586 = vpack.c.b16 %v1222, %v1218
    %v1587 = vpack.c.b16 %v1227, %v1223
    %v1588 = vpack.c.b16 %v1228, %v1224
    %v1589 = vpack.c.b16 %v1229, %v1225
    %v1590 = vpack.c.b16 %v1230, %v1226
    %v1591 = vpack.c.b16 %v1235, %v1231
    %v1592 = vpack.c.b16 %v1236, %v1232
    %v1593 = vpack.c.b16 %v1237, %v1233
    %v1594 = vpack.c.b16 %v1238, %v1234
    %v1595 = vpack.c.b16 %v1243, %v1239
    %v1596 = vpack.c.b16 %v1244, %v1240
    %v1597 = vpack.c.b16 %v1245, %v1241
    %v1598 = vpack.c.b16 %v1246, %v1242
    %v1599 = vpack.c.b16 %v1251, %v1247
    %v1600 = vpack.c.b16 %v1252, %v1248
    %v1601 = vpack.c.b16 %v1253, %v1249
    %v1602 = vpack.c.b16 %v1254, %v1250
    %v1603 = vpack.c.b16 %v1259, %v1255
    %v1604 = vpack.c.b16 %v1260, %v1256
    %v1605 = vpack.c.b16 %v1261, %v1257
    %v1606 = vpack.c.b16 %v1262, %v1258
    %v1607 = vpack.c.b16 %v1267, %v1263
    %v1608 = vpack.c.b16 %v1268, %v1264
    %v1609 = vpack.c.b16 %v1269, %v1265
    %v1610 = vpack.c.b16 %v1270, %v1266
    %v1611 = vpack.c.b16 %v1275, %v1271
    %v1612 = vpack.c.b16 %v1276, %v1272
    %v1613 = vpack.c.b16 %v1277, %v1273
    %v1614 = vpack.c.b16 %v1278, %v1274
    %v1615 = vpack.c.b16 %v1283, %v1279
    %v1616 = vpack.c.b16 %v1284, %v1280
    %v1617 = vpack.c.b16 %v1285, %v1281
    %v1618 = vpack.c.b16 %v1286, %v1282
    %v1619 = vpack.c.b16 %v1291, %v1287
    %v1620 = vpack.c.b16 %v1292, %v1288
    %v1621 = vpack.c.b16 %v1293, %v1289
    %v1622 = vpack.c.b16 %v1294, %v1290
    %v1623 = vpack.c.b16 %v1299, %v1295
    %v1624 = vpack.c.b16 %v1300, %v1296
    %v1625 = vpack.c.b16 %v1301, %v1297
    %v1626 = vpack.c.b16 %v1302, %v1298
    %v1627 = vpack.c.b16 %v1307, %v1303
    %v1628 = vpack.c.b16 %v1308, %v1304
    %v1629 = vpack.c.b16 %v1309, %v1305
    %v1630 = vpack.c.b16 %v1310, %v1306
    %v1631 = vpack.c.b16 %v1315, %v1311
    %v1632 = vpack.c.b16 %v1316, %v1312
    %v1633 = vpack.c.b16 %v1317, %v1313
    %v1634 = vpack.c.b16 %v1318, %v1314
    %v1635 = vpack.c.b16 %v1323, %v1319
    %v1636 = vpack.c.b16 %v1324, %v1320
    %v1637 = vpack.c.b16 %v1325, %v1321
    %v1638 = vpack.c.b16 %v1326, %v1322
    %v1639 = vpack.c.b16 %v1331, %v1327
    %v1640 = vpack.c.b16 %v1332, %v1328
    %v1641 = vpack.c.b16 %v1333, %v1329
    %v1642 = vpack.c.b16 %v1334, %v1330
    %v1643 = vpack.c.b16 %v1339, %v1335
    %v1644 = vpack.c.b16 %v1340, %v1336
    %v1645 = vpack.c.b16 %v1341, %v1337
    %v1646 = vpack.c.b16 %v1342, %v1338
    %v1647 = vpack.c.b16 %v1347, %v1343
    %v1648 = vpack.c.b16 %v1348, %v1344
    %v1649 = vpack.c.b16 %v1349, %v1345
    %v1650 = vpack.c.b16 %v1350, %v1346
    %v1651 = vpack.c.b16 %v1355, %v1351
    %v1652 = vpack.c.b16 %v1356, %v1352
    %v1653 = vpack.c.b16 %v1357, %v1353
    %v1654 = vpack.c.b16 %v1358, %v1354
    %v1655 = vpack.c.b16 %v1363, %v1359
    %v1656 = vpack.c.b16 %v1364, %v1360
    %v1657 = vpack.c.b16 %v1365, %v1361
    %v1658 = vpack.c.b16 %v1366, %v1362
    %v1659 = vpack.c.b16 %v1371, %v1367
    %v1660 = vpack.c.b16 %v1372, %v1368
    %v1661 = vpack.c.b16 %v1373, %v1369
    %v1662 = vpack.c.b16 %v1374, %v1370
    %v1663 = vpack.c.b16 %v1379, %v1375
    %v1664 = vpack.c.b16 %v1380, %v1376
    %v1665 = vpack.c.b16 %v1381, %v1377
    %v1666 = vpack.c.b16 %v1382, %v1378
    %v1667 = vpack.c.b16 %v1387, %v1383
    %v1668 = vpack.c.b16 %v1388, %v1384
    %v1669 = vpack.c.b16 %v1389, %v1385
    %v1670 = vpack.c.b16 %v1390, %v1386
    %v1671 = vpack.c.b16 %v1395, %v1391
    %v1672 = vpack.c.b16 %v1396, %v1392
    %v1673 = vpack.c.b16 %v1397, %v1393
    %v1674 = vpack.c.b16 %v1398, %v1394
    %v1675 = vpack.c.b16 %v1403, %v1399
    %v1676 = vpack.c.b16 %v1404, %v1400
    %v1677 = vpack.c.b16 %v1405, %v1401
    %v1678 = vpack.c.b16 %v1406, %v1402
    %v1679 = vpack.c.b16 %v1411, %v1407
    %v1680 = vpack.c.b16 %v1412, %v1408
    %v1681 = vpack.c.b16 %v1413, %v1409
    %v1682 = vpack.c.b16 %v1414, %v1410
    %v1683 = vpack.c.b16 %v1419, %v1415
    %v1684 = vpack.c.b16 %v1420, %v1416
    %v1685 = vpack.c.b16 %v1421, %v1417
    %v1686 = vpack.c.b16 %v1422, %v1418
    %v1687 = vpack.c.b16 %v1427, %v1423
    %v1688 = vpack.c.b16 %v1428, %v1424
    %v1689 = vpack.c.b16 %v1429, %v1425
    %v1690 = vpack.c.b16 %v1430, %v1426
    %v1691 = vpack.c.b16 %v1435, %v1431
    %v1692 = vpack.c.b16 %v1436, %v1432
    %v1693 = vpack.c.b16 %v1437, %v1433
    %v1694 = vpack.c.b16 %v1438, %v1434
    %v1695 = vpack.c.b16 %v1443, %v1439
    %v1696 = vpack.c.b16 %v1444, %v1440
    %v1697 = vpack.c.b16 %v1445, %v1441
    %v1698 = vpack.c.b16 %v1446, %v1442
    %v1699 = vpack.c.b16 %v1451, %v1447
    %v1700 = vpack.c.b16 %v1452, %v1448
    %v1701 = vpack.c.b16 %v1453, %v1449
    %v1702 = vpack.c.b16 %v1454, %v1450
    %v1703 = vpack.c.b16 %v1459, %v1455
    %v1704 = vpack.c.b16 %v1460, %v1456
    %v1705 = vpack.c.b16 %v1461, %v1457
    %v1706 = vpack.c.b16 %v1462, %v1458
    %v1707 = vpack.c.b16 %v1467, %v1463
    %v1708 = vpack.c.b16 %v1468, %v1464
    %v1709 = vpack.c.b16 %v1469, %v1465
    %v1710 = vpack.c.b16 %v1470, %v1466
    %v1711 = vpack.c.b16 %v1475, %v1471
    %v1712 = vpack.c.b16 %v1476, %v1472
    %v1713 = vpack.c.b16 %v1477, %v1473
    %v1714 = vpack.c.b16 %v1478, %v1474
    %v1715 = vpack.c.b16 %v1483, %v1479
    %v1716 = vpack.c.b16 %v1484, %v1480
    %v1717 = vpack.c.b16 %v1485, %v1481
    %v1718 = vpack.c.b16 %v1486, %v1482
    %v1719 = vpack.c.b16 %v1491, %v1487
    %v1720 = vpack.c.b16 %v1492, %v1488
    %v1721 = vpack.c.b16 %v1493, %v1489
    %v1722 = vpack.c.b16 %v1494, %v1490
    %v1723 = vpack.c.b16 %v1499, %v1495
    %v1724 = vpack.c.b16 %v1500, %v1496
    %v1725 = vpack.c.b16 %v1501, %v1497
    %v1726 = vpack.c.b16 %v1502, %v1498
    %v1727 = vpack.c.b16 %v1507, %v1503
    %v1728 = vpack.c.b16 %v1508, %v1504
    %v1729 = vpack.c.b16 %v1509, %v1505
    %v1730 = vpack.c.b16 %v1510, %v1506
    %v1731 = vpack.c.b16 %v1515, %v1511
    %v1732 = vpack.c.b16 %v1516, %v1512
    %v1733 = vpack.c.b16 %v1517, %v1513
    %v1734 = vpack.c.b16 %v1518, %v1514
    %v1735 = vpack.c.b16 %v1523, %v1519
    %v1736 = vpack.c.b16 %v1524, %v1520
    %v1737 = vpack.c.b16 %v1525, %v1521
    %v1738 = vpack.c.b16 %v1526, %v1522
    %v1739 = vpack.c.b16 %v1531, %v1527
    %v1740 = vpack.c.b16 %v1532, %v1528
    %v1741 = vpack.c.b16 %v1533, %v1529
    %v1742 = vpack.c.b16 %v1534, %v1530
    %v1743 = vpack.c.b16 %v1539, %v1535
    %v1744 = vpack.c.b16 %v1540, %v1536
    %v1745 = vpack.c.b16 %v1541, %v1537
    %v1746 = vpack.c.b16 %v1542, %v1538
    %v1747 = vpack.c.b16 %v1547, %v1543
    %v1748 = vpack.c.b16 %v1548, %v1544
    %v1749 = vpack.c.b16 %v1549, %v1545
    %v1750 = vpack.c.b16 %v1550, %v1546
    %v1751 = vpack.c.b16 %v1555, %v1551
    %v1752 = vpack.c.b16 %v1556, %v1552
    %v1753 = vpack.c.b16 %v1557, %v1553
    %v1754 = vpack.c.b16 %v1558, %v1554
    %vm1951 = vcmask 130048
    %v1953 = vsel %vm1951, %v769, 0
    %v1956 = vsel %vm1951, %v776, 0
    %v1959 = vsel %vm1951, %v783, 0
    %v1962 = vsel %vm1951, %v790, 0
    %v1965 = vsel %vm1951, %v797, 0
    %v1968 = vsel %vm1951, %v804, 0
    %v1971 = vsel %vm1951, %v811, 0
    %v1974 = vsel %vm1951, %v818, 0
    %v1977 = vsel %vm1951, %v825, 0
    %v1980 = vsel %vm1951, %v832, 0
    %v1983 = vsel %vm1951, %v839, 0
    %v1986 = vsel %vm1951, %v846, 0
    %v1989 = vsel %vm1951, %v853, 0
    %v1992 = vsel %vm1951, %v860, 0
    %v1995 = vsel %vm1951, %v867, 0
    %v1998 = vsel %vm1951, %v874, 0
    %2000 = vmatprep.subr.bf16.mxu0 %v1560
    %2001 = vmatpush1.bf16.msra.mxu0 %v1559
    %2002 = vmatprep.subr.bf16.mxu0 %v1564
    %2003 = vmatpush1.bf16.msra.mxu0 %v1563
    %2004 = vmatprep.subr.bf16.mxu0 %v1568
    %2005 = vmatpush1.bf16.msra.mxu0 %v1567
    %2006 = vmatprep.subr.bf16.mxu0 %v1572
    %2007 = vmatpush1.bf16.msra.mxu0 %v1571
    %2008 = vmatprep.subr.bf16.mxu0 %v1576
    %2009 = vmatpush1.bf16.msra.mxu0 %v1575
    %2010 = vmatprep.subr.bf16.mxu0 %v1580
    %2011 = vmatpush1.bf16.msra.mxu0 %v1579
    %2012 = vmatprep.subr.bf16.mxu0 %v1584
    %2013 = vmatpush1.bf16.msra.mxu0 %v1583
    %2014 = vmatprep.subr.bf16.mxu0 %v1588
    %2015 = vmatpush1.bf16.msra.mxu0 %v1587
    %2016 = vmatprep.subr.bf16.mxu0 %v1592
    %2017 = vmatpush1.bf16.msra.mxu0 %v1591
    %2018 = vmatprep.subr.bf16.mxu0 %v1596
    %2019 = vmatpush1.bf16.msra.mxu0 %v1595
    %2020 = vmatprep.subr.bf16.mxu0 %v1600
    %2021 = vmatpush1.bf16.msra.mxu0 %v1599
    %2022 = vmatprep.subr.bf16.mxu0 %v1604
    %2023 = vmatpush1.bf16.msra.mxu0 %v1603
    %2024 = vmatprep.subr.bf16.mxu0 %v1608
    %2025 = vmatpush1.bf16.msra.mxu0 %v1607
    %2026 = vmatprep.subr.bf16.mxu0 %v1612
    %2027 = vmatpush1.bf16.msra.mxu0 %v1611
    %2028 = vmatprep.subr.bf16.mxu0 %v1616
    %2029 = vmatpush1.bf16.msra.mxu0 %v1615
    %2030 = vmatprep.subr.bf16.mxu0 %v1620
    %2031 = vmatpush1.bf16.msra.mxu0 %v1619
    %2032 = vmatprep.mubr.bf16.mxu0 %v764
    %2033 = vmatmul.mubr.bf16.gmra.mrb[0].mxu0 %v763
    %v2034 = vpop.f32.mrb[0].mxu0
    %v2035 = vadd.f32 %v394, %v2034
    %v2036 = vpop.f32.mrb[0].mxu0
    %v2037 = vadd.f32 %v398, %v2036
    %v2038 = vpop.f32.mrb[0].mxu0
    %v2039 = vadd.f32 %v394, %v2038
    %v2040 = vpop.f32.mrb[0].mxu0
    %v2041 = vadd.f32 %v398, %v2040
    %2042 = vmatprep.mubr.bf16.mxu0 %v771
    %2043 = vmatmul.mubr.bf16.gmra.mrb[0].mxu0 %v770
    %v2044 = vpop.f32.mrb[0].mxu0
    %v2045 = vadd.f32 %v394, %v2044
    %v2046 = vpop.f32.mrb[0].mxu0
    %v2047 = vadd.f32 %v398, %v2046
    %v2048 = vpop.f32.mrb[0].mxu0
    %v2049 = vadd.f32 %v394, %v2048
    %v2050 = vpop.f32.mrb[0].mxu0
    %v2051 = vadd.f32 %v398, %v2050
    %2052 = vmatprep.mubr.bf16.mxu0 %v778
    %2053 = vmatmul.mubr.bf16.gmra.mrb[0].mxu0 %v777
    %v2054 = vpop.f32.mrb[0].mxu0
    %v2055 = vadd.f32 %v394, %v2054
    %v2056 = vpop.f32.mrb[0].mxu0
    %v2057 = vadd.f32 %v398, %v2056
    %v2058 = vpop.f32.mrb[0].mxu0
    %v2059 = vadd.f32 %v394, %v2058
    %v2060 = vpop.f32.mrb[0].mxu0
    %v2061 = vadd.f32 %v398, %v2060
    %2062 = vmatprep.mubr.bf16.mxu0 %v785
    %2063 = vmatmul.mubr.bf16.gmra.mrb[0].mxu0 %v784
    %v2064 = vpop.f32.mrb[0].mxu0
    %v2065 = vadd.f32 %v394, %v2064
    %v2066 = vpop.f32.mrb[0].mxu0
    %v2067 = vadd.f32 %v398, %v2066
    %v2068 = vpop.f32.mrb[0].mxu0
    %v2069 = vadd.f32 %v394, %v2068
    %v2070 = vpop.f32.mrb[0].mxu0
    %v2071 = vadd.f32 %v398, %v2070
    %2072 = vmatprep.mubr.bf16.mxu0 %v792
    %2073 = vmatmul.mubr.bf16.gmra.mrb[0].mxu0 %v791
    %v2074 = vpop.f32.mrb[0].mxu0
    %v2075 = vadd.f32 %v394, %v2074
    %v2076 = vpop.f32.mrb[0].mxu0
    %v2077 = vadd.f32 %v398, %v2076
    %v2078 = vpop.f32.mrb[0].mxu0
    %v2079 = vadd.f32 %v394, %v2078
    %v2080 = vpop.f32.mrb[0].mxu0
    %v2081 = vadd.f32 %v398, %v2080
    %2082 = vmatprep.mubr.bf16.mxu0 %v799
    %2083 = vmatmul.mubr.bf16.gmra.mrb[0].mxu0 %v798
    %v2084 = vpop.f32.mrb[0].mxu0
    %v2085 = vadd.f32 %v394, %v2084
    %v2086 = vpop.f32.mrb[0].mxu0
    %v2087 = vadd.f32 %v398, %v2086
    %v2088 = vpop.f32.mrb[0].mxu0
    %v2089 = vadd.f32 %v394, %v2088
    %v2090 = vpop.f32.mrb[0].mxu0
    %v2091 = vadd.f32 %v398, %v2090
    %2092 = vmatprep.mubr.bf16.mxu0 %v806
    %2093 = vmatmul.mubr.bf16.gmra.mrb[0].mxu0 %v805
    %v2094 = vpop.f32.mrb[0].mxu0
    %v2095 = vadd.f32 %v394, %v2094
    %v2096 = vpop.f32.mrb[0].mxu0
    %v2097 = vadd.f32 %v398, %v2096
    %v2098 = vpop.f32.mrb[0].mxu0
    %v2099 = vadd.f32 %v394, %v2098
    %v2100 = vpop.f32.mrb[0].mxu0
    %v2101 = vadd.f32 %v398, %v2100
    %2102 = vmatprep.mubr.bf16.mxu0 %v813
    %2103 = vmatmul.mubr.bf16.gmra.mrb[0].mxu0 %v812
    %v2104 = vpop.f32.mrb[0].mxu0
    %v2105 = vadd.f32 %v394, %v2104
    %v2106 = vpop.f32.mrb[0].mxu0
    %v2107 = vadd.f32 %v398, %v2106
    %v2108 = vpop.f32.mrb[0].mxu0
    %v2109 = vadd.f32 %v394, %v2108
    %v2110 = vpop.f32.mrb[0].mxu0
    %v2111 = vadd.f32 %v398, %v2110
    %2112 = vmatprep.mubr.bf16.mxu0 %v820
    %2113 = vmatmul.mubr.bf16.gmra.mrb[0].mxu0 %v819
    %v2114 = vpop.f32.mrb[0].mxu0
    %v2115 = vadd.f32 %v394, %v2114
    %v2116 = vpop.f32.mrb[0].mxu0
    %v2117 = vadd.f32 %v398, %v2116
    %v2118 = vpop.f32.mrb[0].mxu0
    %v2119 = vadd.f32 %v394, %v2118
    %v2120 = vpop.f32.mrb[0].mxu0
    %v2121 = vadd.f32 %v398, %v2120
    %2122 = vmatprep.mubr.bf16.mxu0 %v827
    %2123 = vmatmul.mubr.bf16.gmra.mrb[0].mxu0 %v826
    %v2124 = vpop.f32.mrb[0].mxu0
    %v2125 = vadd.f32 %v394, %v2124
    %v2126 = vpop.f32.mrb[0].mxu0
    %v2127 = vadd.f32 %v398, %v2126
    %v2128 = vpop.f32.mrb[0].mxu0
    %v2129 = vadd.f32 %v394, %v2128
    %v2130 = vpop.f32.mrb[0].mxu0
    %v2131 = vadd.f32 %v398, %v2130
    %2132 = vmatprep.mubr.bf16.mxu0 %v834
    %2133 = vmatmul.mubr.bf16.gmra.mrb[0].mxu0 %v833
    %v2134 = vpop.f32.mrb[0].mxu0
    %v2135 = vadd.f32 %v394, %v2134
    %v2136 = vpop.f32.mrb[0].mxu0
    %v2137 = vadd.f32 %v398, %v2136
    %v2138 = vpop.f32.mrb[0].mxu0
    %v2139 = vadd.f32 %v394, %v2138
    %v2140 = vpop.f32.mrb[0].mxu0
    %v2141 = vadd.f32 %v398, %v2140
    %2142 = vmatprep.mubr.bf16.mxu0 %v841
    %2143 = vmatmul.mubr.bf16.gmra.mrb[0].mxu0 %v840
    %v2144 = vpop.f32.mrb[0].mxu0
    %v2145 = vadd.f32 %v394, %v2144
    %v2146 = vpop.f32.mrb[0].mxu0
    %v2147 = vadd.f32 %v398, %v2146
    %v2148 = vpop.f32.mrb[0].mxu0
    %v2149 = vadd.f32 %v394, %v2148
    %v2150 = vpop.f32.mrb[0].mxu0
    %v2151 = vadd.f32 %v398, %v2150
    %2152 = vmatprep.mubr.bf16.mxu0 %v848
    %2153 = vmatmul.mubr.bf16.gmra.mrb[0].mxu0 %v847
    %v2154 = vpop.f32.mrb[0].mxu0
    %v2155 = vadd.f32 %v394, %v2154
    %v2156 = vpop.f32.mrb[0].mxu0
    %v2157 = vadd.f32 %v398, %v2156
    %v2158 = vpop.f32.mrb[0].mxu0
    %v2159 = vadd.f32 %v394, %v2158
    %v2160 = vpop.f32.mrb[0].mxu0
    %v2161 = vadd.f32 %v398, %v2160
    %2162 = vmatprep.mubr.bf16.mxu0 %v855
    %2163 = vmatmul.mubr.bf16.gmra.mrb[0].mxu0 %v854
    %v2164 = vpop.f32.mrb[0].mxu0
    %v2165 = vadd.f32 %v394, %v2164
    %v2166 = vpop.f32.mrb[0].mxu0
    %v2167 = vadd.f32 %v398, %v2166
    %v2168 = vpop.f32.mrb[0].mxu0
    %v2169 = vadd.f32 %v394, %v2168
    %v2170 = vpop.f32.mrb[0].mxu0
    %v2171 = vadd.f32 %v398, %v2170
    %2172 = vmatprep.mubr.bf16.mxu0 %v862
    %2173 = vmatmul.mubr.bf16.gmra.mrb[0].mxu0 %v861
    %v2174 = vpop.f32.mrb[0].mxu0
    %v2175 = vadd.f32 %v394, %v2174
    %v2176 = vpop.f32.mrb[0].mxu0
    %v2177 = vadd.f32 %v398, %v2176
    %v2178 = vpop.f32.mrb[0].mxu0
    %v2179 = vadd.f32 %v394, %v2178
    %v2180 = vpop.f32.mrb[0].mxu0
    %v2181 = vadd.f32 %v398, %v2180
    %2182 = vmatprep.mubr.bf16.mxu0 %v869
    %2183 = vmatmul.mubr.bf16.gmra.mrb[0].mxu0 %v868
    %v2184 = vpop.f32.mrb[0].mxu0
    %v2185 = vadd.f32 %v394, %v2184
    %v2186 = vpop.f32.mrb[0].mxu0
    %v2187 = vadd.f32 %v398, %v2186
    %v2188 = vpop.f32.mrb[0].mxu0
    %v2189 = vadd.f32 %v394, %v2188
    %v2190 = vpop.f32.mrb[0].mxu0
    %v2191 = vadd.f32 %v398, %v2190
    %2192 = vdwg.mxu0
    %2193 = vmatprep.subr.bf16.mxu0 %v1624
    %2194 = vmatpush1.bf16.msra.mxu0 %v1623
    %2195 = vmatprep.subr.bf16.mxu0 %v1628
    %2196 = vmatpush1.bf16.msra.mxu0 %v1627
    %2197 = vmatprep.subr.bf16.mxu0 %v1632
    %2198 = vmatpush1.bf16.msra.mxu0 %v1631
    %2199 = vmatprep.subr.bf16.mxu0 %v1636
    %2200 = vmatpush1.bf16.msra.mxu0 %v1635
    %2201 = vmatprep.subr.bf16.mxu0 %v1640
    %2202 = vmatpush1.bf16.msra.mxu0 %v1639
    %2203 = vmatprep.subr.bf16.mxu0 %v1644
    %2204 = vmatpush1.bf16.msra.mxu0 %v1643
    %2205 = vmatprep.subr.bf16.mxu0 %v1648
    %2206 = vmatpush1.bf16.msra.mxu0 %v1647
    %2207 = vmatprep.subr.bf16.mxu0 %v1652
    %2208 = vmatpush1.bf16.msra.mxu0 %v1651
    %2209 = vmatprep.subr.bf16.mxu0 %v1656
    %2210 = vmatpush1.bf16.msra.mxu0 %v1655
    %2211 = vmatprep.subr.bf16.mxu0 %v1660
    %2212 = vmatpush1.bf16.msra.mxu0 %v1659
    %2213 = vmatprep.subr.bf16.mxu0 %v1664
    %2214 = vmatpush1.bf16.msra.mxu0 %v1663
    %2215 = vmatprep.subr.bf16.mxu0 %v1668
    %2216 = vmatpush1.bf16.msra.mxu0 %v1667
    %2217 = vmatprep.subr.bf16.mxu0 %v1672
    %2218 = vmatpush1.bf16.msra.mxu0 %v1671
    %2219 = vmatprep.subr.bf16.mxu0 %v1676
    %2220 = vmatpush1.bf16.msra.mxu0 %v1675
    %2221 = vmatprep.subr.bf16.mxu0 %v1680
    %2222 = vmatpush1.bf16.msra.mxu0 %v1679
    %2223 = vmatprep.subr.bf16.mxu0 %v1684
    %2224 = vmatpush1.bf16.msra.mxu0 %v1683
    %2225 = vmatprep.mubr.bf16.mxu0 %v766
    %2226 = vmatmul.mubr.bf16.gmra.mrb[0].mxu0 %v765
    %v2227 = vpop.f32.mrb[0].mxu0
    %v2228 = vadd.f32 %v2035, %v2227
    %v2229 = vpop.f32.mrb[0].mxu0
    %v2230 = vadd.f32 %v2037, %v2229
    %v2231 = vpop.f32.mrb[0].mxu0
    %v2232 = vadd.f32 %v2039, %v2231
    %v2233 = vpop.f32.mrb[0].mxu0
    %v2234 = vadd.f32 %v2041, %v2233
    %2235 = vmatprep.mubr.bf16.mxu0 %v773
    %2236 = vmatmul.mubr.bf16.gmra.mrb[0].mxu0 %v772
    %v2237 = vpop.f32.mrb[0].mxu0
    %v2238 = vadd.f32 %v2045, %v2237
    %v2239 = vpop.f32.mrb[0].mxu0
    %v2240 = vadd.f32 %v2047, %v2239
    %v2241 = vpop.f32.mrb[0].mxu0
    %v2242 = vadd.f32 %v2049, %v2241
    %v2243 = vpop.f32.mrb[0].mxu0
    %v2244 = vadd.f32 %v2051, %v2243
    %2245 = vmatprep.mubr.bf16.mxu0 %v780
    %2246 = vmatmul.mubr.bf16.gmra.mrb[0].mxu0 %v779
    %v2247 = vpop.f32.mrb[0].mxu0
    %v2248 = vadd.f32 %v2055, %v2247
    %v2249 = vpop.f32.mrb[0].mxu0
    %v2250 = vadd.f32 %v2057, %v2249
    %v2251 = vpop.f32.mrb[0].mxu0
    %v2252 = vadd.f32 %v2059, %v2251
    %v2253 = vpop.f32.mrb[0].mxu0
    %v2254 = vadd.f32 %v2061, %v2253
    %2255 = vmatprep.mubr.bf16.mxu0 %v787
    %2256 = vmatmul.mubr.bf16.gmra.mrb[0].mxu0 %v786
    %v2257 = vpop.f32.mrb[0].mxu0
    %v2258 = vadd.f32 %v2065, %v2257
    %v2259 = vpop.f32.mrb[0].mxu0
    %v2260 = vadd.f32 %v2067, %v2259
    %v2261 = vpop.f32.mrb[0].mxu0
    %v2262 = vadd.f32 %v2069, %v2261
    %v2263 = vpop.f32.mrb[0].mxu0
    %v2264 = vadd.f32 %v2071, %v2263
    %2265 = vmatprep.mubr.bf16.mxu0 %v794
    %2266 = vmatmul.mubr.bf16.gmra.mrb[0].mxu0 %v793
    %v2267 = vpop.f32.mrb[0].mxu0
    %v2268 = vadd.f32 %v2075, %v2267
    %v2269 = vpop.f32.mrb[0].mxu0
    %v2270 = vadd.f32 %v2077, %v2269
    %v2271 = vpop.f32.mrb[0].mxu0
    %v2272 = vadd.f32 %v2079, %v2271
    %v2273 = vpop.f32.mrb[0].mxu0
    %v2274 = vadd.f32 %v2081, %v2273
    %2275 = vmatprep.mubr.bf16.mxu0 %v801
    %2276 = vmatmul.mubr.bf16.gmra.mrb[0].mxu0 %v800
    %v2277 = vpop.f32.mrb[0].mxu0
    %v2278 = vadd.f32 %v2085, %v2277
    %v2279 = vpop.f32.mrb[0].mxu0
    %v2280 = vadd.f32 %v2087, %v2279
    %v2281 = vpop.f32.mrb[0].mxu0
    %v2282 = vadd.f32 %v2089, %v2281
    %v2283 = vpop.f32.mrb[0].mxu0
    %v2284 = vadd.f32 %v2091, %v2283
    %2285 = vmatprep.mubr.bf16.mxu0 %v808
    %2286 = vmatmul.mubr.bf16.gmra.mrb[0].mxu0 %v807
    %v2287 = vpop.f32.mrb[0].mxu0
    %v2288 = vadd.f32 %v2095, %v2287
    %v2289 = vpop.f32.mrb[0].mxu0
    %v2290 = vadd.f32 %v2097, %v2289
    %v2291 = vpop.f32.mrb[0].mxu0
    %v2292 = vadd.f32 %v2099, %v2291
    %v2293 = vpop.f32.mrb[0].mxu0
    %v2294 = vadd.f32 %v2101, %v2293
    %2295 = vmatprep.mubr.bf16.mxu0 %v815
    %2296 = vmatmul.mubr.bf16.gmra.mrb[0].mxu0 %v814
    %v2297 = vpop.f32.mrb[0].mxu0
    %v2298 = vadd.f32 %v2105, %v2297
    %v2299 = vpop.f32.mrb[0].mxu0
    %v2300 = vadd.f32 %v2107, %v2299
    %v2301 = vpop.f32.mrb[0].mxu0
    %v2302 = vadd.f32 %v2109, %v2301
    %v2303 = vpop.f32.mrb[0].mxu0
    %v2304 = vadd.f32 %v2111, %v2303
    %2305 = vmatprep.mubr.bf16.mxu0 %v822
    %2306 = vmatmul.mubr.bf16.gmra.mrb[0].mxu0 %v821
    %v2307 = vpop.f32.mrb[0].mxu0
    %v2308 = vadd.f32 %v2115, %v2307
    %v2309 = vpop.f32.mrb[0].mxu0
    %v2310 = vadd.f32 %v2117, %v2309
    %v2311 = vpop.f32.mrb[0].mxu0
    %v2312 = vadd.f32 %v2119, %v2311
    %v2313 = vpop.f32.mrb[0].mxu0
    %v2314 = vadd.f32 %v2121, %v2313
    %2315 = vmatprep.mubr.bf16.mxu0 %v829
    %2316 = vmatmul.mubr.bf16.gmra.mrb[0].mxu0 %v828
    %v2317 = vpop.f32.mrb[0].mxu0
    %v2318 = vadd.f32 %v2125, %v2317
    %v2319 = vpop.f32.mrb[0].mxu0
    %v2320 = vadd.f32 %v2127, %v2319
    %v2321 = vpop.f32.mrb[0].mxu0
    %v2322 = vadd.f32 %v2129, %v2321
    %v2323 = vpop.f32.mrb[0].mxu0
    %v2324 = vadd.f32 %v2131, %v2323
    %2325 = vmatprep.mubr.bf16.mxu0 %v836
    %2326 = vmatmul.mubr.bf16.gmra.mrb[0].mxu0 %v835
    %v2327 = vpop.f32.mrb[0].mxu0
    %v2328 = vadd.f32 %v2135, %v2327
    %v2329 = vpop.f32.mrb[0].mxu0
    %v2330 = vadd.f32 %v2137, %v2329
    %v2331 = vpop.f32.mrb[0].mxu0
    %v2332 = vadd.f32 %v2139, %v2331
    %v2333 = vpop.f32.mrb[0].mxu0
    %v2334 = vadd.f32 %v2141, %v2333
    %2335 = vmatprep.mubr.bf16.mxu0 %v843
    %2336 = vmatmul.mubr.bf16.gmra.mrb[0].mxu0 %v842
    %v2337 = vpop.f32.mrb[0].mxu0
    %v2338 = vadd.f32 %v2145, %v2337
    %v2339 = vpop.f32.mrb[0].mxu0
    %v2340 = vadd.f32 %v2147, %v2339
    %v2341 = vpop.f32.mrb[0].mxu0
    %v2342 = vadd.f32 %v2149, %v2341
    %v2343 = vpop.f32.mrb[0].mxu0
    %v2344 = vadd.f32 %v2151, %v2343
    %2345 = vmatprep.mubr.bf16.mxu0 %v850
    %2346 = vmatmul.mubr.bf16.gmra.mrb[0].mxu0 %v849
    %v2347 = vpop.f32.mrb[0].mxu0
    %v2348 = vadd.f32 %v2155, %v2347
    %v2349 = vpop.f32.mrb[0].mxu0
    %v2350 = vadd.f32 %v2157, %v2349
    %v2351 = vpop.f32.mrb[0].mxu0
    %v2352 = vadd.f32 %v2159, %v2351
    %v2353 = vpop.f32.mrb[0].mxu0
    %v2354 = vadd.f32 %v2161, %v2353
    %2355 = vmatprep.mubr.bf16.mxu0 %v857
    %2356 = vmatmul.mubr.bf16.gmra.mrb[0].mxu0 %v856
    %v2357 = vpop.f32.mrb[0].mxu0
    %v2358 = vadd.f32 %v2165, %v2357
    %v2359 = vpop.f32.mrb[0].mxu0
    %v2360 = vadd.f32 %v2167, %v2359
    %v2361 = vpop.f32.mrb[0].mxu0
    %v2362 = vadd.f32 %v2169, %v2361
    %v2363 = vpop.f32.mrb[0].mxu0
    %v2364 = vadd.f32 %v2171, %v2363
    %2365 = vmatprep.mubr.bf16.mxu0 %v864
    %2366 = vmatmul.mubr.bf16.gmra.mrb[0].mxu0 %v863
    %v2367 = vpop.f32.mrb[0].mxu0
    %v2368 = vadd.f32 %v2175, %v2367
    %v2369 = vpop.f32.mrb[0].mxu0
    %v2370 = vadd.f32 %v2177, %v2369
    %v2371 = vpop.f32.mrb[0].mxu0
    %v2372 = vadd.f32 %v2179, %v2371
    %v2373 = vpop.f32.mrb[0].mxu0
    %v2374 = vadd.f32 %v2181, %v2373
    %2375 = vmatprep.mubr.bf16.mxu0 %v871
    %2376 = vmatmul.mubr.bf16.gmra.mrb[0].mxu0 %v870
    %v2377 = vpop.f32.mrb[0].mxu0
    %v2378 = vadd.f32 %v2185, %v2377
    %v2379 = vpop.f32.mrb[0].mxu0
    %v2380 = vadd.f32 %v2187, %v2379
    %v2381 = vpop.f32.mrb[0].mxu0
    %v2382 = vadd.f32 %v2189, %v2381
    %v2383 = vpop.f32.mrb[0].mxu0
    %v2384 = vadd.f32 %v2191, %v2383
    %2385 = vdwg.mxu0
    %2386 = vmatprep.subr.bf16.mxu0 %v1688
    %2387 = vmatpush1.bf16.msra.mxu0 %v1687
    %2388 = vmatprep.subr.bf16.mxu0 %v1692
    %2389 = vmatpush1.bf16.msra.mxu0 %v1691
    %2390 = vmatprep.subr.bf16.mxu0 %v1696
    %2391 = vmatpush1.bf16.msra.mxu0 %v1695
    %2392 = vmatprep.subr.bf16.mxu0 %v1700
    %2393 = vmatpush1.bf16.msra.mxu0 %v1699
    %2394 = vmatprep.subr.bf16.mxu0 %v1704
    %2395 = vmatpush1.bf16.msra.mxu0 %v1703
    %2396 = vmatprep.subr.bf16.mxu0 %v1708
    %2397 = vmatpush1.bf16.msra.mxu0 %v1707
    %2398 = vmatprep.subr.bf16.mxu0 %v1712
    %2399 = vmatpush1.bf16.msra.mxu0 %v1711
    %2400 = vmatprep.subr.bf16.mxu0 %v1716
    %2401 = vmatpush1.bf16.msra.mxu0 %v1715
    %2402 = vmatprep.subr.bf16.mxu0 %v1720
    %2403 = vmatpush1.bf16.msra.mxu0 %v1719
    %2404 = vmatprep.subr.bf16.mxu0 %v1724
    %2405 = vmatpush1.bf16.msra.mxu0 %v1723
    %2406 = vmatprep.subr.bf16.mxu0 %v1728
    %2407 = vmatpush1.bf16.msra.mxu0 %v1727
    %2408 = vmatprep.subr.bf16.mxu0 %v1732
    %2409 = vmatpush1.bf16.msra.mxu0 %v1731
    %2410 = vmatprep.subr.bf16.mxu0 %v1736
    %2411 = vmatpush1.bf16.msra.mxu0 %v1735
    %2412 = vmatprep.subr.bf16.mxu0 %v1740
    %2413 = vmatpush1.bf16.msra.mxu0 %v1739
    %2414 = vmatprep.subr.bf16.mxu0 %v1744
    %2415 = vmatpush1.bf16.msra.mxu0 %v1743
    %2416 = vmatprep.subr.bf16.mxu0 %v1748
    %2417 = vmatpush1.bf16.msra.mxu0 %v1747
    %2418 = vmatprep.mubr.bf16.mxu0 %v768
    %2419 = vmatmul.mubr.bf16.gmra.mrb[0].mxu0 %v767
    %v2420 = vpop.f32.mrb[0].mxu0
    %v2421 = vadd.f32 %v2228, %v2420
    %v2422 = vpop.f32.mrb[0].mxu0
    %v2423 = vadd.f32 %v2230, %v2422
    %v2424 = vpop.f32.mrb[0].mxu0
    %v2425 = vadd.f32 %v2232, %v2424
    %v2426 = vpop.f32.mrb[0].mxu0
    %v2427 = vadd.f32 %v2234, %v2426
    %2428 = vmatprep.mubr.bf16.mxu0 %v775
    %2429 = vmatmul.mubr.bf16.gmra.mrb[0].mxu0 %v774
    %v2430 = vpop.f32.mrb[0].mxu0
    %v2431 = vadd.f32 %v2238, %v2430
    %v2432 = vpop.f32.mrb[0].mxu0
    %v2433 = vadd.f32 %v2240, %v2432
    %v2434 = vpop.f32.mrb[0].mxu0
    %v2435 = vadd.f32 %v2242, %v2434
    %v2436 = vpop.f32.mrb[0].mxu0
    %v2437 = vadd.f32 %v2244, %v2436
    %2438 = vmatprep.mubr.bf16.mxu0 %v782
    %2439 = vmatmul.mubr.bf16.gmra.mrb[0].mxu0 %v781
    %v2440 = vpop.f32.mrb[0].mxu0
    %v2441 = vadd.f32 %v2248, %v2440
    %v2442 = vpop.f32.mrb[0].mxu0
    %v2443 = vadd.f32 %v2250, %v2442
    %v2444 = vpop.f32.mrb[0].mxu0
    %v2445 = vadd.f32 %v2252, %v2444
    %v2446 = vpop.f32.mrb[0].mxu0
    %v2447 = vadd.f32 %v2254, %v2446
    %2448 = vmatprep.mubr.bf16.mxu0 %v789
    %2449 = vmatmul.mubr.bf16.gmra.mrb[0].mxu0 %v788
    %v2450 = vpop.f32.mrb[0].mxu0
    %v2451 = vadd.f32 %v2258, %v2450
    %v2452 = vpop.f32.mrb[0].mxu0
    %v2453 = vadd.f32 %v2260, %v2452
    %v2454 = vpop.f32.mrb[0].mxu0
    %v2455 = vadd.f32 %v2262, %v2454
    %v2456 = vpop.f32.mrb[0].mxu0
    %v2457 = vadd.f32 %v2264, %v2456
    %2458 = vmatprep.mubr.bf16.mxu0 %v796
    %2459 = vmatmul.mubr.bf16.gmra.mrb[0].mxu0 %v795
    %v2460 = vpop.f32.mrb[0].mxu0
    %v2461 = vadd.f32 %v2268, %v2460
    %v2462 = vpop.f32.mrb[0].mxu0
    %v2463 = vadd.f32 %v2270, %v2462
    %v2464 = vpop.f32.mrb[0].mxu0
    %v2465 = vadd.f32 %v2272, %v2464
    %v2466 = vpop.f32.mrb[0].mxu0
    %v2467 = vadd.f32 %v2274, %v2466
    %2468 = vmatprep.mubr.bf16.mxu0 %v803
    %2469 = vmatmul.mubr.bf16.gmra.mrb[0].mxu0 %v802
    %v2470 = vpop.f32.mrb[0].mxu0
    %v2471 = vadd.f32 %v2278, %v2470
    %v2472 = vpop.f32.mrb[0].mxu0
    %v2473 = vadd.f32 %v2280, %v2472
    %v2474 = vpop.f32.mrb[0].mxu0
    %v2475 = vadd.f32 %v2282, %v2474
    %v2476 = vpop.f32.mrb[0].mxu0
    %v2477 = vadd.f32 %v2284, %v2476
    %2478 = vmatprep.mubr.bf16.mxu0 %v810
    %2479 = vmatmul.mubr.bf16.gmra.mrb[0].mxu0 %v809
    %v2480 = vpop.f32.mrb[0].mxu0
    %v2481 = vadd.f32 %v2288, %v2480
    %v2482 = vpop.f32.mrb[0].mxu0
    %v2483 = vadd.f32 %v2290, %v2482
    %v2484 = vpop.f32.mrb[0].mxu0
    %v2485 = vadd.f32 %v2292, %v2484
    %v2486 = vpop.f32.mrb[0].mxu0
    %v2487 = vadd.f32 %v2294, %v2486
    %2488 = vmatprep.mubr.bf16.mxu0 %v817
    %2489 = vmatmul.mubr.bf16.gmra.mrb[0].mxu0 %v816
    %v2490 = vpop.f32.mrb[0].mxu0
    %v2491 = vadd.f32 %v2298, %v2490
    %v2492 = vpop.f32.mrb[0].mxu0
    %v2493 = vadd.f32 %v2300, %v2492
    %v2494 = vpop.f32.mrb[0].mxu0
    %v2495 = vadd.f32 %v2302, %v2494
    %v2496 = vpop.f32.mrb[0].mxu0
    %v2497 = vadd.f32 %v2304, %v2496
    %2498 = vmatprep.mubr.bf16.mxu0 %v824
    %2499 = vmatmul.mubr.bf16.gmra.mrb[0].mxu0 %v823
    %v2500 = vpop.f32.mrb[0].mxu0
    %v2501 = vadd.f32 %v2308, %v2500
    %v2502 = vpop.f32.mrb[0].mxu0
    %v2503 = vadd.f32 %v2310, %v2502
    %v2504 = vpop.f32.mrb[0].mxu0
    %v2505 = vadd.f32 %v2312, %v2504
    %v2506 = vpop.f32.mrb[0].mxu0
    %v2507 = vadd.f32 %v2314, %v2506
    %2508 = vmatprep.mubr.bf16.mxu0 %v831
    %2509 = vmatmul.mubr.bf16.gmra.mrb[0].mxu0 %v830
    %v2510 = vpop.f32.mrb[0].mxu0
    %v2511 = vadd.f32 %v2318, %v2510
    %v2512 = vpop.f32.mrb[0].mxu0
    %v2513 = vadd.f32 %v2320, %v2512
    %v2514 = vpop.f32.mrb[0].mxu0
    %v2515 = vadd.f32 %v2322, %v2514
    %v2516 = vpop.f32.mrb[0].mxu0
    %v2517 = vadd.f32 %v2324, %v2516
    %2518 = vmatprep.mubr.bf16.mxu0 %v838
    %2519 = vmatmul.mubr.bf16.gmra.mrb[0].mxu0 %v837
    %v2520 = vpop.f32.mrb[0].mxu0
    %v2521 = vadd.f32 %v2328, %v2520
    %v2522 = vpop.f32.mrb[0].mxu0
    %v2523 = vadd.f32 %v2330, %v2522
    %v2524 = vpop.f32.mrb[0].mxu0
    %v2525 = vadd.f32 %v2332, %v2524
    %v2526 = vpop.f32.mrb[0].mxu0
    %v2527 = vadd.f32 %v2334, %v2526
    %2528 = vmatprep.mubr.bf16.mxu0 %v845
    %2529 = vmatmul.mubr.bf16.gmra.mrb[0].mxu0 %v844
    %v2530 = vpop.f32.mrb[0].mxu0
    %v2531 = vadd.f32 %v2338, %v2530
    %v2532 = vpop.f32.mrb[0].mxu0
    %v2533 = vadd.f32 %v2340, %v2532
    %v2534 = vpop.f32.mrb[0].mxu0
    %v2535 = vadd.f32 %v2342, %v2534
    %v2536 = vpop.f32.mrb[0].mxu0
    %v2537 = vadd.f32 %v2344, %v2536
    %2538 = vmatprep.mubr.bf16.mxu0 %v852
    %2539 = vmatmul.mubr.bf16.gmra.mrb[0].mxu0 %v851
    %v2540 = vpop.f32.mrb[0].mxu0
    %v2541 = vadd.f32 %v2348, %v2540
    %v2542 = vpop.f32.mrb[0].mxu0
    %v2543 = vadd.f32 %v2350, %v2542
    %v2544 = vpop.f32.mrb[0].mxu0
    %v2545 = vadd.f32 %v2352, %v2544
    %v2546 = vpop.f32.mrb[0].mxu0
    %v2547 = vadd.f32 %v2354, %v2546
    %2548 = vmatprep.mubr.bf16.mxu0 %v859
    %2549 = vmatmul.mubr.bf16.gmra.mrb[0].mxu0 %v858
    %v2550 = vpop.f32.mrb[0].mxu0
    %v2551 = vadd.f32 %v2358, %v2550
    %v2552 = vpop.f32.mrb[0].mxu0
    %v2553 = vadd.f32 %v2360, %v2552
    %v2554 = vpop.f32.mrb[0].mxu0
    %v2555 = vadd.f32 %v2362, %v2554
    %v2556 = vpop.f32.mrb[0].mxu0
    %v2557 = vadd.f32 %v2364, %v2556
    %2558 = vmatprep.mubr.bf16.mxu0 %v866
    %2559 = vmatmul.mubr.bf16.gmra.mrb[0].mxu0 %v865
    %v2560 = vpop.f32.mrb[0].mxu0
    %v2561 = vadd.f32 %v2368, %v2560
    %v2562 = vpop.f32.mrb[0].mxu0
    %v2563 = vadd.f32 %v2370, %v2562
    %v2564 = vpop.f32.mrb[0].mxu0
    %v2565 = vadd.f32 %v2372, %v2564
    %v2566 = vpop.f32.mrb[0].mxu0
    %v2567 = vadd.f32 %v2374, %v2566
    %2568 = vmatprep.mubr.bf16.mxu0 %v873
    %2569 = vmatmul.mubr.bf16.gmra.mrb[0].mxu0 %v872
    %v2570 = vpop.f32.mrb[0].mxu0
    %v2571 = vadd.f32 %v2378, %v2570
    %v2572 = vpop.f32.mrb[0].mxu0
    %v2573 = vadd.f32 %v2380, %v2572
    %v2574 = vpop.f32.mrb[0].mxu0
    %v2575 = vadd.f32 %v2382, %v2574
    %v2576 = vpop.f32.mrb[0].mxu0
    %v2577 = vadd.f32 %v2384, %v2576
    %2578 = vdwg.mxu0
    %2579 = vmatprep.subr.bf16.mxu0 %v1752
    %2580 = vmatpush1.bf16.msra.mxu0 %v1751
    %2581 = vmatprep.subr.bf16.mxu0 0
    %2582 = vmatpush1.bf16.msra.mxu0 0
    %2583 = vmatprep.subr.bf16.mxu0 0
    %2584 = vmatpush1.bf16.msra.mxu0 0
    %2585 = vmatprep.subr.bf16.mxu0 0
    %2586 = vmatpush1.bf16.msra.mxu0 0
    %2587 = vmatprep.subr.bf16.mxu0 0
    %2588 = vmatpush1.bf16.msra.mxu0 0
    %2589 = vmatprep.subr.bf16.mxu0 0
    %2590 = vmatpush1.bf16.msra.mxu0 0
    %2591 = vmatprep.subr.bf16.mxu0 0
    %2592 = vmatpush1.bf16.msra.mxu0 0
    %2593 = vmatprep.subr.bf16.mxu0 0
    %2594 = vmatpush1.bf16.msra.mxu0 0
    %2595 = vmatprep.subr.bf16.mxu0 0
    %2596 = vmatpush1.bf16.msra.mxu0 0
    %2597 = vmatprep.subr.bf16.mxu0 0
    %2598 = vmatpush1.bf16.msra.mxu0 0
    %2599 = vmatprep.subr.bf16.mxu0 0
    %2600 = vmatpush1.bf16.msra.mxu0 0
    %2601 = vmatprep.subr.bf16.mxu0 0
    %2602 = vmatpush1.bf16.msra.mxu0 0
    %2603 = vmatprep.subr.bf16.mxu0 0
    %2604 = vmatpush1.bf16.msra.mxu0 0
    %2605 = vmatprep.subr.bf16.mxu0 0
    %2606 = vmatpush1.bf16.msra.mxu0 0
    %2607 = vmatprep.subr.bf16.mxu0 0
    %2608 = vmatpush1.bf16.msra.mxu0 0
    %2609 = vmatprep.subr.bf16.mxu0 0
    %2610 = vmatpush1.bf16.msra.mxu0 0
    %2611 = vmatprep.mubr.bf16.mxu0 0
    %2612 = vmatmul.mubr.bf16.gmra.mrb[0].mxu0 %v1953
    %v2613 = vpop.f32.mrb[0].mxu0
    %v2614 = vadd.f32 %v2421, %v2613
    %v2615 = vpop.f32.mrb[0].mxu0
    %v2616 = vadd.f32 %v2423, %v2615
    %v2617 = vpop.f32.mrb[0].mxu0
    %v2618 = vadd.f32 %v2425, %v2617
    %v2619 = vpop.f32.mrb[0].mxu0
    %v2620 = vadd.f32 %v2427, %v2619
    %2621 = vmatprep.mubr.bf16.mxu0 0
    %2622 = vmatmul.mubr.bf16.gmra.mrb[0].mxu0 %v1956
    %v2623 = vpop.f32.mrb[0].mxu0
    %v2624 = vadd.f32 %v2431, %v2623
    %v2625 = vpop.f32.mrb[0].mxu0
    %v2626 = vadd.f32 %v2433, %v2625
    %v2627 = vpop.f32.mrb[0].mxu0
    %v2628 = vadd.f32 %v2435, %v2627
    %v2629 = vpop.f32.mrb[0].mxu0
    %v2630 = vadd.f32 %v2437, %v2629
    %2631 = vmatprep.mubr.bf16.mxu0 0
    %2632 = vmatmul.mubr.bf16.gmra.mrb[0].mxu0 %v1959
    %v2633 = vpop.f32.mrb[0].mxu0
    %v2634 = vadd.f32 %v2441, %v2633
    %v2635 = vpop.f32.mrb[0].mxu0
    %v2636 = vadd.f32 %v2443, %v2635
    %v2637 = vpop.f32.mrb[0].mxu0
    %v2638 = vadd.f32 %v2445, %v2637
    %v2639 = vpop.f32.mrb[0].mxu0
    %v2640 = vadd.f32 %v2447, %v2639
    %2641 = vmatprep.mubr.bf16.mxu0 0
    %2642 = vmatmul.mubr.bf16.gmra.mrb[0].mxu0 %v1962
    %v2643 = vpop.f32.mrb[0].mxu0
    %v2644 = vadd.f32 %v2451, %v2643
    %v2645 = vpop.f32.mrb[0].mxu0
    %v2646 = vadd.f32 %v2453, %v2645
    %v2647 = vpop.f32.mrb[0].mxu0
    %v2648 = vadd.f32 %v2455, %v2647
    %v2649 = vpop.f32.mrb[0].mxu0
    %v2650 = vadd.f32 %v2457, %v2649
    %2651 = vmatprep.mubr.bf16.mxu0 0
    %2652 = vmatmul.mubr.bf16.gmra.mrb[0].mxu0 %v1965
    %v2653 = vpop.f32.mrb[0].mxu0
    %v2654 = vadd.f32 %v2461, %v2653
    %v2655 = vpop.f32.mrb[0].mxu0
    %v2656 = vadd.f32 %v2463, %v2655
    %v2657 = vpop.f32.mrb[0].mxu0
    %v2658 = vadd.f32 %v2465, %v2657
    %v2659 = vpop.f32.mrb[0].mxu0
    %v2660 = vadd.f32 %v2467, %v2659
    %2661 = vmatprep.mubr.bf16.mxu0 0
    %2662 = vmatmul.mubr.bf16.gmra.mrb[0].mxu0 %v1968
    %v2663 = vpop.f32.mrb[0].mxu0
    %v2664 = vadd.f32 %v2471, %v2663
    %v2665 = vpop.f32.mrb[0].mxu0
    %v2666 = vadd.f32 %v2473, %v2665
    %v2667 = vpop.f32.mrb[0].mxu0
    %v2668 = vadd.f32 %v2475, %v2667
    %v2669 = vpop.f32.mrb[0].mxu0
    %v2670 = vadd.f32 %v2477, %v2669
    %2671 = vmatprep.mubr.bf16.mxu0 0
    %2672 = vmatmul.mubr.bf16.gmra.mrb[0].mxu0 %v1971
    %v2673 = vpop.f32.mrb[0].mxu0
    %v2674 = vadd.f32 %v2481, %v2673
    %v2675 = vpop.f32.mrb[0].mxu0
    %v2676 = vadd.f32 %v2483, %v2675
    %v2677 = vpop.f32.mrb[0].mxu0
    %v2678 = vadd.f32 %v2485, %v2677
    %v2679 = vpop.f32.mrb[0].mxu0
    %v2680 = vadd.f32 %v2487, %v2679
    %2681 = vmatprep.mubr.bf16.mxu0 0
    %2682 = vmatmul.mubr.bf16.gmra.mrb[0].mxu0 %v1974
    %v2683 = vpop.f32.mrb[0].mxu0
    %v2684 = vadd.f32 %v2491, %v2683
    %v2685 = vpop.f32.mrb[0].mxu0
    %v2686 = vadd.f32 %v2493, %v2685
    %v2687 = vpop.f32.mrb[0].mxu0
    %v2688 = vadd.f32 %v2495, %v2687
    %v2689 = vpop.f32.mrb[0].mxu0
    %v2690 = vadd.f32 %v2497, %v2689
    %2691 = vmatprep.mubr.bf16.mxu0 0
    %2692 = vmatmul.mubr.bf16.gmra.mrb[0].mxu0 %v1977
    %v2693 = vpop.f32.mrb[0].mxu0
    %v2694 = vadd.f32 %v2501, %v2693
    %v2695 = vpop.f32.mrb[0].mxu0
    %v2696 = vadd.f32 %v2503, %v2695
    %v2697 = vpop.f32.mrb[0].mxu0
    %v2698 = vadd.f32 %v2505, %v2697
    %v2699 = vpop.f32.mrb[0].mxu0
    %v2700 = vadd.f32 %v2507, %v2699
    %2701 = vmatprep.mubr.bf16.mxu0 0
    %2702 = vmatmul.mubr.bf16.gmra.mrb[0].mxu0 %v1980
    %v2703 = vpop.f32.mrb[0].mxu0
    %v2704 = vadd.f32 %v2511, %v2703
    %v2705 = vpop.f32.mrb[0].mxu0
    %v2706 = vadd.f32 %v2513, %v2705
    %v2707 = vpop.f32.mrb[0].mxu0
    %v2708 = vadd.f32 %v2515, %v2707
    %v2709 = vpop.f32.mrb[0].mxu0
    %v2710 = vadd.f32 %v2517, %v2709
    %2711 = vmatprep.mubr.bf16.mxu0 0
    %2712 = vmatmul.mubr.bf16.gmra.mrb[0].mxu0 %v1983
    %v2713 = vpop.f32.mrb[0].mxu0
    %v2714 = vadd.f32 %v2521, %v2713
    %v2715 = vpop.f32.mrb[0].mxu0
    %v2716 = vadd.f32 %v2523, %v2715
    %v2717 = vpop.f32.mrb[0].mxu0
    %v2718 = vadd.f32 %v2525, %v2717
    %v2719 = vpop.f32.mrb[0].mxu0
    %v2720 = vadd.f32 %v2527, %v2719
    %2721 = vmatprep.mubr.bf16.mxu0 0
    %2722 = vmatmul.mubr.bf16.gmra.mrb[0].mxu0 %v1986
    %v2723 = vpop.f32.mrb[0].mxu0
    %v2724 = vadd.f32 %v2531, %v2723
    %v2725 = vpop.f32.mrb[0].mxu0
    %v2726 = vadd.f32 %v2533, %v2725
    %v2727 = vpop.f32.mrb[0].mxu0
    %v2728 = vadd.f32 %v2535, %v2727
    %v2729 = vpop.f32.mrb[0].mxu0
    %v2730 = vadd.f32 %v2537, %v2729
    %2731 = vmatprep.mubr.bf16.mxu0 0
    %2732 = vmatmul.mubr.bf16.gmra.mrb[0].mxu0 %v1989
    %v2733 = vpop.f32.mrb[0].mxu0
    %v2734 = vadd.f32 %v2541, %v2733
    %v2735 = vpop.f32.mrb[0].mxu0
    %v2736 = vadd.f32 %v2543, %v2735
    %v2737 = vpop.f32.mrb[0].mxu0
    %v2738 = vadd.f32 %v2545, %v2737
    %v2739 = vpop.f32.mrb[0].mxu0
    %v2740 = vadd.f32 %v2547, %v2739
    %2741 = vmatprep.mubr.bf16.mxu0 0
    %2742 = vmatmul.mubr.bf16.gmra.mrb[0].mxu0 %v1992
    %v2743 = vpop.f32.mrb[0].mxu0
    %v2744 = vadd.f32 %v2551, %v2743
    %v2745 = vpop.f32.mrb[0].mxu0
    %v2746 = vadd.f32 %v2553, %v2745
    %v2747 = vpop.f32.mrb[0].mxu0
    %v2748 = vadd.f32 %v2555, %v2747
    %v2749 = vpop.f32.mrb[0].mxu0
    %v2750 = vadd.f32 %v2557, %v2749
    %2751 = vmatprep.mubr.bf16.mxu0 0
    %2752 = vmatmul.mubr.bf16.gmra.mrb[0].mxu0 %v1995
    %v2753 = vpop.f32.mrb[0].mxu0
    %v2754 = vadd.f32 %v2561, %v2753
    %v2755 = vpop.f32.mrb[0].mxu0
    %v2756 = vadd.f32 %v2563, %v2755
    %v2757 = vpop.f32.mrb[0].mxu0
    %v2758 = vadd.f32 %v2565, %v2757
    %v2759 = vpop.f32.mrb[0].mxu0
    %v2760 = vadd.f32 %v2567, %v2759
    %2761 = vmatprep.mubr.bf16.mxu0 0
    %2762 = vmatmul.mubr.bf16.gmra.mrb[0].mxu0 %v1998
    %v2763 = vpop.f32.mrb[0].mxu0
    %v2764 = vadd.f32 %v2571, %v2763
    %v2765 = vpop.f32.mrb[0].mxu0
    %v2766 = vadd.f32 %v2573, %v2765
    %v2767 = vpop.f32.mrb[0].mxu0
    %v2768 = vadd.f32 %v2575, %v2767
    %v2769 = vpop.f32.mrb[0].mxu0
    %v2770 = vadd.f32 %v2577, %v2769
    %2771 = vdwg.mxu0
    %2772 = vmatprep.subr.bf16.mxu0 %v1562
    %2773 = vmatpush1.bf16.msra.mxu0 %v1561
    %2774 = vmatprep.subr.bf16.mxu0 %v1566
    %2775 = vmatpush1.bf16.msra.mxu0 %v1565
    %2776 = vmatprep.subr.bf16.mxu0 %v1570
    %2777 = vmatpush1.bf16.msra.mxu0 %v1569
    %2778 = vmatprep.subr.bf16.mxu0 %v1574
    %2779 = vmatpush1.bf16.msra.mxu0 %v1573
    %2780 = vmatprep.subr.bf16.mxu0 %v1578
    %2781 = vmatpush1.bf16.msra.mxu0 %v1577
    %2782 = vmatprep.subr.bf16.mxu0 %v1582
    %2783 = vmatpush1.bf16.msra.mxu0 %v1581
    %2784 = vmatprep.subr.bf16.mxu0 %v1586
    %2785 = vmatpush1.bf16.msra.mxu0 %v1585
    %2786 = vmatprep.subr.bf16.mxu0 %v1590
    %2787 = vmatpush1.bf16.msra.mxu0 %v1589
    %2788 = vmatprep.subr.bf16.mxu0 %v1594
    %2789 = vmatpush1.bf16.msra.mxu0 %v1593
    %2790 = vmatprep.subr.bf16.mxu0 %v1598
    %2791 = vmatpush1.bf16.msra.mxu0 %v1597
    %2792 = vmatprep.subr.bf16.mxu0 %v1602
    %2793 = vmatpush1.bf16.msra.mxu0 %v1601
    %2794 = vmatprep.subr.bf16.mxu0 %v1606
    %2795 = vmatpush1.bf16.msra.mxu0 %v1605
    %2796 = vmatprep.subr.bf16.mxu0 %v1610
    %2797 = vmatpush1.bf16.msra.mxu0 %v1609
    %2798 = vmatprep.subr.bf16.mxu0 %v1614
    %2799 = vmatpush1.bf16.msra.mxu0 %v1613
    %2800 = vmatprep.subr.bf16.mxu0 %v1618
    %2801 = vmatpush1.bf16.msra.mxu0 %v1617
    %2802 = vmatprep.subr.bf16.mxu0 %v1622
    %2803 = vmatpush1.bf16.msra.mxu0 %v1621
    %2804 = vmatprep.mubr.bf16.mxu0 %v764
    %2805 = vmatmul.mubr.bf16.gmra.mrb[0].mxu0 %v763
    %v2806 = vpop.f32.mrb[0].mxu0
    %v2807 = vadd.f32 %v402, %v2806
    %v2808 = vpop.f32.mrb[0].mxu0
    %v2809 = vadd.f32 %v406, %v2808
    %v2810 = vpop.f32.mrb[0].mxu0
    %v2811 = vadd.f32 %v402, %v2810
    %v2812 = vpop.f32.mrb[0].mxu0
    %v2813 = vadd.f32 %v406, %v2812
    %2814 = vmatprep.mubr.bf16.mxu0 %v771
    %2815 = vmatmul.mubr.bf16.gmra.mrb[0].mxu0 %v770
    %v2816 = vpop.f32.mrb[0].mxu0
    %v2817 = vadd.f32 %v402, %v2816
    %v2818 = vpop.f32.mrb[0].mxu0
    %v2819 = vadd.f32 %v406, %v2818
    %v2820 = vpop.f32.mrb[0].mxu0
    %v2821 = vadd.f32 %v402, %v2820
    %v2822 = vpop.f32.mrb[0].mxu0
    %v2823 = vadd.f32 %v406, %v2822
    %2824 = vmatprep.mubr.bf16.mxu0 %v778
    %2825 = vmatmul.mubr.bf16.gmra.mrb[0].mxu0 %v777
    %v2826 = vpop.f32.mrb[0].mxu0
    %v2827 = vadd.f32 %v402, %v2826
    %v2828 = vpop.f32.mrb[0].mxu0
    %v2829 = vadd.f32 %v406, %v2828
    %v2830 = vpop.f32.mrb[0].mxu0
    %v2831 = vadd.f32 %v402, %v2830
    %v2832 = vpop.f32.mrb[0].mxu0
    %v2833 = vadd.f32 %v406, %v2832
    %2834 = vmatprep.mubr.bf16.mxu0 %v785
    %2835 = vmatmul.mubr.bf16.gmra.mrb[0].mxu0 %v784
    %v2836 = vpop.f32.mrb[0].mxu0
    %v2837 = vadd.f32 %v402, %v2836
    %v2838 = vpop.f32.mrb[0].mxu0
    %v2839 = vadd.f32 %v406, %v2838
    %v2840 = vpop.f32.mrb[0].mxu0
    %v2841 = vadd.f32 %v402, %v2840
    %v2842 = vpop.f32.mrb[0].mxu0
    %v2843 = vadd.f32 %v406, %v2842
    %2844 = vmatprep.mubr.bf16.mxu0 %v792
    %2845 = vmatmul.mubr.bf16.gmra.mrb[0].mxu0 %v791
    %v2846 = vpop.f32.mrb[0].mxu0
    %v2847 = vadd.f32 %v402, %v2846
    %v2848 = vpop.f32.mrb[0].mxu0
    %v2849 = vadd.f32 %v406, %v2848
    %v2850 = vpop.f32.mrb[0].mxu0
    %v2851 = vadd.f32 %v402, %v2850
    %v2852 = vpop.f32.mrb[0].mxu0
    %v2853 = vadd.f32 %v406, %v2852
    %2854 = vmatprep.mubr.bf16.mxu0 %v799
    %2855 = vmatmul.mubr.bf16.gmra.mrb[0].mxu0 %v798
    %v2856 = vpop.f32.mrb[0].mxu0
    %v2857 = vadd.f32 %v402, %v2856
    %v2858 = vpop.f32.mrb[0].mxu0
    %v2859 = vadd.f32 %v406, %v2858
    %v2860 = vpop.f32.mrb[0].mxu0
    %v2861 = vadd.f32 %v402, %v2860
    %v2862 = vpop.f32.mrb[0].mxu0
    %v2863 = vadd.f32 %v406, %v2862
    %2864 = vmatprep.mubr.bf16.mxu0 %v806
    %2865 = vmatmul.mubr.bf16.gmra.mrb[0].mxu0 %v805
    %v2866 = vpop.f32.mrb[0].mxu0
    %v2867 = vadd.f32 %v402, %v2866
    %v2868 = vpop.f32.mrb[0].mxu0
    %v2869 = vadd.f32 %v406, %v2868
    %v2870 = vpop.f32.mrb[0].mxu0
    %v2871 = vadd.f32 %v402, %v2870
    %v2872 = vpop.f32.mrb[0].mxu0
    %v2873 = vadd.f32 %v406, %v2872
    %2874 = vmatprep.mubr.bf16.mxu0 %v813
    %2875 = vmatmul.mubr.bf16.gmra.mrb[0].mxu0 %v812
    %v2876 = vpop.f32.mrb[0].mxu0
    %v2877 = vadd.f32 %v402, %v2876
    %v2878 = vpop.f32.mrb[0].mxu0
    %v2879 = vadd.f32 %v406, %v2878
    %v2880 = vpop.f32.mrb[0].mxu0
    %v2881 = vadd.f32 %v402, %v2880
    %v2882 = vpop.f32.mrb[0].mxu0
    %v2883 = vadd.f32 %v406, %v2882
    %2884 = vmatprep.mubr.bf16.mxu0 %v820
    %2885 = vmatmul.mubr.bf16.gmra.mrb[0].mxu0 %v819
    %v2886 = vpop.f32.mrb[0].mxu0
    %v2887 = vadd.f32 %v402, %v2886
    %v2888 = vpop.f32.mrb[0].mxu0
    %v2889 = vadd.f32 %v406, %v2888
    %v2890 = vpop.f32.mrb[0].mxu0
    %v2891 = vadd.f32 %v402, %v2890
    %v2892 = vpop.f32.mrb[0].mxu0
    %v2893 = vadd.f32 %v406, %v2892
    %2894 = vmatprep.mubr.bf16.mxu0 %v827
    %2895 = vmatmul.mubr.bf16.gmra.mrb[0].mxu0 %v826
    %v2896 = vpop.f32.mrb[0].mxu0
    %v2897 = vadd.f32 %v402, %v2896
    %v2898 = vpop.f32.mrb[0].mxu0
    %v2899 = vadd.f32 %v406, %v2898
    %v2900 = vpop.f32.mrb[0].mxu0
    %v2901 = vadd.f32 %v402, %v2900
    %v2902 = vpop.f32.mrb[0].mxu0
    %v2903 = vadd.f32 %v406, %v2902
    %2904 = vmatprep.mubr.bf16.mxu0 %v834
    %2905 = vmatmul.mubr.bf16.gmra.mrb[0].mxu0 %v833
    %v2906 = vpop.f32.mrb[0].mxu0
    %v2907 = vadd.f32 %v402, %v2906
    %v2908 = vpop.f32.mrb[0].mxu0
    %v2909 = vadd.f32 %v406, %v2908
    %v2910 = vpop.f32.mrb[0].mxu0
    %v2911 = vadd.f32 %v402, %v2910
    %v2912 = vpop.f32.mrb[0].mxu0
    %v2913 = vadd.f32 %v406, %v2912
    %2914 = vmatprep.mubr.bf16.mxu0 %v841
    %2915 = vmatmul.mubr.bf16.gmra.mrb[0].mxu0 %v840
    %v2916 = vpop.f32.mrb[0].mxu0
    %v2917 = vadd.f32 %v402, %v2916
    %v2918 = vpop.f32.mrb[0].mxu0
    %v2919 = vadd.f32 %v406, %v2918
    %v2920 = vpop.f32.mrb[0].mxu0
    %v2921 = vadd.f32 %v402, %v2920
    %v2922 = vpop.f32.mrb[0].mxu0
    %v2923 = vadd.f32 %v406, %v2922
    %2924 = vmatprep.mubr.bf16.mxu0 %v848
    %2925 = vmatmul.mubr.bf16.gmra.mrb[0].mxu0 %v847
    %v2926 = vpop.f32.mrb[0].mxu0
    %v2927 = vadd.f32 %v402, %v2926
    %v2928 = vpop.f32.mrb[0].mxu0
    %v2929 = vadd.f32 %v406, %v2928
    %v2930 = vpop.f32.mrb[0].mxu0
    %v2931 = vadd.f32 %v402, %v2930
    %v2932 = vpop.f32.mrb[0].mxu0
    %v2933 = vadd.f32 %v406, %v2932
    %2934 = vmatprep.mubr.bf16.mxu0 %v855
    %2935 = vmatmul.mubr.bf16.gmra.mrb[0].mxu0 %v854
    %v2936 = vpop.f32.mrb[0].mxu0
    %v2937 = vadd.f32 %v402, %v2936
    %v2938 = vpop.f32.mrb[0].mxu0
    %v2939 = vadd.f32 %v406, %v2938
    %v2940 = vpop.f32.mrb[0].mxu0
    %v2941 = vadd.f32 %v402, %v2940
    %v2942 = vpop.f32.mrb[0].mxu0
    %v2943 = vadd.f32 %v406, %v2942
    %2944 = vmatprep.mubr.bf16.mxu0 %v862
    %2945 = vmatmul.mubr.bf16.gmra.mrb[0].mxu0 %v861
    %v2946 = vpop.f32.mrb[0].mxu0
    %v2947 = vadd.f32 %v402, %v2946
    %v2948 = vpop.f32.mrb[0].mxu0
    %v2949 = vadd.f32 %v406, %v2948
    %v2950 = vpop.f32.mrb[0].mxu0
    %v2951 = vadd.f32 %v402, %v2950
    %v2952 = vpop.f32.mrb[0].mxu0
    %v2953 = vadd.f32 %v406, %v2952
    %2954 = vmatprep.mubr.bf16.mxu0 %v869
    %2955 = vmatmul.mubr.bf16.gmra.mrb[0].mxu0 %v868
    %v2956 = vpop.f32.mrb[0].mxu0
    %v2957 = vadd.f32 %v402, %v2956
    %v2958 = vpop.f32.mrb[0].mxu0
    %v2959 = vadd.f32 %v406, %v2958
    %v2960 = vpop.f32.mrb[0].mxu0
    %v2961 = vadd.f32 %v402, %v2960
    %v2962 = vpop.f32.mrb[0].mxu0
    %v2963 = vadd.f32 %v406, %v2962
    %2964 = vdwg.mxu0
    %2965 = vmatprep.subr.bf16.mxu0 %v1626
    %2966 = vmatpush1.bf16.msra.mxu0 %v1625
    %2967 = vmatprep.subr.bf16.mxu0 %v1630
    %2968 = vmatpush1.bf16.msra.mxu0 %v1629
    %2969 = vmatprep.subr.bf16.mxu0 %v1634
    %2970 = vmatpush1.bf16.msra.mxu0 %v1633
    %2971 = vmatprep.subr.bf16.mxu0 %v1638
    %2972 = vmatpush1.bf16.msra.mxu0 %v1637
    %2973 = vmatprep.subr.bf16.mxu0 %v1642
    %2974 = vmatpush1.bf16.msra.mxu0 %v1641
    %2975 = vmatprep.subr.bf16.mxu0 %v1646
    %2976 = vmatpush1.bf16.msra.mxu0 %v1645
    %2977 = vmatprep.subr.bf16.mxu0 %v1650
    %2978 = vmatpush1.bf16.msra.mxu0 %v1649
    %2979 = vmatprep.subr.bf16.mxu0 %v1654
    %2980 = vmatpush1.bf16.msra.mxu0 %v1653
    %2981 = vmatprep.subr.bf16.mxu0 %v1658
    %2982 = vmatpush1.bf16.msra.mxu0 %v1657
    %2983 = vmatprep.subr.bf16.mxu0 %v1662
    %2984 = vmatpush1.bf16.msra.mxu0 %v1661
    %2985 = vmatprep.subr.bf16.mxu0 %v1666
    %2986 = vmatpush1.bf16.msra.mxu0 %v1665
    %2987 = vmatprep.subr.bf16.mxu0 %v1670
    %2988 = vmatpush1.bf16.msra.mxu0 %v1669
    %2989 = vmatprep.subr.bf16.mxu0 %v1674
    %2990 = vmatpush1.bf16.msra.mxu0 %v1673
    %2991 = vmatprep.subr.bf16.mxu0 %v1678
    %2992 = vmatpush1.bf16.msra.mxu0 %v1677
    %2993 = vmatprep.subr.bf16.mxu0 %v1682
    %2994 = vmatpush1.bf16.msra.mxu0 %v1681
    %2995 = vmatprep.subr.bf16.mxu0 %v1686
    %2996 = vmatpush1.bf16.msra.mxu0 %v1685
    %2997 = vmatprep.mubr.bf16.mxu0 %v766
    %2998 = vmatmul.mubr.bf16.gmra.mrb[0].mxu0 %v765
    %v2999 = vpop.f32.mrb[0].mxu0
    %v3000 = vadd.f32 %v2807, %v2999
    %v3001 = vpop.f32.mrb[0].mxu0
    %v3002 = vadd.f32 %v2809, %v3001
    %v3003 = vpop.f32.mrb[0].mxu0
    %v3004 = vadd.f32 %v2811, %v3003
    %v3005 = vpop.f32.mrb[0].mxu0
    %v3006 = vadd.f32 %v2813, %v3005
    %3007 = vmatprep.mubr.bf16.mxu0 %v773
    %3008 = vmatmul.mubr.bf16.gmra.mrb[0].mxu0 %v772
    %v3009 = vpop.f32.mrb[0].mxu0
    %v3010 = vadd.f32 %v2817, %v3009
    %v3011 = vpop.f32.mrb[0].mxu0
    %v3012 = vadd.f32 %v2819, %v3011
    %v3013 = vpop.f32.mrb[0].mxu0
    %v3014 = vadd.f32 %v2821, %v3013
    %v3015 = vpop.f32.mrb[0].mxu0
    %v3016 = vadd.f32 %v2823, %v3015
    %3017 = vmatprep.mubr.bf16.mxu0 %v780
    %3018 = vmatmul.mubr.bf16.gmra.mrb[0].mxu0 %v779
    %v3019 = vpop.f32.mrb[0].mxu0
    %v3020 = vadd.f32 %v2827, %v3019
    %v3021 = vpop.f32.mrb[0].mxu0
    %v3022 = vadd.f32 %v2829, %v3021
    %v3023 = vpop.f32.mrb[0].mxu0
    %v3024 = vadd.f32 %v2831, %v3023
    %v3025 = vpop.f32.mrb[0].mxu0
    %v3026 = vadd.f32 %v2833, %v3025
    %3027 = vmatprep.mubr.bf16.mxu0 %v787
    %3028 = vmatmul.mubr.bf16.gmra.mrb[0].mxu0 %v786
    %v3029 = vpop.f32.mrb[0].mxu0
    %v3030 = vadd.f32 %v2837, %v3029
    %v3031 = vpop.f32.mrb[0].mxu0
    %v3032 = vadd.f32 %v2839, %v3031
    %v3033 = vpop.f32.mrb[0].mxu0
    %v3034 = vadd.f32 %v2841, %v3033
    %v3035 = vpop.f32.mrb[0].mxu0
    %v3036 = vadd.f32 %v2843, %v3035
    %3037 = vmatprep.mubr.bf16.mxu0 %v794
    %3038 = vmatmul.mubr.bf16.gmra.mrb[0].mxu0 %v793
    %v3039 = vpop.f32.mrb[0].mxu0
    %v3040 = vadd.f32 %v2847, %v3039
    %v3041 = vpop.f32.mrb[0].mxu0
    %v3042 = vadd.f32 %v2849, %v3041
    %v3043 = vpop.f32.mrb[0].mxu0
    %v3044 = vadd.f32 %v2851, %v3043
    %v3045 = vpop.f32.mrb[0].mxu0
    %v3046 = vadd.f32 %v2853, %v3045
    %3047 = vmatprep.mubr.bf16.mxu0 %v801
    %3048 = vmatmul.mubr.bf16.gmra.mrb[0].mxu0 %v800
    %v3049 = vpop.f32.mrb[0].mxu0
    %v3050 = vadd.f32 %v2857, %v3049
    %v3051 = vpop.f32.mrb[0].mxu0
    %v3052 = vadd.f32 %v2859, %v3051
    %v3053 = vpop.f32.mrb[0].mxu0
    %v3054 = vadd.f32 %v2861, %v3053
    %v3055 = vpop.f32.mrb[0].mxu0
    %v3056 = vadd.f32 %v2863, %v3055
    %3057 = vmatprep.mubr.bf16.mxu0 %v808
    %3058 = vmatmul.mubr.bf16.gmra.mrb[0].mxu0 %v807
    %v3059 = vpop.f32.mrb[0].mxu0
    %v3060 = vadd.f32 %v2867, %v3059
    %v3061 = vpop.f32.mrb[0].mxu0
    %v3062 = vadd.f32 %v2869, %v3061
    %v3063 = vpop.f32.mrb[0].mxu0
    %v3064 = vadd.f32 %v2871, %v3063
    %v3065 = vpop.f32.mrb[0].mxu0
    %v3066 = vadd.f32 %v2873, %v3065
    %3067 = vmatprep.mubr.bf16.mxu0 %v815
    %3068 = vmatmul.mubr.bf16.gmra.mrb[0].mxu0 %v814
    %v3069 = vpop.f32.mrb[0].mxu0
    %v3070 = vadd.f32 %v2877, %v3069
    %v3071 = vpop.f32.mrb[0].mxu0
    %v3072 = vadd.f32 %v2879, %v3071
    %v3073 = vpop.f32.mrb[0].mxu0
    %v3074 = vadd.f32 %v2881, %v3073
    %v3075 = vpop.f32.mrb[0].mxu0
    %v3076 = vadd.f32 %v2883, %v3075
    %3077 = vmatprep.mubr.bf16.mxu0 %v822
    %3078 = vmatmul.mubr.bf16.gmra.mrb[0].mxu0 %v821
    %v3079 = vpop.f32.mrb[0].mxu0
    %v3080 = vadd.f32 %v2887, %v3079
    %v3081 = vpop.f32.mrb[0].mxu0
    %v3082 = vadd.f32 %v2889, %v3081
    %v3083 = vpop.f32.mrb[0].mxu0
    %v3084 = vadd.f32 %v2891, %v3083
    %v3085 = vpop.f32.mrb[0].mxu0
    %v3086 = vadd.f32 %v2893, %v3085
    %3087 = vmatprep.mubr.bf16.mxu0 %v829
    %3088 = vmatmul.mubr.bf16.gmra.mrb[0].mxu0 %v828
    %v3089 = vpop.f32.mrb[0].mxu0
    %v3090 = vadd.f32 %v2897, %v3089
    %v3091 = vpop.f32.mrb[0].mxu0
    %v3092 = vadd.f32 %v2899, %v3091
    %v3093 = vpop.f32.mrb[0].mxu0
    %v3094 = vadd.f32 %v2901, %v3093
    %v3095 = vpop.f32.mrb[0].mxu0
    %v3096 = vadd.f32 %v2903, %v3095
    %3097 = vmatprep.mubr.bf16.mxu0 %v836
    %3098 = vmatmul.mubr.bf16.gmra.mrb[0].mxu0 %v835
    %v3099 = vpop.f32.mrb[0].mxu0
    %v3100 = vadd.f32 %v2907, %v3099
    %v3101 = vpop.f32.mrb[0].mxu0
    %v3102 = vadd.f32 %v2909, %v3101
    %v3103 = vpop.f32.mrb[0].mxu0
    %v3104 = vadd.f32 %v2911, %v3103
    %v3105 = vpop.f32.mrb[0].mxu0
    %v3106 = vadd.f32 %v2913, %v3105
    %3107 = vmatprep.mubr.bf16.mxu0 %v843
    %3108 = vmatmul.mubr.bf16.gmra.mrb[0].mxu0 %v842
    %v3109 = vpop.f32.mrb[0].mxu0
    %v3110 = vadd.f32 %v2917, %v3109
    %v3111 = vpop.f32.mrb[0].mxu0
    %v3112 = vadd.f32 %v2919, %v3111
    %v3113 = vpop.f32.mrb[0].mxu0
    %v3114 = vadd.f32 %v2921, %v3113
    %v3115 = vpop.f32.mrb[0].mxu0
    %v3116 = vadd.f32 %v2923, %v3115
    %3117 = vmatprep.mubr.bf16.mxu0 %v850
    %3118 = vmatmul.mubr.bf16.gmra.mrb[0].mxu0 %v849
    %v3119 = vpop.f32.mrb[0].mxu0
    %v3120 = vadd.f32 %v2927, %v3119
    %v3121 = vpop.f32.mrb[0].mxu0
    %v3122 = vadd.f32 %v2929, %v3121
    %v3123 = vpop.f32.mrb[0].mxu0
    %v3124 = vadd.f32 %v2931, %v3123
    %v3125 = vpop.f32.mrb[0].mxu0
    %v3126 = vadd.f32 %v2933, %v3125
    %3127 = vmatprep.mubr.bf16.mxu0 %v857
    %3128 = vmatmul.mubr.bf16.gmra.mrb[0].mxu0 %v856
    %v3129 = vpop.f32.mrb[0].mxu0
    %v3130 = vadd.f32 %v2937, %v3129
    %v3131 = vpop.f32.mrb[0].mxu0
    %v3132 = vadd.f32 %v2939, %v3131
    %v3133 = vpop.f32.mrb[0].mxu0
    %v3134 = vadd.f32 %v2941, %v3133
    %v3135 = vpop.f32.mrb[0].mxu0
    %v3136 = vadd.f32 %v2943, %v3135
    %3137 = vmatprep.mubr.bf16.mxu0 %v864
    %3138 = vmatmul.mubr.bf16.gmra.mrb[0].mxu0 %v863
    %v3139 = vpop.f32.mrb[0].mxu0
    %v3140 = vadd.f32 %v2947, %v3139
    %v3141 = vpop.f32.mrb[0].mxu0
    %v3142 = vadd.f32 %v2949, %v3141
    %v3143 = vpop.f32.mrb[0].mxu0
    %v3144 = vadd.f32 %v2951, %v3143
    %v3145 = vpop.f32.mrb[0].mxu0
    %v3146 = vadd.f32 %v2953, %v3145
    %3147 = vmatprep.mubr.bf16.mxu0 %v871
    %3148 = vmatmul.mubr.bf16.gmra.mrb[0].mxu0 %v870
    %v3149 = vpop.f32.mrb[0].mxu0
    %v3150 = vadd.f32 %v2957, %v3149
    %v3151 = vpop.f32.mrb[0].mxu0
    %v3152 = vadd.f32 %v2959, %v3151
    %v3153 = vpop.f32.mrb[0].mxu0
    %v3154 = vadd.f32 %v2961, %v3153
    %v3155 = vpop.f32.mrb[0].mxu0
    %v3156 = vadd.f32 %v2963, %v3155
    %3157 = vdwg.mxu0
    %3158 = vmatprep.subr.bf16.mxu0 %v1690
    %3159 = vmatpush1.bf16.msra.mxu0 %v1689
    %3160 = vmatprep.subr.bf16.mxu0 %v1694
    %3161 = vmatpush1.bf16.msra.mxu0 %v1693
    %3162 = vmatprep.subr.bf16.mxu0 %v1698
    %3163 = vmatpush1.bf16.msra.mxu0 %v1697
    %3164 = vmatprep.subr.bf16.mxu0 %v1702
    %3165 = vmatpush1.bf16.msra.mxu0 %v1701
    %3166 = vmatprep.subr.bf16.mxu0 %v1706
    %3167 = vmatpush1.bf16.msra.mxu0 %v1705
    %3168 = vmatprep.subr.bf16.mxu0 %v1710
    %3169 = vmatpush1.bf16.msra.mxu0 %v1709
    %3170 = vmatprep.subr.bf16.mxu0 %v1714
    %3171 = vmatpush1.bf16.msra.mxu0 %v1713
    %3172 = vmatprep.subr.bf16.mxu0 %v1718
    %3173 = vmatpush1.bf16.msra.mxu0 %v1717
    %3174 = vmatprep.subr.bf16.mxu0 %v1722
    %3175 = vmatpush1.bf16.msra.mxu0 %v1721
    %3176 = vmatprep.subr.bf16.mxu0 %v1726
    %3177 = vmatpush1.bf16.msra.mxu0 %v1725
    %3178 = vmatprep.subr.bf16.mxu0 %v1730
    %3179 = vmatpush1.bf16.msra.mxu0 %v1729
    %3180 = vmatprep.subr.bf16.mxu0 %v1734
    %3181 = vmatpush1.bf16.msra.mxu0 %v1733
    %3182 = vmatprep.subr.bf16.mxu0 %v1738
    %3183 = vmatpush1.bf16.msra.mxu0 %v1737
    %3184 = vmatprep.subr.bf16.mxu0 %v1742
    %3185 = vmatpush1.bf16.msra.mxu0 %v1741
    %3186 = vmatprep.subr.bf16.mxu0 %v1746
    %3187 = vmatpush1.bf16.msra.mxu0 %v1745
    %3188 = vmatprep.subr.bf16.mxu0 %v1750
    %3189 = vmatpush1.bf16.msra.mxu0 %v1749
    %3190 = vmatprep.mubr.bf16.mxu0 %v768
    %3191 = vmatmul.mubr.bf16.gmra.mrb[0].mxu0 %v767
    %v3192 = vpop.f32.mrb[0].mxu0
    %v3193 = vadd.f32 %v3000, %v3192
    %v3194 = vpop.f32.mrb[0].mxu0
    %v3195 = vadd.f32 %v3002, %v3194
    %v3196 = vpop.f32.mrb[0].mxu0
    %v3197 = vadd.f32 %v3004, %v3196
    %v3198 = vpop.f32.mrb[0].mxu0
    %v3199 = vadd.f32 %v3006, %v3198
    %3200 = vmatprep.mubr.bf16.mxu0 %v775
    %3201 = vmatmul.mubr.bf16.gmra.mrb[0].mxu0 %v774
    %v3202 = vpop.f32.mrb[0].mxu0
    %v3203 = vadd.f32 %v3010, %v3202
    %v3204 = vpop.f32.mrb[0].mxu0
    %v3205 = vadd.f32 %v3012, %v3204
    %v3206 = vpop.f32.mrb[0].mxu0
    %v3207 = vadd.f32 %v3014, %v3206
    %v3208 = vpop.f32.mrb[0].mxu0
    %v3209 = vadd.f32 %v3016, %v3208
    %3210 = vmatprep.mubr.bf16.mxu0 %v782
    %3211 = vmatmul.mubr.bf16.gmra.mrb[0].mxu0 %v781
    %v3212 = vpop.f32.mrb[0].mxu0
    %v3213 = vadd.f32 %v3020, %v3212
    %v3214 = vpop.f32.mrb[0].mxu0
    %v3215 = vadd.f32 %v3022, %v3214
    %v3216 = vpop.f32.mrb[0].mxu0
    %v3217 = vadd.f32 %v3024, %v3216
    %v3218 = vpop.f32.mrb[0].mxu0
    %v3219 = vadd.f32 %v3026, %v3218
    %3220 = vmatprep.mubr.bf16.mxu0 %v789
    %3221 = vmatmul.mubr.bf16.gmra.mrb[0].mxu0 %v788
    %v3222 = vpop.f32.mrb[0].mxu0
    %v3223 = vadd.f32 %v3030, %v3222
    %v3224 = vpop.f32.mrb[0].mxu0
    %v3225 = vadd.f32 %v3032, %v3224
    %v3226 = vpop.f32.mrb[0].mxu0
    %v3227 = vadd.f32 %v3034, %v3226
    %v3228 = vpop.f32.mrb[0].mxu0
    %v3229 = vadd.f32 %v3036, %v3228
    %3230 = vmatprep.mubr.bf16.mxu0 %v796
    %3231 = vmatmul.mubr.bf16.gmra.mrb[0].mxu0 %v795
    %v3232 = vpop.f32.mrb[0].mxu0
    %v3233 = vadd.f32 %v3040, %v3232
    %v3234 = vpop.f32.mrb[0].mxu0
    %v3235 = vadd.f32 %v3042, %v3234
    %v3236 = vpop.f32.mrb[0].mxu0
    %v3237 = vadd.f32 %v3044, %v3236
    %v3238 = vpop.f32.mrb[0].mxu0
    %v3239 = vadd.f32 %v3046, %v3238
    %3240 = vmatprep.mubr.bf16.mxu0 %v803
    %3241 = vmatmul.mubr.bf16.gmra.mrb[0].mxu0 %v802
    %v3242 = vpop.f32.mrb[0].mxu0
    %v3243 = vadd.f32 %v3050, %v3242
    %v3244 = vpop.f32.mrb[0].mxu0
    %v3245 = vadd.f32 %v3052, %v3244
    %v3246 = vpop.f32.mrb[0].mxu0
    %v3247 = vadd.f32 %v3054, %v3246
    %v3248 = vpop.f32.mrb[0].mxu0
    %v3249 = vadd.f32 %v3056, %v3248
    %3250 = vmatprep.mubr.bf16.mxu0 %v810
    %3251 = vmatmul.mubr.bf16.gmra.mrb[0].mxu0 %v809
    %v3252 = vpop.f32.mrb[0].mxu0
    %v3253 = vadd.f32 %v3060, %v3252
    %v3254 = vpop.f32.mrb[0].mxu0
    %v3255 = vadd.f32 %v3062, %v3254
    %v3256 = vpop.f32.mrb[0].mxu0
    %v3257 = vadd.f32 %v3064, %v3256
    %v3258 = vpop.f32.mrb[0].mxu0
    %v3259 = vadd.f32 %v3066, %v3258
    %3260 = vmatprep.mubr.bf16.mxu0 %v817
    %3261 = vmatmul.mubr.bf16.gmra.mrb[0].mxu0 %v816
    %v3262 = vpop.f32.mrb[0].mxu0
    %v3263 = vadd.f32 %v3070, %v3262
    %v3264 = vpop.f32.mrb[0].mxu0
    %v3265 = vadd.f32 %v3072, %v3264
    %v3266 = vpop.f32.mrb[0].mxu0
    %v3267 = vadd.f32 %v3074, %v3266
    %v3268 = vpop.f32.mrb[0].mxu0
    %v3269 = vadd.f32 %v3076, %v3268
    %3270 = vmatprep.mubr.bf16.mxu0 %v824
    %3271 = vmatmul.mubr.bf16.gmra.mrb[0].mxu0 %v823
    %v3272 = vpop.f32.mrb[0].mxu0
    %v3273 = vadd.f32 %v3080, %v3272
    %v3274 = vpop.f32.mrb[0].mxu0
    %v3275 = vadd.f32 %v3082, %v3274
    %v3276 = vpop.f32.mrb[0].mxu0
    %v3277 = vadd.f32 %v3084, %v3276
    %v3278 = vpop.f32.mrb[0].mxu0
    %v3279 = vadd.f32 %v3086, %v3278
    %3280 = vmatprep.mubr.bf16.mxu0 %v831
    %3281 = vmatmul.mubr.bf16.gmra.mrb[0].mxu0 %v830
    %v3282 = vpop.f32.mrb[0].mxu0
    %v3283 = vadd.f32 %v3090, %v3282
    %v3284 = vpop.f32.mrb[0].mxu0
    %v3285 = vadd.f32 %v3092, %v3284
    %v3286 = vpop.f32.mrb[0].mxu0
    %v3287 = vadd.f32 %v3094, %v3286
    %v3288 = vpop.f32.mrb[0].mxu0
    %v3289 = vadd.f32 %v3096, %v3288
    %3290 = vmatprep.mubr.bf16.mxu0 %v838
    %3291 = vmatmul.mubr.bf16.gmra.mrb[0].mxu0 %v837
    %v3292 = vpop.f32.mrb[0].mxu0
    %v3293 = vadd.f32 %v3100, %v3292
    %v3294 = vpop.f32.mrb[0].mxu0
    %v3295 = vadd.f32 %v3102, %v3294
    %v3296 = vpop.f32.mrb[0].mxu0
    %v3297 = vadd.f32 %v3104, %v3296
    %v3298 = vpop.f32.mrb[0].mxu0
    %v3299 = vadd.f32 %v3106, %v3298
    %3300 = vmatprep.mubr.bf16.mxu0 %v845
    %3301 = vmatmul.mubr.bf16.gmra.mrb[0].mxu0 %v844
    %v3302 = vpop.f32.mrb[0].mxu0
    %v3303 = vadd.f32 %v3110, %v3302
    %v3304 = vpop.f32.mrb[0].mxu0
    %v3305 = vadd.f32 %v3112, %v3304
    %v3306 = vpop.f32.mrb[0].mxu0
    %v3307 = vadd.f32 %v3114, %v3306
    %v3308 = vpop.f32.mrb[0].mxu0
    %v3309 = vadd.f32 %v3116, %v3308
    %3310 = vmatprep.mubr.bf16.mxu0 %v852
    %3311 = vmatmul.mubr.bf16.gmra.mrb[0].mxu0 %v851
    %v3312 = vpop.f32.mrb[0].mxu0
    %v3313 = vadd.f32 %v3120, %v3312
    %v3314 = vpop.f32.mrb[0].mxu0
    %v3315 = vadd.f32 %v3122, %v3314
    %v3316 = vpop.f32.mrb[0].mxu0
    %v3317 = vadd.f32 %v3124, %v3316
    %v3318 = vpop.f32.mrb[0].mxu0
    %v3319 = vadd.f32 %v3126, %v3318
    %3320 = vmatprep.mubr.bf16.mxu0 %v859
    %3321 = vmatmul.mubr.bf16.gmra.mrb[0].mxu0 %v858
    %v3322 = vpop.f32.mrb[0].mxu0
    %v3323 = vadd.f32 %v3130, %v3322
    %v3324 = vpop.f32.mrb[0].mxu0
    %v3325 = vadd.f32 %v3132, %v3324
    %v3326 = vpop.f32.mrb[0].mxu0
    %v3327 = vadd.f32 %v3134, %v3326
    %v3328 = vpop.f32.mrb[0].mxu0
    %v3329 = vadd.f32 %v3136, %v3328
    %3330 = vmatprep.mubr.bf16.mxu0 %v866
    %3331 = vmatmul.mubr.bf16.gmra.mrb[0].mxu0 %v865
    %v3332 = vpop.f32.mrb[0].mxu0
    %v3333 = vadd.f32 %v3140, %v3332
    %v3334 = vpop.f32.mrb[0].mxu0
    %v3335 = vadd.f32 %v3142, %v3334
    %v3336 = vpop.f32.mrb[0].mxu0
    %v3337 = vadd.f32 %v3144, %v3336
    %v3338 = vpop.f32.mrb[0].mxu0
    %v3339 = vadd.f32 %v3146, %v3338
    %3340 = vmatprep.mubr.bf16.mxu0 %v873
    %3341 = vmatmul.mubr.bf16.gmra.mrb[0].mxu0 %v872
    %v3342 = vpop.f32.mrb[0].mxu0
    %v3343 = vadd.f32 %v3150, %v3342
    %v3344 = vpop.f32.mrb[0].mxu0
    %v3345 = vadd.f32 %v3152, %v3344
    %v3346 = vpop.f32.mrb[0].mxu0
    %v3347 = vadd.f32 %v3154, %v3346
    %v3348 = vpop.f32.mrb[0].mxu0
    %v3349 = vadd.f32 %v3156, %v3348
    %3350 = vdwg.mxu0
    %3351 = vmatprep.subr.bf16.mxu0 %v1754
    %3352 = vmatpush1.bf16.msra.mxu0 %v1753
    %3353 = vmatprep.subr.bf16.mxu0 0
    %3354 = vmatpush1.bf16.msra.mxu0 0
    %3355 = vmatprep.subr.bf16.mxu0 0
    %3356 = vmatpush1.bf16.msra.mxu0 0
    %3357 = vmatprep.subr.bf16.mxu0 0
    %3358 = vmatpush1.bf16.msra.mxu0 0
    %3359 = vmatprep.subr.bf16.mxu0 0
    %3360 = vmatpush1.bf16.msra.mxu0 0
    %3361 = vmatprep.subr.bf16.mxu0 0
    %3362 = vmatpush1.bf16.msra.mxu0 0
    %3363 = vmatprep.subr.bf16.mxu0 0
    %3364 = vmatpush1.bf16.msra.mxu0 0
    %3365 = vmatprep.subr.bf16.mxu0 0
    %3366 = vmatpush1.bf16.msra.mxu0 0
    %3367 = vmatprep.subr.bf16.mxu0 0
    %3368 = vmatpush1.bf16.msra.mxu0 0
    %3369 = vmatprep.subr.bf16.mxu0 0
    %3370 = vmatpush1.bf16.msra.mxu0 0
    %3371 = vmatprep.subr.bf16.mxu0 0
    %3372 = vmatpush1.bf16.msra.mxu0 0
    %3373 = vmatprep.subr.bf16.mxu0 0
    %3374 = vmatpush1.bf16.msra.mxu0 0
    %3375 = vmatprep.subr.bf16.mxu0 0
    %3376 = vmatpush1.bf16.msra.mxu0 0
    %3377 = vmatprep.subr.bf16.mxu0 0
    %3378 = vmatpush1.bf16.msra.mxu0 0
    %3379 = vmatprep.subr.bf16.mxu0 0
    %3380 = vmatpush1.bf16.msra.mxu0 0
    %3381 = vmatprep.subr.bf16.mxu0 0
    %3382 = vmatpush1.bf16.msra.mxu0 0
    %3383 = vmatprep.mubr.bf16.mxu0 0
    %3384 = vmatmul.mubr.bf16.gmra.mrb[0].mxu0 %v1953
    %v3385 = vpop.f32.mrb[0].mxu0
    %v3386 = vadd.f32 %v3193, %v3385
    %v3387 = vpop.f32.mrb[0].mxu0
    %v3388 = vadd.f32 %v3195, %v3387
    %v3389 = vpop.f32.mrb[0].mxu0
    %v3390 = vadd.f32 %v3197, %v3389
    %v3391 = vpop.f32.mrb[0].mxu0
    %v3392 = vadd.f32 %v3199, %v3391
    %3393 = vmatprep.mubr.bf16.mxu0 0
    %3394 = vmatmul.mubr.bf16.gmra.mrb[0].mxu0 %v1956
    %v3395 = vpop.f32.mrb[0].mxu0
    %v3396 = vadd.f32 %v3203, %v3395
    %v3397 = vpop.f32.mrb[0].mxu0
    %v3398 = vadd.f32 %v3205, %v3397
    %v3399 = vpop.f32.mrb[0].mxu0
    %v3400 = vadd.f32 %v3207, %v3399
    %v3401 = vpop.f32.mrb[0].mxu0
    %v3402 = vadd.f32 %v3209, %v3401
    %3403 = vmatprep.mubr.bf16.mxu0 0
    %3404 = vmatmul.mubr.bf16.gmra.mrb[0].mxu0 %v1959
    %v3405 = vpop.f32.mrb[0].mxu0
    %v3406 = vadd.f32 %v3213, %v3405
    %v3407 = vpop.f32.mrb[0].mxu0
    %v3408 = vadd.f32 %v3215, %v3407
    %v3409 = vpop.f32.mrb[0].mxu0
    %v3410 = vadd.f32 %v3217, %v3409
    %v3411 = vpop.f32.mrb[0].mxu0
    %v3412 = vadd.f32 %v3219, %v3411
    %3413 = vmatprep.mubr.bf16.mxu0 0
    %3414 = vmatmul.mubr.bf16.gmra.mrb[0].mxu0 %v1962
    %v3415 = vpop.f32.mrb[0].mxu0
    %v3416 = vadd.f32 %v3223, %v3415
    %v3417 = vpop.f32.mrb[0].mxu0
    %v3418 = vadd.f32 %v3225, %v3417
    %v3419 = vpop.f32.mrb[0].mxu0
    %v3420 = vadd.f32 %v3227, %v3419
    %v3421 = vpop.f32.mrb[0].mxu0
    %v3422 = vadd.f32 %v3229, %v3421
    %3423 = vmatprep.mubr.bf16.mxu0 0
    %3424 = vmatmul.mubr.bf16.gmra.mrb[0].mxu0 %v1965
    %v3425 = vpop.f32.mrb[0].mxu0
    %v3426 = vadd.f32 %v3233, %v3425
    %v3427 = vpop.f32.mrb[0].mxu0
    %v3428 = vadd.f32 %v3235, %v3427
    %v3429 = vpop.f32.mrb[0].mxu0
    %v3430 = vadd.f32 %v3237, %v3429
    %v3431 = vpop.f32.mrb[0].mxu0
    %v3432 = vadd.f32 %v3239, %v3431
    %3433 = vmatprep.mubr.bf16.mxu0 0
    %3434 = vmatmul.mubr.bf16.gmra.mrb[0].mxu0 %v1968
    %v3435 = vpop.f32.mrb[0].mxu0
    %v3436 = vadd.f32 %v3243, %v3435
    %v3437 = vpop.f32.mrb[0].mxu0
    %v3438 = vadd.f32 %v3245, %v3437
    %v3439 = vpop.f32.mrb[0].mxu0
    %v3440 = vadd.f32 %v3247, %v3439
    %v3441 = vpop.f32.mrb[0].mxu0
    %v3442 = vadd.f32 %v3249, %v3441
    %3443 = vmatprep.mubr.bf16.mxu0 0
    %3444 = vmatmul.mubr.bf16.gmra.mrb[0].mxu0 %v1971
    %v3445 = vpop.f32.mrb[0].mxu0
    %v3446 = vadd.f32 %v3253, %v3445
    %v3447 = vpop.f32.mrb[0].mxu0
    %v3448 = vadd.f32 %v3255, %v3447
    %v3449 = vpop.f32.mrb[0].mxu0
    %v3450 = vadd.f32 %v3257, %v3449
    %v3451 = vpop.f32.mrb[0].mxu0
    %v3452 = vadd.f32 %v3259, %v3451
    %3453 = vmatprep.mubr.bf16.mxu0 0
    %3454 = vmatmul.mubr.bf16.gmra.mrb[0].mxu0 %v1974
    %v3455 = vpop.f32.mrb[0].mxu0
    %v3456 = vadd.f32 %v3263, %v3455
    %v3457 = vpop.f32.mrb[0].mxu0
    %v3458 = vadd.f32 %v3265, %v3457
    %v3459 = vpop.f32.mrb[0].mxu0
    %v3460 = vadd.f32 %v3267, %v3459
    %v3461 = vpop.f32.mrb[0].mxu0
    %v3462 = vadd.f32 %v3269, %v3461
    %3463 = vmatprep.mubr.bf16.mxu0 0
    %3464 = vmatmul.mubr.bf16.gmra.mrb[0].mxu0 %v1977
    %v3465 = vpop.f32.mrb[0].mxu0
    %v3466 = vadd.f32 %v3273, %v3465
    %v3467 = vpop.f32.mrb[0].mxu0
    %v3468 = vadd.f32 %v3275, %v3467
    %v3469 = vpop.f32.mrb[0].mxu0
    %v3470 = vadd.f32 %v3277, %v3469
    %v3471 = vpop.f32.mrb[0].mxu0
    %v3472 = vadd.f32 %v3279, %v3471
    %3473 = vmatprep.mubr.bf16.mxu0 0
    %3474 = vmatmul.mubr.bf16.gmra.mrb[0].mxu0 %v1980
    %v3475 = vpop.f32.mrb[0].mxu0
    %v3476 = vadd.f32 %v3283, %v3475
    %v3477 = vpop.f32.mrb[0].mxu0
    %v3478 = vadd.f32 %v3285, %v3477
    %v3479 = vpop.f32.mrb[0].mxu0
    %v3480 = vadd.f32 %v3287, %v3479
    %v3481 = vpop.f32.mrb[0].mxu0
    %v3482 = vadd.f32 %v3289, %v3481
    %3483 = vmatprep.mubr.bf16.mxu0 0
    %3484 = vmatmul.mubr.bf16.gmra.mrb[0].mxu0 %v1983
    %v3485 = vpop.f32.mrb[0].mxu0
    %v3486 = vadd.f32 %v3293, %v3485
    %v3487 = vpop.f32.mrb[0].mxu0
    %v3488 = vadd.f32 %v3295, %v3487
    %v3489 = vpop.f32.mrb[0].mxu0
    %v3490 = vadd.f32 %v3297, %v3489
    %v3491 = vpop.f32.mrb[0].mxu0
    %v3492 = vadd.f32 %v3299, %v3491
    %3493 = vmatprep.mubr.bf16.mxu0 0
    %3494 = vmatmul.mubr.bf16.gmra.mrb[0].mxu0 %v1986
    %v3495 = vpop.f32.mrb[0].mxu0
    %v3496 = vadd.f32 %v3303, %v3495
    %v3497 = vpop.f32.mrb[0].mxu0
    %v3498 = vadd.f32 %v3305, %v3497
    %v3499 = vpop.f32.mrb[0].mxu0
    %v3500 = vadd.f32 %v3307, %v3499
    %v3501 = vpop.f32.mrb[0].mxu0
    %v3502 = vadd.f32 %v3309, %v3501
    %3503 = vmatprep.mubr.bf16.mxu0 0
    %3504 = vmatmul.mubr.bf16.gmra.mrb[0].mxu0 %v1989
    %v3505 = vpop.f32.mrb[0].mxu0
    %v3506 = vadd.f32 %v3313, %v3505
    %v3507 = vpop.f32.mrb[0].mxu0
    %v3508 = vadd.f32 %v3315, %v3507
    %v3509 = vpop.f32.mrb[0].mxu0
    %v3510 = vadd.f32 %v3317, %v3509
    %v3511 = vpop.f32.mrb[0].mxu0
    %v3512 = vadd.f32 %v3319, %v3511
    %3513 = vmatprep.mubr.bf16.mxu0 0
    %3514 = vmatmul.mubr.bf16.gmra.mrb[0].mxu0 %v1992
    %v3515 = vpop.f32.mrb[0].mxu0
    %v3516 = vadd.f32 %v3323, %v3515
    %v3517 = vpop.f32.mrb[0].mxu0
    %v3518 = vadd.f32 %v3325, %v3517
    %v3519 = vpop.f32.mrb[0].mxu0
    %v3520 = vadd.f32 %v3327, %v3519
    %v3521 = vpop.f32.mrb[0].mxu0
    %v3522 = vadd.f32 %v3329, %v3521
    %3523 = vmatprep.mubr.bf16.mxu0 0
    %3524 = vmatmul.mubr.bf16.gmra.mrb[0].mxu0 %v1995
    %v3525 = vpop.f32.mrb[0].mxu0
    %v3526 = vadd.f32 %v3333, %v3525
    %v3527 = vpop.f32.mrb[0].mxu0
    %v3528 = vadd.f32 %v3335, %v3527
    %v3529 = vpop.f32.mrb[0].mxu0
    %v3530 = vadd.f32 %v3337, %v3529
    %v3531 = vpop.f32.mrb[0].mxu0
    %v3532 = vadd.f32 %v3339, %v3531
    %3533 = vmatprep.mubr.bf16.mxu0 0
    %3534 = vmatmul.mubr.bf16.gmra.mrb[0].mxu0 %v1998
    %v3535 = vpop.f32.mrb[0].mxu0
    %v3536 = vadd.f32 %v3343, %v3535
    %v3537 = vpop.f32.mrb[0].mxu0
    %v3538 = vadd.f32 %v3345, %v3537
    %v3539 = vpop.f32.mrb[0].mxu0
    %v3540 = vadd.f32 %v3347, %v3539
    %v3541 = vpop.f32.mrb[0].mxu0
    %v3542 = vadd.f32 %v3349, %v3541
    %3543 = vdwg.mxu0
    %vm3544 = vcmp.gt.f32.partialorder %v2614, 0.0
    %vm3545 = vcmp.gt.f32.partialorder %v2616, 0.0
    %vm3546 = vcmp.gt.f32.partialorder %v3386, 0.0
    %vm3547 = vcmp.gt.f32.partialorder %v3388, 0.0
    %vm3548 = vcmp.gt.f32.partialorder %v2618, 0.0
    %vm3549 = vcmp.gt.f32.partialorder %v2620, 0.0
    %vm3550 = vcmp.gt.f32.partialorder %v3390, 0.0
    %vm3551 = vcmp.gt.f32.partialorder %v3392, 0.0
    %vm3552 = vcmp.gt.f32.partialorder %v2624, 0.0
    %vm3553 = vcmp.gt.f32.partialorder %v2626, 0.0
    %vm3554 = vcmp.gt.f32.partialorder %v3396, 0.0
    %vm3555 = vcmp.gt.f32.partialorder %v3398, 0.0
    %vm3556 = vcmp.gt.f32.partialorder %v2628, 0.0
    %vm3557 = vcmp.gt.f32.partialorder %v2630, 0.0
    %vm3558 = vcmp.gt.f32.partialorder %v3400, 0.0
    %vm3559 = vcmp.gt.f32.partialorder %v3402, 0.0
    %vm3560 = vcmp.gt.f32.partialorder %v2634, 0.0
    %vm3561 = vcmp.gt.f32.partialorder %v2636, 0.0
    %vm3562 = vcmp.gt.f32.partialorder %v3406, 0.0
    %vm3563 = vcmp.gt.f32.partialorder %v3408, 0.0
    %vm3564 = vcmp.gt.f32.partialorder %v2638, 0.0
    %vm3565 = vcmp.gt.f32.partialorder %v2640, 0.0
    %vm3566 = vcmp.gt.f32.partialorder %v3410, 0.0
    %vm3567 = vcmp.gt.f32.partialorder %v3412, 0.0
    %vm3568 = vcmp.gt.f32.partialorder %v2644, 0.0
    %vm3569 = vcmp.gt.f32.partialorder %v2646, 0.0
    %vm3570 = vcmp.gt.f32.partialorder %v3416, 0.0
    %vm3571 = vcmp.gt.f32.partialorder %v3418, 0.0
    %vm3572 = vcmp.gt.f32.partialorder %v2648, 0.0
    %vm3573 = vcmp.gt.f32.partialorder %v2650, 0.0
    %vm3574 = vcmp.gt.f32.partialorder %v3420, 0.0
    %vm3575 = vcmp.gt.f32.partialorder %v3422, 0.0
    %vm3576 = vcmp.gt.f32.partialorder %v2654, 0.0
    %vm3577 = vcmp.gt.f32.partialorder %v2656, 0.0
    %vm3578 = vcmp.gt.f32.partialorder %v3426, 0.0
    %vm3579 = vcmp.gt.f32.partialorder %v3428, 0.0
    %vm3580 = vcmp.gt.f32.partialorder %v2658, 0.0
    %vm3581 = vcmp.gt.f32.partialorder %v2660, 0.0
    %vm3582 = vcmp.gt.f32.partialorder %v3430, 0.0
    %vm3583 = vcmp.gt.f32.partialorder %v3432, 0.0
    %vm3584 = vcmp.gt.f32.partialorder %v2664, 0.0
    %vm3585 = vcmp.gt.f32.partialorder %v2666, 0.0
    %vm3586 = vcmp.gt.f32.partialorder %v3436, 0.0
    %vm3587 = vcmp.gt.f32.partialorder %v3438, 0.0
    %vm3588 = vcmp.gt.f32.partialorder %v2668, 0.0
    %vm3589 = vcmp.gt.f32.partialorder %v2670, 0.0
    %vm3590 = vcmp.gt.f32.partialorder %v3440, 0.0
    %vm3591 = vcmp.gt.f32.partialorder %v3442, 0.0
    %vm3592 = vcmp.gt.f32.partialorder %v2674, 0.0
    %vm3593 = vcmp.gt.f32.partialorder %v2676, 0.0
    %vm3594 = vcmp.gt.f32.partialorder %v3446, 0.0
    %vm3595 = vcmp.gt.f32.partialorder %v3448, 0.0
    %vm3596 = vcmp.gt.f32.partialorder %v2678, 0.0
    %vm3597 = vcmp.gt.f32.partialorder %v2680, 0.0
    %vm3598 = vcmp.gt.f32.partialorder %v3450, 0.0
    %vm3599 = vcmp.gt.f32.partialorder %v3452, 0.0
    %vm3600 = vcmp.gt.f32.partialorder %v2684, 0.0
    %vm3601 = vcmp.gt.f32.partialorder %v2686, 0.0
    %vm3602 = vcmp.gt.f32.partialorder %v3456, 0.0
    %vm3603 = vcmp.gt.f32.partialorder %v3458, 0.0
    %vm3604 = vcmp.gt.f32.partialorder %v2688, 0.0
    %vm3605 = vcmp.gt.f32.partialorder %v2690, 0.0
    %vm3606 = vcmp.gt.f32.partialorder %v3460, 0.0
    %vm3607 = vcmp.gt.f32.partialorder %v3462, 0.0
    %vm3608 = vcmp.gt.f32.partialorder %v2694, 0.0
    %vm3609 = vcmp.gt.f32.partialorder %v2696, 0.0
    %vm3610 = vcmp.gt.f32.partialorder %v3466, 0.0
    %vm3611 = vcmp.gt.f32.partialorder %v3468, 0.0
    %vm3612 = vcmp.gt.f32.partialorder %v2698, 0.0
    %vm3613 = vcmp.gt.f32.partialorder %v2700, 0.0
    %vm3614 = vcmp.gt.f32.partialorder %v3470, 0.0
    %vm3615 = vcmp.gt.f32.partialorder %v3472, 0.0
    %vm3616 = vcmp.gt.f32.partialorder %v2704, 0.0
    %vm3617 = vcmp.gt.f32.partialorder %v2706, 0.0
    %vm3618 = vcmp.gt.f32.partialorder %v3476, 0.0
    %vm3619 = vcmp.gt.f32.partialorder %v3478, 0.0
    %vm3620 = vcmp.gt.f32.partialorder %v2708, 0.0
    %vm3621 = vcmp.gt.f32.partialorder %v2710, 0.0
    %vm3622 = vcmp.gt.f32.partialorder %v3480, 0.0
    %vm3623 = vcmp.gt.f32.partialorder %v3482, 0.0
    %vm3624 = vcmp.gt.f32.partialorder %v2714, 0.0
    %vm3625 = vcmp.gt.f32.partialorder %v2716, 0.0
    %vm3626 = vcmp.gt.f32.partialorder %v3486, 0.0
    %vm3627 = vcmp.gt.f32.partialorder %v3488, 0.0
    %vm3628 = vcmp.gt.f32.partialorder %v2718, 0.0
    %vm3629 = vcmp.gt.f32.partialorder %v2720, 0.0
    %vm3630 = vcmp.gt.f32.partialorder %v3490, 0.0
    %vm3631 = vcmp.gt.f32.partialorder %v3492, 0.0
    %vm3632 = vcmp.gt.f32.partialorder %v2724, 0.0
    %vm3633 = vcmp.gt.f32.partialorder %v2726, 0.0
    %vm3634 = vcmp.gt.f32.partialorder %v3496, 0.0
    %vm3635 = vcmp.gt.f32.partialorder %v3498, 0.0
    %vm3636 = vcmp.gt.f32.partialorder %v2728, 0.0
    %vm3637 = vcmp.gt.f32.partialorder %v2730, 0.0
    %vm3638 = vcmp.gt.f32.partialorder %v3500, 0.0
    %vm3639 = vcmp.gt.f32.partialorder %v3502, 0.0
    %vm3640 = vcmp.gt.f32.partialorder %v2734, 0.0
    %vm3641 = vcmp.gt.f32.partialorder %v2736, 0.0
    %vm3642 = vcmp.gt.f32.partialorder %v3506, 0.0
    %vm3643 = vcmp.gt.f32.partialorder %v3508, 0.0
    %vm3644 = vcmp.gt.f32.partialorder %v2738, 0.0
    %vm3645 = vcmp.gt.f32.partialorder %v2740, 0.0
    %vm3646 = vcmp.gt.f32.partialorder %v3510, 0.0
    %vm3647 = vcmp.gt.f32.partialorder %v3512, 0.0
    %vm3648 = vcmp.gt.f32.partialorder %v2744, 0.0
    %vm3649 = vcmp.gt.f32.partialorder %v2746, 0.0
    %vm3650 = vcmp.gt.f32.partialorder %v3516, 0.0
    %vm3651 = vcmp.gt.f32.partialorder %v3518, 0.0
    %vm3652 = vcmp.gt.f32.partialorder %v2748, 0.0
    %vm3653 = vcmp.gt.f32.partialorder %v2750, 0.0
    %vm3654 = vcmp.gt.f32.partialorder %v3520, 0.0
    %vm3655 = vcmp.gt.f32.partialorder %v3522, 0.0
    %vm3656 = vcmp.gt.f32.partialorder %v2754, 0.0
    %vm3657 = vcmp.gt.f32.partialorder %v2756, 0.0
    %vm3658 = vcmp.gt.f32.partialorder %v3526, 0.0
    %vm3659 = vcmp.gt.f32.partialorder %v3528, 0.0
    %vm3660 = vcmp.gt.f32.partialorder %v2758, 0.0
    %vm3661 = vcmp.gt.f32.partialorder %v2760, 0.0
    %vm3662 = vcmp.gt.f32.partialorder %v3530, 0.0
    %vm3663 = vcmp.gt.f32.partialorder %v3532, 0.0
    %vm3664 = vcmp.gt.f32.partialorder %v2764, 0.0
    %vm3665 = vcmp.gt.f32.partialorder %v2766, 0.0
    %vm3666 = vcmp.gt.f32.partialorder %v3536, 0.0
    %vm3667 = vcmp.gt.f32.partialorder %v3538, 0.0
    %vm3668 = vcmp.gt.f32.partialorder %v2768, 0.0
    %vm3669 = vcmp.gt.f32.partialorder %v2770, 0.0
    %vm3670 = vcmp.gt.f32.partialorder %v3540, 0.0
    %vm3671 = vcmp.gt.f32.partialorder %v3542, 0.0
    %v3672 = vmul.f32 %v2614, 0.01
    %v3673 = vmul.f32 %v2616, 0.01
    %v3674 = vmul.f32 %v3386, 0.01
    %v3675 = vmul.f32 %v3388, 0.01
    %v3676 = vmul.f32 %v2618, 0.01
    %v3677 = vmul.f32 %v2620, 0.01
    %v3678 = vmul.f32 %v3390, 0.01
    %v3679 = vmul.f32 %v3392, 0.01
    %v3680 = vmul.f32 %v2624, 0.01
    %v3681 = vmul.f32 %v2626, 0.01
    %v3682 = vmul.f32 %v3396, 0.01
    %v3683 = vmul.f32 %v3398, 0.01
    %v3684 = vmul.f32 %v2628, 0.01
    %v3685 = vmul.f32 %v2630, 0.01
    %v3686 = vmul.f32 %v3400, 0.01
    %v3687 = vmul.f32 %v3402, 0.01
    %v3688 = vmul.f32 %v2634, 0.01
    %v3689 = vmul.f32 %v2636, 0.01
    %v3690 = vmul.f32 %v3406, 0.01
    %v3691 = vmul.f32 %v3408, 0.01
    %v3692 = vmul.f32 %v2638, 0.01
    %v3693 = vmul.f32 %v2640, 0.01
    %v3694 = vmul.f32 %v3410, 0.01
    %v3695 = vmul.f32 %v3412, 0.01
    %v3696 = vmul.f32 %v2644, 0.01
    %v3697 = vmul.f32 %v2646, 0.01
    %v3698 = vmul.f32 %v3416, 0.01
    %v3699 = vmul.f32 %v3418, 0.01
    %v3700 = vmul.f32 %v2648, 0.01
    %v3701 = vmul.f32 %v2650, 0.01
    %v3702 = vmul.f32 %v3420, 0.01
    %v3703 = vmul.f32 %v3422, 0.01
    %v3704 = vmul.f32 %v2654, 0.01
    %v3705 = vmul.f32 %v2656, 0.01
    %v3706 = vmul.f32 %v3426, 0.01
    %v3707 = vmul.f32 %v3428, 0.01
    %v3708 = vmul.f32 %v2658, 0.01
    %v3709 = vmul.f32 %v2660, 0.01
    %v3710 = vmul.f32 %v3430, 0.01
    %v3711 = vmul.f32 %v3432, 0.01
    %v3712 = vmul.f32 %v2664, 0.01
    %v3713 = vmul.f32 %v2666, 0.01
    %v3714 = vmul.f32 %v3436, 0.01
    %v3715 = vmul.f32 %v3438, 0.01
    %v3716 = vmul.f32 %v2668, 0.01
    %v3717 = vmul.f32 %v2670, 0.01
    %v3718 = vmul.f32 %v3440, 0.01
    %v3719 = vmul.f32 %v3442, 0.01
    %v3720 = vmul.f32 %v2674, 0.01
    %v3721 = vmul.f32 %v2676, 0.01
    %v3722 = vmul.f32 %v3446, 0.01
    %v3723 = vmul.f32 %v3448, 0.01
    %v3724 = vmul.f32 %v2678, 0.01
    %v3725 = vmul.f32 %v2680, 0.01
    %v3726 = vmul.f32 %v3450, 0.01
    %v3727 = vmul.f32 %v3452, 0.01
    %v3728 = vmul.f32 %v2684, 0.01
    %v3729 = vmul.f32 %v2686, 0.01
    %v3730 = vmul.f32 %v3456, 0.01
    %v3731 = vmul.f32 %v3458, 0.01
    %v3732 = vmul.f32 %v2688, 0.01
    %v3733 = vmul.f32 %v2690, 0.01
    %v3734 = vmul.f32 %v3460, 0.01
    %v3735 = vmul.f32 %v3462, 0.01
    %v3736 = vmul.f32 %v2694, 0.01
    %v3737 = vmul.f32 %v2696, 0.01
    %v3738 = vmul.f32 %v3466, 0.01
    %v3739 = vmul.f32 %v3468, 0.01
    %v3740 = vmul.f32 %v2698, 0.01
    %v3741 = vmul.f32 %v2700, 0.01
    %v3742 = vmul.f32 %v3470, 0.01
    %v3743 = vmul.f32 %v3472, 0.01
    %v3744 = vmul.f32 %v2704, 0.01
    %v3745 = vmul.f32 %v2706, 0.01
    %v3746 = vmul.f32 %v3476, 0.01
    %v3747 = vmul.f32 %v3478, 0.01
    %v3748 = vmul.f32 %v2708, 0.01
    %v3749 = vmul.f32 %v2710, 0.01
    %v3750 = vmul.f32 %v3480, 0.01
    %v3751 = vmul.f32 %v3482, 0.01
    %v3752 = vmul.f32 %v2714, 0.01
    %v3753 = vmul.f32 %v2716, 0.01
    %v3754 = vmul.f32 %v3486, 0.01
    %v3755 = vmul.f32 %v3488, 0.01
    %v3756 = vmul.f32 %v2718, 0.01
    %v3757 = vmul.f32 %v2720, 0.01
    %v3758 = vmul.f32 %v3490, 0.01
    %v3759 = vmul.f32 %v3492, 0.01
    %v3760 = vmul.f32 %v2724, 0.01
    %v3761 = vmul.f32 %v2726, 0.01
    %v3762 = vmul.f32 %v3496, 0.01
    %v3763 = vmul.f32 %v3498, 0.01
    %v3764 = vmul.f32 %v2728, 0.01
    %v3765 = vmul.f32 %v2730, 0.01
    %v3766 = vmul.f32 %v3500, 0.01
    %v3767 = vmul.f32 %v3502, 0.01
    %v3768 = vmul.f32 %v2734, 0.01
    %v3769 = vmul.f32 %v2736, 0.01
    %v3770 = vmul.f32 %v3506, 0.01
    %v3771 = vmul.f32 %v3508, 0.01
    %v3772 = vmul.f32 %v2738, 0.01
    %v3773 = vmul.f32 %v2740, 0.01
    %v3774 = vmul.f32 %v3510, 0.01
    %v3775 = vmul.f32 %v3512, 0.01
    %v3776 = vmul.f32 %v2744, 0.01
    %v3777 = vmul.f32 %v2746, 0.01
    %v3778 = vmul.f32 %v3516, 0.01
    %v3779 = vmul.f32 %v3518, 0.01
    %v3780 = vmul.f32 %v2748, 0.01
    %v3781 = vmul.f32 %v2750, 0.01
    %v3782 = vmul.f32 %v3520, 0.01
    %v3783 = vmul.f32 %v3522, 0.01
    %v3784 = vmul.f32 %v2754, 0.01
    %v3785 = vmul.f32 %v2756, 0.01
    %v3786 = vmul.f32 %v3526, 0.01
    %v3787 = vmul.f32 %v3528, 0.01
    %v3788 = vmul.f32 %v2758, 0.01
    %v3789 = vmul.f32 %v2760, 0.01
    %v3790 = vmul.f32 %v3530, 0.01
    %v3791 = vmul.f32 %v3532, 0.01
    %v3792 = vmul.f32 %v2764, 0.01
    %v3793 = vmul.f32 %v2766, 0.01
    %v3794 = vmul.f32 %v3536, 0.01
    %v3795 = vmul.f32 %v3538, 0.01
    %v3796 = vmul.f32 %v2768, 0.01
    %v3797 = vmul.f32 %v2770, 0.01
    %v3798 = vmul.f32 %v3540, 0.01
    %v3799 = vmul.f32 %v3542, 0.01
    %v3800 = vsel %vm3544, %v2614, %v3672
    %v3801 = vsel %vm3545, %v2616, %v3673
    %v3802 = vsel %vm3546, %v3386, %v3674
    %v3803 = vsel %vm3547, %v3388, %v3675
    %v3804 = vsel %vm3548, %v2618, %v3676
    %v3805 = vsel %vm3549, %v2620, %v3677
    %v3806 = vsel %vm3550, %v3390, %v3678
    %v3807 = vsel %vm3551, %v3392, %v3679
    %v3808 = vsel %vm3552, %v2624, %v3680
    %v3809 = vsel %vm3553, %v2626, %v3681
    %v3810 = vsel %vm3554, %v3396, %v3682
    %v3811 = vsel %vm3555, %v3398, %v3683
    %v3812 = vsel %vm3556, %v2628, %v3684
    %v3813 = vsel %vm3557, %v2630, %v3685
    %v3814 = vsel %vm3558, %v3400, %v3686
    %v3815 = vsel %vm3559, %v3402, %v3687
    %v3816 = vsel %vm3560, %v2634, %v3688
    %v3817 = vsel %vm3561, %v2636, %v3689
    %v3818 = vsel %vm3562, %v3406, %v3690
    %v3819 = vsel %vm3563, %v3408, %v3691
    %v3820 = vsel %vm3564, %v2638, %v3692
    %v3821 = vsel %vm3565, %v2640, %v3693
    %v3822 = vsel %vm3566, %v3410, %v3694
    %v3823 = vsel %vm3567, %v3412, %v3695
    %v3824 = vsel %vm3568, %v2644, %v3696
    %v3825 = vsel %vm3569, %v2646, %v3697
    %v3826 = vsel %vm3570, %v3416, %v3698
    %v3827 = vsel %vm3571, %v3418, %v3699
    %v3828 = vsel %vm3572, %v2648, %v3700
    %v3829 = vsel %vm3573, %v2650, %v3701
    %v3830 = vsel %vm3574, %v3420, %v3702
    %v3831 = vsel %vm3575, %v3422, %v3703
    %v3832 = vsel %vm3576, %v2654, %v3704
    %v3833 = vsel %vm3577, %v2656, %v3705
    %v3834 = vsel %vm3578, %v3426, %v3706
    %v3835 = vsel %vm3579, %v3428, %v3707
    %v3836 = vsel %vm3580, %v2658, %v3708
    %v3837 = vsel %vm3581, %v2660, %v3709
    %v3838 = vsel %vm3582, %v3430, %v3710
    %v3839 = vsel %vm3583, %v3432, %v3711
    %v3840 = vsel %vm3584, %v2664, %v3712
    %v3841 = vsel %vm3585, %v2666, %v3713
    %v3842 = vsel %vm3586, %v3436, %v3714
    %v3843 = vsel %vm3587, %v3438, %v3715
    %v3844 = vsel %vm3588, %v2668, %v3716
    %v3845 = vsel %vm3589, %v2670, %v3717
    %v3846 = vsel %vm3590, %v3440, %v3718
    %v3847 = vsel %vm3591, %v3442, %v3719
    %v3848 = vsel %vm3592, %v2674, %v3720
    %v3849 = vsel %vm3593, %v2676, %v3721
    %v3850 = vsel %vm3594, %v3446, %v3722
    %v3851 = vsel %vm3595, %v3448, %v3723
    %v3852 = vsel %vm3596, %v2678, %v3724
    %v3853 = vsel %vm3597, %v2680, %v3725
    %v3854 = vsel %vm3598, %v3450, %v3726
    %v3855 = vsel %vm3599, %v3452, %v3727
    %v3856 = vsel %vm3600, %v2684, %v3728
    %v3857 = vsel %vm3601, %v2686, %v3729
    %v3858 = vsel %vm3602, %v3456, %v3730
    %v3859 = vsel %vm3603, %v3458, %v3731
    %v3860 = vsel %vm3604, %v2688, %v3732
    %v3861 = vsel %vm3605, %v2690, %v3733
    %v3862 = vsel %vm3606, %v3460, %v3734
    %v3863 = vsel %vm3607, %v3462, %v3735
    %v3864 = vsel %vm3608, %v2694, %v3736
    %v3865 = vsel %vm3609, %v2696, %v3737
    %v3866 = vsel %vm3610, %v3466, %v3738
    %v3867 = vsel %vm3611, %v3468, %v3739
    %v3868 = vsel %vm3612, %v2698, %v3740
    %v3869 = vsel %vm3613, %v2700, %v3741
    %v3870 = vsel %vm3614, %v3470, %v3742
    %v3871 = vsel %vm3615, %v3472, %v3743
    %v3872 = vsel %vm3616, %v2704, %v3744
    %v3873 = vsel %vm3617, %v2706, %v3745
    %v3874 = vsel %vm3618, %v3476, %v3746
    %v3875 = vsel %vm3619, %v3478, %v3747
    %v3876 = vsel %vm3620, %v2708, %v3748
    %v3877 = vsel %vm3621, %v2710, %v3749
    %v3878 = vsel %vm3622, %v3480, %v3750
    %v3879 = vsel %vm3623, %v3482, %v3751
    %v3880 = vsel %vm3624, %v2714, %v3752
    %v3881 = vsel %vm3625, %v2716, %v3753
    %v3882 = vsel %vm3626, %v3486, %v3754
    %v3883 = vsel %vm3627, %v3488, %v3755
    %v3884 = vsel %vm3628, %v2718, %v3756
    %v3885 = vsel %vm3629, %v2720, %v3757
    %v3886 = vsel %vm3630, %v3490, %v3758
    %v3887 = vsel %vm3631, %v3492, %v3759
    %v3888 = vsel %vm3632, %v2724, %v3760
    %v3889 = vsel %vm3633, %v2726, %v3761
    %v3890 = vsel %vm3634, %v3496, %v3762
    %v3891 = vsel %vm3635, %v3498, %v3763
    %v3892 = vsel %vm3636, %v2728, %v3764
    %v3893 = vsel %vm3637, %v2730, %v3765
    %v3894 = vsel %vm3638, %v3500, %v3766
    %v3895 = vsel %vm3639, %v3502, %v3767
    %v3896 = vsel %vm3640, %v2734, %v3768
    %v3897 = vsel %vm3641, %v2736, %v3769
    %v3898 = vsel %vm3642, %v3506, %v3770
    %v3899 = vsel %vm3643, %v3508, %v3771
    %v3900 = vsel %vm3644, %v2738, %v3772
    %v3901 = vsel %vm3645, %v2740, %v3773
    %v3902 = vsel %vm3646, %v3510, %v3774
    %v3903 = vsel %vm3647, %v3512, %v3775
    %v3904 = vsel %vm3648, %v2744, %v3776
    %v3905 = vsel %vm3649, %v2746, %v3777
    %v3906 = vsel %vm3650, %v3516, %v3778
    %v3907 = vsel %vm3651, %v3518, %v3779
    %v3908 = vsel %vm3652, %v2748, %v3780
    %v3909 = vsel %vm3653, %v2750, %v3781
    %v3910 = vsel %vm3654, %v3520, %v3782
    %v3911 = vsel %vm3655, %v3522, %v3783
    %v3912 = vsel %vm3656, %v2754, %v3784
    %v3913 = vsel %vm3657, %v2756, %v3785
    %v3914 = vsel %vm3658, %v3526, %v3786
    %v3915 = vsel %vm3659, %v3528, %v3787
    %v3916 = vsel %vm3660, %v2758, %v3788
    %v3917 = vsel %vm3661, %v2760, %v3789
    %v3918 = vsel %vm3662, %v3530, %v3790
    %v3919 = vsel %vm3663, %v3532, %v3791
    %v3920 = vsel %vm3664, %v2764, %v3792
    %v3921 = vsel %vm3665, %v2766, %v3793
    %v3922 = vsel %vm3666, %v3536, %v3794
    %v3923 = vsel %vm3667, %v3538, %v3795
    %v3924 = vsel %vm3668, %v2768, %v3796
    %v3925 = vsel %vm3669, %v2770, %v3797
    %v3926 = vsel %vm3670, %v3540, %v3798
    %v3927 = vsel %vm3671, %v3542, %v3799
    %v3928 = vpack.c.bf16 %v3804, %v3800
    %v3929 = vpack.c.bf16 %v3805, %v3801
    %v3930 = vpack.c.bf16 %v3806, %v3802
    %v3931 = vpack.c.bf16 %v3807, %v3803
    %v3932 = vpack.c.bf16 %v3812, %v3808
    %v3933 = vpack.c.bf16 %v3813, %v3809
    %v3934 = vpack.c.bf16 %v3814, %v3810
    %v3935 = vpack.c.bf16 %v3815, %v3811
    %v3936 = vpack.c.bf16 %v3820, %v3816
    %v3937 = vpack.c.bf16 %v3821, %v3817
    %v3938 = vpack.c.bf16 %v3822, %v3818
    %v3939 = vpack.c.bf16 %v3823, %v3819
    %v3940 = vpack.c.bf16 %v3828, %v3824
    %v3941 = vpack.c.bf16 %v3829, %v3825
    %v3942 = vpack.c.bf16 %v3830, %v3826
    %v3943 = vpack.c.bf16 %v3831, %v3827
    %v3944 = vpack.c.bf16 %v3836, %v3832
    %v3945 = vpack.c.bf16 %v3837, %v3833
    %v3946 = vpack.c.bf16 %v3838, %v3834
    %v3947 = vpack.c.bf16 %v3839, %v3835
    %v3948 = vpack.c.bf16 %v3844, %v3840
    %v3949 = vpack.c.bf16 %v3845, %v3841
    %v3950 = vpack.c.bf16 %v3846, %v3842
    %v3951 = vpack.c.bf16 %v3847, %v3843
    %v3952 = vpack.c.bf16 %v3852, %v3848
    %v3953 = vpack.c.bf16 %v3853, %v3849
    %v3954 = vpack.c.bf16 %v3854, %v3850
    %v3955 = vpack.c.bf16 %v3855, %v3851
    %v3956 = vpack.c.bf16 %v3860, %v3856
    %v3957 = vpack.c.bf16 %v3861, %v3857
    %v3958 = vpack.c.bf16 %v3862, %v3858
    %v3959 = vpack.c.bf16 %v3863, %v3859
    %v3960 = vpack.c.bf16 %v3868, %v3864
    %v3961 = vpack.c.bf16 %v3869, %v3865
    %v3962 = vpack.c.bf16 %v3870, %v3866
    %v3963 = vpack.c.bf16 %v3871, %v3867
    %v3964 = vpack.c.bf16 %v3876, %v3872
    %v3965 = vpack.c.bf16 %v3877, %v3873
    %v3966 = vpack.c.bf16 %v3878, %v3874
    %v3967 = vpack.c.bf16 %v3879, %v3875
    %v3968 = vpack.c.bf16 %v3884, %v3880
    %v3969 = vpack.c.bf16 %v3885, %v3881
    %v3970 = vpack.c.bf16 %v3886, %v3882
    %v3971 = vpack.c.bf16 %v3887, %v3883
    %v3972 = vpack.c.bf16 %v3892, %v3888
    %v3973 = vpack.c.bf16 %v3893, %v3889
    %v3974 = vpack.c.bf16 %v3894, %v3890
    %v3975 = vpack.c.bf16 %v3895, %v3891
    %v3976 = vpack.c.bf16 %v3900, %v3896
    %v3977 = vpack.c.bf16 %v3901, %v3897
    %v3978 = vpack.c.bf16 %v3902, %v3898
    %v3979 = vpack.c.bf16 %v3903, %v3899
    %v3980 = vpack.c.bf16 %v3908, %v3904
    %v3981 = vpack.c.bf16 %v3909, %v3905
    %v3982 = vpack.c.bf16 %v3910, %v3906
    %v3983 = vpack.c.bf16 %v3911, %v3907
    %v3984 = vpack.c.bf16 %v3916, %v3912
    %v3985 = vpack.c.bf16 %v3917, %v3913
    %v3986 = vpack.c.bf16 %v3918, %v3914
    %v3987 = vpack.c.bf16 %v3919, %v3915
    %v3988 = vpack.c.bf16 %v3924, %v3920
    %v3989 = vpack.c.bf16 %v3925, %v3921
    %v3990 = vpack.c.bf16 %v3926, %v3922
    %v3991 = vpack.c.bf16 %v3927, %v3923
    %v3992 = vld [vmem:[#allocation5] sm:$0xff]
    %v3993 = vld [vmem:[#allocation5 + $0x8] sm:$0xff]
    %v3994 = vld [vmem:[#allocation5 + $0x10] sm:$0xff]
    %v3995 = vld [vmem:[#allocation5 + $0x18] sm:$0xff]
    %v3996 = vld [vmem:[#allocation5 + $0x20] sm:$0xff]
    %v3997 = vld [vmem:[#allocation5 + $0x28] sm:$0xff]
    %v3998 = vld [vmem:[#allocation5 + $0x30] sm:$0xff]
    %v3999 = vld [vmem:[#allocation5 + $0x38] sm:$0xff]
    %v4000 = vld [vmem:[#allocation5 + $0x40] sm:$0xff]
    %v4001 = vld [vmem:[#allocation5 + $0x48] sm:$0xff]
    %v4002 = vld [vmem:[#allocation5 + $0x50] sm:$0xff]
    %v4003 = vld [vmem:[#allocation5 + $0x58] sm:$0xff]
    %v4004 = vld [vmem:[#allocation5 + $0x60] sm:$0xff]
    %v4005 = vld [vmem:[#allocation5 + $0x68] sm:$0xff]
    %v4006 = vld [vmem:[#allocation5 + $0x70] sm:$0xff]
    %v4007 = vld [vmem:[#allocation5 + $0x78] sm:$0xff]
    %v4008 = vld [vmem:[#allocation5 + $0x80] sm:$0xff]
    %v4009 = vld [vmem:[#allocation5 + $0x88] sm:$0xff]
    %v4010 = vld [vmem:[#allocation5 + $0x90] sm:$0xff]
    %v4011 = vld [vmem:[#allocation5 + $0x98] sm:$0xff]
    %v4012 = vld [vmem:[#allocation5 + $0xa0] sm:$0xff]
    %v4013 = vld [vmem:[#allocation5 + $0xa8] sm:$0xff]
    %v4014 = vld [vmem:[#allocation5 + $0xb0] sm:$0xff]
    %v4015 = vld [vmem:[#allocation5 + $0xb8] sm:$0xff]
    %v4016 = vld [vmem:[#allocation5 + $0xc0] sm:$0xff]
    %v4017 = vld [vmem:[#allocation5 + $0xc8] sm:$0xff]
    %v4018 = vld [vmem:[#allocation5 + $0xd0] sm:$0xff]
    %v4019 = vld [vmem:[#allocation5 + $0xd8] sm:$0xff]
    %v4020 = vld [vmem:[#allocation5 + $0xe0] sm:$0xff]
    %v4021 = vld [vmem:[#allocation5 + $0xe8] sm:$0xff]
    %v4022 = vld [vmem:[#allocation5 + $0xf0] sm:$0xff]
    %v4023 = vld [vmem:[#allocation5 + $0xf8] sm:$0xff]
    %v4024 = vld [vmem:[#allocation5 + $0x100] sm:$0xff]
    %v4025 = vld [vmem:[#allocation5 + $0x108] sm:$0xff]
    %v4026 = vld [vmem:[#allocation5 + $0x110] sm:$0xff]
    %v4027 = vld [vmem:[#allocation5 + $0x118] sm:$0xff]
    %v4028 = vld [vmem:[#allocation5 + $0x120] sm:$0xff]
    %v4029 = vld [vmem:[#allocation5 + $0x128] sm:$0xff]
    %v4030 = vld [vmem:[#allocation5 + $0x130] sm:$0xff]
    %v4031 = vld [vmem:[#allocation5 + $0x138] sm:$0xff]
    %v4032 = vld [vmem:[#allocation5 + $0x140] sm:$0xff]
    %v4033 = vld [vmem:[#allocation5 + $0x148] sm:$0xff]
    %v4034 = vld [vmem:[#allocation5 + $0x150] sm:$0xff]
    %v4035 = vld [vmem:[#allocation5 + $0x158] sm:$0xff]
    %v4036 = vld [vmem:[#allocation5 + $0x160] sm:$0xff]
    %v4037 = vld [vmem:[#allocation5 + $0x168] sm:$0xff]
    %v4038 = vld [vmem:[#allocation5 + $0x170] sm:$0xff]
    %v4039 = vld [vmem:[#allocation5 + $0x178] sm:$0xff]
    %v4040 = vld [vmem:[#allocation5 + $0x180] sm:$0xff]
    %v4041 = vld [vmem:[#allocation5 + $0x188] sm:$0xff]
    %v4042 = vld [vmem:[#allocation5 + $0x190] sm:$0xff]
    %v4043 = vld [vmem:[#allocation5 + $0x198] sm:$0xff]
    %v4044 = vld [vmem:[#allocation5 + $0x1a0] sm:$0xff]
    %v4045 = vld [vmem:[#allocation5 + $0x1a8] sm:$0xff]
    %v4046 = vld [vmem:[#allocation5 + $0x1b0] sm:$0xff]
    %v4047 = vld [vmem:[#allocation5 + $0x1b8] sm:$0xff]
    %v4048 = vld [vmem:[#allocation5 + $0x1c0] sm:$0xff]
    %v4049 = vld [vmem:[#allocation5 + $0x1c8] sm:$0xff]
    %v4050 = vld [vmem:[#allocation5 + $0x1d0] sm:$0xff]
    %v4051 = vld [vmem:[#allocation5 + $0x1d8] sm:$0xff]
    %v4052 = vld [vmem:[#allocation5 + $0x1e0] sm:$0xff]
    %v4053 = vld [vmem:[#allocation5 + $0x1e8] sm:$0xff]
    %v4054 = vld [vmem:[#allocation5 + $0x1f0] sm:$0xff]
    %v4055 = vld [vmem:[#allocation5 + $0x1f8] sm:$0xff]
    %v4056 = vld [vmem:[%s4] sm:$0x3]
    %v4058 = vlaneseq
    %v4059 = vshrl.u32 %v4058, 7
    %v4060 = vsub.s32 0, %v4059
    %v4061 = vrot.slane %v4056, %v4060
    %v4062 = vlaneseq
    %v4063 = vshrl.u32 %v4062, 7
    %v4064 = vsub.s32 1, %v4063
    %v4065 = vrot.slane %v4056, %v4064
    %v4132 = vunpack.c.l.b16 %v3992
    %v4133 = vunpack.c.h.b16 %v3992
    %v4134 = vunpack.c.l.b16 %v3993
    %v4135 = vunpack.c.h.b16 %v3993
    %v4136 = vunpack.c.l.b16 %v3994
    %v4137 = vunpack.c.h.b16 %v3994
    %v4138 = vunpack.c.l.b16 %v3995
    %v4139 = vunpack.c.h.b16 %v3995
    %v4140 = vunpack.c.l.b16 %v3996
    %v4141 = vunpack.c.h.b16 %v3996
    %v4142 = vunpack.c.l.b16 %v3997
    %v4143 = vunpack.c.h.b16 %v3997
    %v4144 = vunpack.c.l.b16 %v3998
    %v4145 = vunpack.c.h.b16 %v3998
    %v4146 = vunpack.c.l.b16 %v3999
    %v4147 = vunpack.c.h.b16 %v3999
    %v4148 = vunpack.c.l.b16 %v4000
    %v4149 = vunpack.c.h.b16 %v4000
    %v4150 = vunpack.c.l.b16 %v4001
    %v4151 = vunpack.c.h.b16 %v4001
    %v4152 = vunpack.c.l.b16 %v4002
    %v4153 = vunpack.c.h.b16 %v4002
    %v4154 = vunpack.c.l.b16 %v4003
    %v4155 = vunpack.c.h.b16 %v4003
    %v4156 = vunpack.c.l.b16 %v4004
    %v4157 = vunpack.c.h.b16 %v4004
    %v4158 = vunpack.c.l.b16 %v4005
    %v4159 = vunpack.c.h.b16 %v4005
    %v4160 = vunpack.c.l.b16 %v4006
    %v4161 = vunpack.c.h.b16 %v4006
    %v4162 = vunpack.c.l.b16 %v4007
    %v4163 = vunpack.c.h.b16 %v4007
    %v4164 = vunpack.c.l.b16 %v4008
    %v4165 = vunpack.c.h.b16 %v4008
    %v4166 = vunpack.c.l.b16 %v4009
    %v4167 = vunpack.c.h.b16 %v4009
    %v4168 = vunpack.c.l.b16 %v4010
    %v4169 = vunpack.c.h.b16 %v4010
    %v4170 = vunpack.c.l.b16 %v4011
    %v4171 = vunpack.c.h.b16 %v4011
    %v4172 = vunpack.c.l.b16 %v4012
    %v4173 = vunpack.c.h.b16 %v4012
    %v4174 = vunpack.c.l.b16 %v4013
    %v4175 = vunpack.c.h.b16 %v4013
    %v4176 = vunpack.c.l.b16 %v4014
    %v4177 = vunpack.c.h.b16 %v4014
    %v4178 = vunpack.c.l.b16 %v4015
    %v4179 = vunpack.c.h.b16 %v4015
    %v4180 = vunpack.c.l.b16 %v4016
    %v4181 = vunpack.c.h.b16 %v4016
    %v4182 = vunpack.c.l.b16 %v4017
    %v4183 = vunpack.c.h.b16 %v4017
    %v4184 = vunpack.c.l.b16 %v4018
    %v4185 = vunpack.c.h.b16 %v4018
    %v4186 = vunpack.c.l.b16 %v4019
    %v4187 = vunpack.c.h.b16 %v4019
    %v4188 = vunpack.c.l.b16 %v4020
    %v4189 = vunpack.c.h.b16 %v4020
    %v4190 = vunpack.c.l.b16 %v4021
    %v4191 = vunpack.c.h.b16 %v4021
    %v4192 = vunpack.c.l.b16 %v4022
    %v4193 = vunpack.c.h.b16 %v4022
    %v4194 = vunpack.c.l.b16 %v4023
    %v4195 = vunpack.c.h.b16 %v4023
    %v4196 = vunpack.c.l.b16 %v4024
    %v4197 = vunpack.c.h.b16 %v4024
    %v4198 = vunpack.c.l.b16 %v4025
    %v4199 = vunpack.c.h.b16 %v4025
    %v4200 = vunpack.c.l.b16 %v4026
    %v4201 = vunpack.c.h.b16 %v4026
    %v4202 = vunpack.c.l.b16 %v4027
    %v4203 = vunpack.c.h.b16 %v4027
    %v4204 = vunpack.c.l.b16 %v4028
    %v4205 = vunpack.c.h.b16 %v4028
    %v4206 = vunpack.c.l.b16 %v4029
    %v4207 = vunpack.c.h.b16 %v4029
    %v4208 = vunpack.c.l.b16 %v4030
    %v4209 = vunpack.c.h.b16 %v4030
    %v4210 = vunpack.c.l.b16 %v4031
    %v4211 = vunpack.c.h.b16 %v4031
    %v4212 = vunpack.c.l.b16 %v4032
    %v4213 = vunpack.c.h.b16 %v4032
    %v4214 = vunpack.c.l.b16 %v4033
    %v4215 = vunpack.c.h.b16 %v4033
    %v4216 = vunpack.c.l.b16 %v4034
    %v4217 = vunpack.c.h.b16 %v4034
    %v4218 = vunpack.c.l.b16 %v4035
    %v4219 = vunpack.c.h.b16 %v4035
    %v4220 = vunpack.c.l.b16 %v4036
    %v4221 = vunpack.c.h.b16 %v4036
    %v4222 = vunpack.c.l.b16 %v4037
    %v4223 = vunpack.c.h.b16 %v4037
    %v4224 = vunpack.c.l.b16 %v4038
    %v4225 = vunpack.c.h.b16 %v4038
    %v4226 = vunpack.c.l.b16 %v4039
    %v4227 = vunpack.c.h.b16 %v4039
    %v4228 = vunpack.c.l.b16 %v4040
    %v4229 = vunpack.c.h.b16 %v4040
    %v4230 = vunpack.c.l.b16 %v4041
    %v4231 = vunpack.c.h.b16 %v4041
    %v4232 = vunpack.c.l.b16 %v4042
    %v4233 = vunpack.c.h.b16 %v4042
    %v4234 = vunpack.c.l.b16 %v4043
    %v4235 = vunpack.c.h.b16 %v4043
    %v4236 = vunpack.c.l.b16 %v4044
    %v4237 = vunpack.c.h.b16 %v4044
    %v4238 = vunpack.c.l.b16 %v4045
    %v4239 = vunpack.c.h.b16 %v4045
    %v4240 = vunpack.c.l.b16 %v4046
    %v4241 = vunpack.c.h.b16 %v4046
    %v4242 = vunpack.c.l.b16 %v4047
    %v4243 = vunpack.c.h.b16 %v4047
    %v4244 = vunpack.c.l.b16 %v4048
    %v4245 = vunpack.c.h.b16 %v4048
    %v4246 = vunpack.c.l.b16 %v4049
    %v4247 = vunpack.c.h.b16 %v4049
    %v4248 = vunpack.c.l.b16 %v4050
    %v4249 = vunpack.c.h.b16 %v4050
    %v4250 = vunpack.c.l.b16 %v4051
    %v4251 = vunpack.c.h.b16 %v4051
    %v4252 = vunpack.c.l.b16 %v4052
    %v4253 = vunpack.c.h.b16 %v4052
    %v4254 = vunpack.c.l.b16 %v4053
    %v4255 = vunpack.c.h.b16 %v4053
    %v4256 = vunpack.c.l.b16 %v4054
    %v4257 = vunpack.c.h.b16 %v4054
    %v4258 = vunpack.c.l.b16 %v4055
    %v4259 = vunpack.c.h.b16 %v4055
    %v4260 = vpack.c.b16 %v4134, %v4132
    %v4261 = vpack.c.b16 %v4135, %v4133
    %v4262 = vpack.c.b16 %v4138, %v4136
    %v4263 = vpack.c.b16 %v4139, %v4137
    %v4264 = vpack.c.b16 %v4142, %v4140
    %v4265 = vpack.c.b16 %v4143, %v4141
    %v4266 = vpack.c.b16 %v4146, %v4144
    %v4267 = vpack.c.b16 %v4147, %v4145
    %v4268 = vpack.c.b16 %v4150, %v4148
    %v4269 = vpack.c.b16 %v4151, %v4149
    %v4270 = vpack.c.b16 %v4154, %v4152
    %v4271 = vpack.c.b16 %v4155, %v4153
    %v4272 = vpack.c.b16 %v4158, %v4156
    %v4273 = vpack.c.b16 %v4159, %v4157
    %v4274 = vpack.c.b16 %v4162, %v4160
    %v4275 = vpack.c.b16 %v4163, %v4161
    %v4276 = vpack.c.b16 %v4166, %v4164
    %v4277 = vpack.c.b16 %v4167, %v4165
    %v4278 = vpack.c.b16 %v4170, %v4168
    %v4279 = vpack.c.b16 %v4171, %v4169
    %v4280 = vpack.c.b16 %v4174, %v4172
    %v4281 = vpack.c.b16 %v4175, %v4173
    %v4282 = vpack.c.b16 %v4178, %v4176
    %v4283 = vpack.c.b16 %v4179, %v4177
    %v4284 = vpack.c.b16 %v4182, %v4180
    %v4285 = vpack.c.b16 %v4183, %v4181
    %v4286 = vpack.c.b16 %v4186, %v4184
    %v4287 = vpack.c.b16 %v4187, %v4185
    %v4288 = vpack.c.b16 %v4190, %v4188
    %v4289 = vpack.c.b16 %v4191, %v4189
    %v4290 = vpack.c.b16 %v4194, %v4192
    %v4291 = vpack.c.b16 %v4195, %v4193
    %v4292 = vpack.c.b16 %v4198, %v4196
    %v4293 = vpack.c.b16 %v4199, %v4197
    %v4294 = vpack.c.b16 %v4202, %v4200
    %v4295 = vpack.c.b16 %v4203, %v4201
    %v4296 = vpack.c.b16 %v4206, %v4204
    %v4297 = vpack.c.b16 %v4207, %v4205
    %v4298 = vpack.c.b16 %v4210, %v4208
    %v4299 = vpack.c.b16 %v4211, %v4209
    %v4300 = vpack.c.b16 %v4214, %v4212
    %v4301 = vpack.c.b16 %v4215, %v4213
    %v4302 = vpack.c.b16 %v4218, %v4216
    %v4303 = vpack.c.b16 %v4219, %v4217
    %v4304 = vpack.c.b16 %v4222, %v4220
    %v4305 = vpack.c.b16 %v4223, %v4221
    %v4306 = vpack.c.b16 %v4226, %v4224
    %v4307 = vpack.c.b16 %v4227, %v4225
    %v4308 = vpack.c.b16 %v4230, %v4228
    %v4309 = vpack.c.b16 %v4231, %v4229
    %v4310 = vpack.c.b16 %v4234, %v4232
    %v4311 = vpack.c.b16 %v4235, %v4233
    %v4312 = vpack.c.b16 %v4238, %v4236
    %v4313 = vpack.c.b16 %v4239, %v4237
    %v4314 = vpack.c.b16 %v4242, %v4240
    %v4315 = vpack.c.b16 %v4243, %v4241
    %v4316 = vpack.c.b16 %v4246, %v4244
    %v4317 = vpack.c.b16 %v4247, %v4245
    %v4318 = vpack.c.b16 %v4250, %v4248
    %v4319 = vpack.c.b16 %v4251, %v4249
    %v4320 = vpack.c.b16 %v4254, %v4252
    %v4321 = vpack.c.b16 %v4255, %v4253
    %v4322 = vpack.c.b16 %v4258, %v4256
    %v4323 = vpack.c.b16 %v4259, %v4257
    %4388 = vmatprep.subr.bf16.mxu0 %v4261
    %4389 = vmatpush1.bf16.msra.mxu0 %v4260
    %4390 = vmatprep.subr.bf16.mxu0 %v4263
    %4391 = vmatpush1.bf16.msra.mxu0 %v4262
    %4392 = vmatprep.subr.bf16.mxu0 %v4265
    %4393 = vmatpush1.bf16.msra.mxu0 %v4264
    %4394 = vmatprep.subr.bf16.mxu0 %v4267
    %4395 = vmatpush1.bf16.msra.mxu0 %v4266
    %4396 = vmatprep.subr.bf16.mxu0 %v4269
    %4397 = vmatpush1.bf16.msra.mxu0 %v4268
    %4398 = vmatprep.subr.bf16.mxu0 %v4271
    %4399 = vmatpush1.bf16.msra.mxu0 %v4270
    %4400 = vmatprep.subr.bf16.mxu0 %v4273
    %4401 = vmatpush1.bf16.msra.mxu0 %v4272
    %4402 = vmatprep.subr.bf16.mxu0 %v4275
    %4403 = vmatpush1.bf16.msra.mxu0 %v4274
    %4404 = vmatprep.subr.bf16.mxu0 %v4277
    %4405 = vmatpush1.bf16.msra.mxu0 %v4276
    %4406 = vmatprep.subr.bf16.mxu0 %v4279
    %4407 = vmatpush1.bf16.msra.mxu0 %v4278
    %4408 = vmatprep.subr.bf16.mxu0 %v4281
    %4409 = vmatpush1.bf16.msra.mxu0 %v4280
    %4410 = vmatprep.subr.bf16.mxu0 %v4283
    %4411 = vmatpush1.bf16.msra.mxu0 %v4282
    %4412 = vmatprep.subr.bf16.mxu0 %v4285
    %4413 = vmatpush1.bf16.msra.mxu0 %v4284
    %4414 = vmatprep.subr.bf16.mxu0 %v4287
    %4415 = vmatpush1.bf16.msra.mxu0 %v4286
    %4416 = vmatprep.subr.bf16.mxu0 %v4289
    %4417 = vmatpush1.bf16.msra.mxu0 %v4288
    %4418 = vmatprep.subr.bf16.mxu0 %v4291
    %4419 = vmatpush1.bf16.msra.mxu0 %v4290
    %4420 = vmatprep.mubr.bf16.mxu0 %v3929
    %4421 = vmatmul.mubr.bf16.gmra.mrb[0].mxu0 %v3928
    %v4422 = vpop.f32.mrb[0].mxu0
    %v4423 = vadd.f32 %v4061, %v4422
    %v4424 = vpop.f32.mrb[0].mxu0
    %v4425 = vadd.f32 %v4065, %v4424
    %v4426 = vpop.f32.mrb[0].mxu0
    %v4427 = vadd.f32 %v4061, %v4426
    %v4428 = vpop.f32.mrb[0].mxu0
    %v4429 = vadd.f32 %v4065, %v4428
    %4430 = vmatprep.mubr.bf16.mxu0 %v3933
    %4431 = vmatmul.mubr.bf16.gmra.mrb[0].mxu0 %v3932
    %v4432 = vpop.f32.mrb[0].mxu0
    %v4433 = vadd.f32 %v4061, %v4432
    %v4434 = vpop.f32.mrb[0].mxu0
    %v4435 = vadd.f32 %v4065, %v4434
    %v4436 = vpop.f32.mrb[0].mxu0
    %v4437 = vadd.f32 %v4061, %v4436
    %v4438 = vpop.f32.mrb[0].mxu0
    %v4439 = vadd.f32 %v4065, %v4438
    %4440 = vmatprep.mubr.bf16.mxu0 %v3937
    %4441 = vmatmul.mubr.bf16.gmra.mrb[0].mxu0 %v3936
    %v4442 = vpop.f32.mrb[0].mxu0
    %v4443 = vadd.f32 %v4061, %v4442
    %v4444 = vpop.f32.mrb[0].mxu0
    %v4445 = vadd.f32 %v4065, %v4444
    %v4446 = vpop.f32.mrb[0].mxu0
    %v4447 = vadd.f32 %v4061, %v4446
    %v4448 = vpop.f32.mrb[0].mxu0
    %v4449 = vadd.f32 %v4065, %v4448
    %4450 = vmatprep.mubr.bf16.mxu0 %v3941
    %4451 = vmatmul.mubr.bf16.gmra.mrb[0].mxu0 %v3940
    %v4452 = vpop.f32.mrb[0].mxu0
    %v4453 = vadd.f32 %v4061, %v4452
    %v4454 = vpop.f32.mrb[0].mxu0
    %v4455 = vadd.f32 %v4065, %v4454
    %v4456 = vpop.f32.mrb[0].mxu0
    %v4457 = vadd.f32 %v4061, %v4456
    %v4458 = vpop.f32.mrb[0].mxu0
    %v4459 = vadd.f32 %v4065, %v4458
    %4460 = vmatprep.mubr.bf16.mxu0 %v3945
    %4461 = vmatmul.mubr.bf16.gmra.mrb[0].mxu0 %v3944
    %v4462 = vpop.f32.mrb[0].mxu0
    %v4463 = vadd.f32 %v4061, %v4462
    %v4464 = vpop.f32.mrb[0].mxu0
    %v4465 = vadd.f32 %v4065, %v4464
    %v4466 = vpop.f32.mrb[0].mxu0
    %v4467 = vadd.f32 %v4061, %v4466
    %v4468 = vpop.f32.mrb[0].mxu0
    %v4469 = vadd.f32 %v4065, %v4468
    %4470 = vmatprep.mubr.bf16.mxu0 %v3949
    %4471 = vmatmul.mubr.bf16.gmra.mrb[0].mxu0 %v3948
    %v4472 = vpop.f32.mrb[0].mxu0
    %v4473 = vadd.f32 %v4061, %v4472
    %v4474 = vpop.f32.mrb[0].mxu0
    %v4475 = vadd.f32 %v4065, %v4474
    %v4476 = vpop.f32.mrb[0].mxu0
    %v4477 = vadd.f32 %v4061, %v4476
    %v4478 = vpop.f32.mrb[0].mxu0
    %v4479 = vadd.f32 %v4065, %v4478
    %4480 = vmatprep.mubr.bf16.mxu0 %v3953
    %4481 = vmatmul.mubr.bf16.gmra.mrb[0].mxu0 %v3952
    %v4482 = vpop.f32.mrb[0].mxu0
    %v4483 = vadd.f32 %v4061, %v4482
    %v4484 = vpop.f32.mrb[0].mxu0
    %v4485 = vadd.f32 %v4065, %v4484
    %v4486 = vpop.f32.mrb[0].mxu0
    %v4487 = vadd.f32 %v4061, %v4486
    %v4488 = vpop.f32.mrb[0].mxu0
    %v4489 = vadd.f32 %v4065, %v4488
    %4490 = vmatprep.mubr.bf16.mxu0 %v3957
    %4491 = vmatmul.mubr.bf16.gmra.mrb[0].mxu0 %v3956
    %v4492 = vpop.f32.mrb[0].mxu0
    %v4493 = vadd.f32 %v4061, %v4492
    %v4494 = vpop.f32.mrb[0].mxu0
    %v4495 = vadd.f32 %v4065, %v4494
    %v4496 = vpop.f32.mrb[0].mxu0
    %v4497 = vadd.f32 %v4061, %v4496
    %v4498 = vpop.f32.mrb[0].mxu0
    %v4499 = vadd.f32 %v4065, %v4498
    %4500 = vmatprep.mubr.bf16.mxu0 %v3961
    %4501 = vmatmul.mubr.bf16.gmra.mrb[0].mxu0 %v3960
    %v4502 = vpop.f32.mrb[0].mxu0
    %v4503 = vadd.f32 %v4061, %v4502
    %v4504 = vpop.f32.mrb[0].mxu0
    %v4505 = vadd.f32 %v4065, %v4504
    %v4506 = vpop.f32.mrb[0].mxu0
    %v4507 = vadd.f32 %v4061, %v4506
    %v4508 = vpop.f32.mrb[0].mxu0
    %v4509 = vadd.f32 %v4065, %v4508
    %4510 = vmatprep.mubr.bf16.mxu0 %v3965
    %4511 = vmatmul.mubr.bf16.gmra.mrb[0].mxu0 %v3964
    %v4512 = vpop.f32.mrb[0].mxu0
    %v4513 = vadd.f32 %v4061, %v4512
    %v4514 = vpop.f32.mrb[0].mxu0
    %v4515 = vadd.f32 %v4065, %v4514
    %v4516 = vpop.f32.mrb[0].mxu0
    %v4517 = vadd.f32 %v4061, %v4516
    %v4518 = vpop.f32.mrb[0].mxu0
    %v4519 = vadd.f32 %v4065, %v4518
    %4520 = vmatprep.mubr.bf16.mxu0 %v3969
    %4521 = vmatmul.mubr.bf16.gmra.mrb[0].mxu0 %v3968
    %v4522 = vpop.f32.mrb[0].mxu0
    %v4523 = vadd.f32 %v4061, %v4522
    %v4524 = vpop.f32.mrb[0].mxu0
    %v4525 = vadd.f32 %v4065, %v4524
    %v4526 = vpop.f32.mrb[0].mxu0
    %v4527 = vadd.f32 %v4061, %v4526
    %v4528 = vpop.f32.mrb[0].mxu0
    %v4529 = vadd.f32 %v4065, %v4528
    %4530 = vmatprep.mubr.bf16.mxu0 %v3973
    %4531 = vmatmul.mubr.bf16.gmra.mrb[0].mxu0 %v3972
    %v4532 = vpop.f32.mrb[0].mxu0
    %v4533 = vadd.f32 %v4061, %v4532
    %v4534 = vpop.f32.mrb[0].mxu0
    %v4535 = vadd.f32 %v4065, %v4534
    %v4536 = vpop.f32.mrb[0].mxu0
    %v4537 = vadd.f32 %v4061, %v4536
    %v4538 = vpop.f32.mrb[0].mxu0
    %v4539 = vadd.f32 %v4065, %v4538
    %4540 = vmatprep.mubr.bf16.mxu0 %v3977
    %4541 = vmatmul.mubr.bf16.gmra.mrb[0].mxu0 %v3976
    %v4542 = vpop.f32.mrb[0].mxu0
    %v4543 = vadd.f32 %v4061, %v4542
    %v4544 = vpop.f32.mrb[0].mxu0
    %v4545 = vadd.f32 %v4065, %v4544
    %v4546 = vpop.f32.mrb[0].mxu0
    %v4547 = vadd.f32 %v4061, %v4546
    %v4548 = vpop.f32.mrb[0].mxu0
    %v4549 = vadd.f32 %v4065, %v4548
    %4550 = vmatprep.mubr.bf16.mxu0 %v3981
    %4551 = vmatmul.mubr.bf16.gmra.mrb[0].mxu0 %v3980
    %v4552 = vpop.f32.mrb[0].mxu0
    %v4553 = vadd.f32 %v4061, %v4552
    %v4554 = vpop.f32.mrb[0].mxu0
    %v4555 = vadd.f32 %v4065, %v4554
    %v4556 = vpop.f32.mrb[0].mxu0
    %v4557 = vadd.f32 %v4061, %v4556
    %v4558 = vpop.f32.mrb[0].mxu0
    %v4559 = vadd.f32 %v4065, %v4558
    %4560 = vmatprep.mubr.bf16.mxu0 %v3985
    %4561 = vmatmul.mubr.bf16.gmra.mrb[0].mxu0 %v3984
    %v4562 = vpop.f32.mrb[0].mxu0
    %v4563 = vadd.f32 %v4061, %v4562
    %v4564 = vpop.f32.mrb[0].mxu0
    %v4565 = vadd.f32 %v4065, %v4564
    %v4566 = vpop.f32.mrb[0].mxu0
    %v4567 = vadd.f32 %v4061, %v4566
    %v4568 = vpop.f32.mrb[0].mxu0
    %v4569 = vadd.f32 %v4065, %v4568
    %4570 = vmatprep.mubr.bf16.mxu0 %v3989
    %4571 = vmatmul.mubr.bf16.gmra.mrb[0].mxu0 %v3988
    %v4572 = vpop.f32.mrb[0].mxu0
    %v4573 = vadd.f32 %v4061, %v4572
    %v4574 = vpop.f32.mrb[0].mxu0
    %v4575 = vadd.f32 %v4065, %v4574
    %v4576 = vpop.f32.mrb[0].mxu0
    %v4577 = vadd.f32 %v4061, %v4576
    %v4578 = vpop.f32.mrb[0].mxu0
    %v4579 = vadd.f32 %v4065, %v4578
    %4580 = vdwg.mxu0
    %4581 = vmatprep.subr.bf16.mxu0 %v4293
    %4582 = vmatpush1.bf16.msra.mxu0 %v4292
    %4583 = vmatprep.subr.bf16.mxu0 %v4295
    %4584 = vmatpush1.bf16.msra.mxu0 %v4294
    %4585 = vmatprep.subr.bf16.mxu0 %v4297
    %4586 = vmatpush1.bf16.msra.mxu0 %v4296
    %4587 = vmatprep.subr.bf16.mxu0 %v4299
    %4588 = vmatpush1.bf16.msra.mxu0 %v4298
    %4589 = vmatprep.subr.bf16.mxu0 %v4301
    %4590 = vmatpush1.bf16.msra.mxu0 %v4300
    %4591 = vmatprep.subr.bf16.mxu0 %v4303
    %4592 = vmatpush1.bf16.msra.mxu0 %v4302
    %4593 = vmatprep.subr.bf16.mxu0 %v4305
    %4594 = vmatpush1.bf16.msra.mxu0 %v4304
    %4595 = vmatprep.subr.bf16.mxu0 %v4307
    %4596 = vmatpush1.bf16.msra.mxu0 %v4306
    %4597 = vmatprep.subr.bf16.mxu0 %v4309
    %4598 = vmatpush1.bf16.msra.mxu0 %v4308
    %4599 = vmatprep.subr.bf16.mxu0 %v4311
    %4600 = vmatpush1.bf16.msra.mxu0 %v4310
    %4601 = vmatprep.subr.bf16.mxu0 %v4313
    %4602 = vmatpush1.bf16.msra.mxu0 %v4312
    %4603 = vmatprep.subr.bf16.mxu0 %v4315
    %4604 = vmatpush1.bf16.msra.mxu0 %v4314
    %4605 = vmatprep.subr.bf16.mxu0 %v4317
    %4606 = vmatpush1.bf16.msra.mxu0 %v4316
    %4607 = vmatprep.subr.bf16.mxu0 %v4319
    %4608 = vmatpush1.bf16.msra.mxu0 %v4318
    %4609 = vmatprep.subr.bf16.mxu0 %v4321
    %4610 = vmatpush1.bf16.msra.mxu0 %v4320
    %4611 = vmatprep.subr.bf16.mxu0 %v4323
    %4612 = vmatpush1.bf16.msra.mxu0 %v4322
    %4613 = vmatprep.mubr.bf16.mxu0 %v3931
    %4614 = vmatmul.mubr.bf16.gmra.mrb[0].mxu0 %v3930
    %v4615 = vpop.f32.mrb[0].mxu0
    %v4616 = vadd.f32 %v4423, %v4615
    %v4617 = vpop.f32.mrb[0].mxu0
    %v4618 = vadd.f32 %v4425, %v4617
    %v4619 = vpop.f32.mrb[0].mxu0
    %v4620 = vadd.f32 %v4427, %v4619
    %v4621 = vpop.f32.mrb[0].mxu0
    %v4622 = vadd.f32 %v4429, %v4621
    %4623 = vmatprep.mubr.bf16.mxu0 %v3935
    %4624 = vmatmul.mubr.bf16.gmra.mrb[0].mxu0 %v3934
    %v4625 = vpop.f32.mrb[0].mxu0
    %v4626 = vadd.f32 %v4433, %v4625
    %v4627 = vpop.f32.mrb[0].mxu0
    %v4628 = vadd.f32 %v4435, %v4627
    %v4629 = vpop.f32.mrb[0].mxu0
    %v4630 = vadd.f32 %v4437, %v4629
    %v4631 = vpop.f32.mrb[0].mxu0
    %v4632 = vadd.f32 %v4439, %v4631
    %4633 = vmatprep.mubr.bf16.mxu0 %v3939
    %4634 = vmatmul.mubr.bf16.gmra.mrb[0].mxu0 %v3938
    %v4635 = vpop.f32.mrb[0].mxu0
    %v4636 = vadd.f32 %v4443, %v4635
    %v4637 = vpop.f32.mrb[0].mxu0
    %v4638 = vadd.f32 %v4445, %v4637
    %v4639 = vpop.f32.mrb[0].mxu0
    %v4640 = vadd.f32 %v4447, %v4639
    %v4641 = vpop.f32.mrb[0].mxu0
    %v4642 = vadd.f32 %v4449, %v4641
    %4643 = vmatprep.mubr.bf16.mxu0 %v3943
    %4644 = vmatmul.mubr.bf16.gmra.mrb[0].mxu0 %v3942
    %v4645 = vpop.f32.mrb[0].mxu0
    %v4646 = vadd.f32 %v4453, %v4645
    %v4647 = vpop.f32.mrb[0].mxu0
    %v4648 = vadd.f32 %v4455, %v4647
    %v4649 = vpop.f32.mrb[0].mxu0
    %v4650 = vadd.f32 %v4457, %v4649
    %v4651 = vpop.f32.mrb[0].mxu0
    %v4652 = vadd.f32 %v4459, %v4651
    %4653 = vmatprep.mubr.bf16.mxu0 %v3947
    %4654 = vmatmul.mubr.bf16.gmra.mrb[0].mxu0 %v3946
    %v4655 = vpop.f32.mrb[0].mxu0
    %v4656 = vadd.f32 %v4463, %v4655
    %v4657 = vpop.f32.mrb[0].mxu0
    %v4658 = vadd.f32 %v4465, %v4657
    %v4659 = vpop.f32.mrb[0].mxu0
    %v4660 = vadd.f32 %v4467, %v4659
    %v4661 = vpop.f32.mrb[0].mxu0
    %v4662 = vadd.f32 %v4469, %v4661
    %4663 = vmatprep.mubr.bf16.mxu0 %v3951
    %4664 = vmatmul.mubr.bf16.gmra.mrb[0].mxu0 %v3950
    %v4665 = vpop.f32.mrb[0].mxu0
    %v4666 = vadd.f32 %v4473, %v4665
    %v4667 = vpop.f32.mrb[0].mxu0
    %v4668 = vadd.f32 %v4475, %v4667
    %v4669 = vpop.f32.mrb[0].mxu0
    %v4670 = vadd.f32 %v4477, %v4669
    %v4671 = vpop.f32.mrb[0].mxu0
    %v4672 = vadd.f32 %v4479, %v4671
    %4673 = vmatprep.mubr.bf16.mxu0 %v3955
    %4674 = vmatmul.mubr.bf16.gmra.mrb[0].mxu0 %v3954
    %v4675 = vpop.f32.mrb[0].mxu0
    %v4676 = vadd.f32 %v4483, %v4675
    %v4677 = vpop.f32.mrb[0].mxu0
    %v4678 = vadd.f32 %v4485, %v4677
    %v4679 = vpop.f32.mrb[0].mxu0
    %v4680 = vadd.f32 %v4487, %v4679
    %v4681 = vpop.f32.mrb[0].mxu0
    %v4682 = vadd.f32 %v4489, %v4681
    %4683 = vmatprep.mubr.bf16.mxu0 %v3959
    %4684 = vmatmul.mubr.bf16.gmra.mrb[0].mxu0 %v3958
    %v4685 = vpop.f32.mrb[0].mxu0
    %v4686 = vadd.f32 %v4493, %v4685
    %v4687 = vpop.f32.mrb[0].mxu0
    %v4688 = vadd.f32 %v4495, %v4687
    %v4689 = vpop.f32.mrb[0].mxu0
    %v4690 = vadd.f32 %v4497, %v4689
    %v4691 = vpop.f32.mrb[0].mxu0
    %v4692 = vadd.f32 %v4499, %v4691
    %4693 = vmatprep.mubr.bf16.mxu0 %v3963
    %4694 = vmatmul.mubr.bf16.gmra.mrb[0].mxu0 %v3962
    %v4695 = vpop.f32.mrb[0].mxu0
    %v4696 = vadd.f32 %v4503, %v4695
    %v4697 = vpop.f32.mrb[0].mxu0
    %v4698 = vadd.f32 %v4505, %v4697
    %v4699 = vpop.f32.mrb[0].mxu0
    %v4700 = vadd.f32 %v4507, %v4699
    %v4701 = vpop.f32.mrb[0].mxu0
    %v4702 = vadd.f32 %v4509, %v4701
    %4703 = vmatprep.mubr.bf16.mxu0 %v3967
    %4704 = vmatmul.mubr.bf16.gmra.mrb[0].mxu0 %v3966
    %v4705 = vpop.f32.mrb[0].mxu0
    %v4706 = vadd.f32 %v4513, %v4705
    %v4707 = vpop.f32.mrb[0].mxu0
    %v4708 = vadd.f32 %v4515, %v4707
    %v4709 = vpop.f32.mrb[0].mxu0
    %v4710 = vadd.f32 %v4517, %v4709
    %v4711 = vpop.f32.mrb[0].mxu0
    %v4712 = vadd.f32 %v4519, %v4711
    %4713 = vmatprep.mubr.bf16.mxu0 %v3971
    %4714 = vmatmul.mubr.bf16.gmra.mrb[0].mxu0 %v3970
    %v4715 = vpop.f32.mrb[0].mxu0
    %v4716 = vadd.f32 %v4523, %v4715
    %v4717 = vpop.f32.mrb[0].mxu0
    %v4718 = vadd.f32 %v4525, %v4717
    %v4719 = vpop.f32.mrb[0].mxu0
    %v4720 = vadd.f32 %v4527, %v4719
    %v4721 = vpop.f32.mrb[0].mxu0
    %v4722 = vadd.f32 %v4529, %v4721
    %4723 = vmatprep.mubr.bf16.mxu0 %v3975
    %4724 = vmatmul.mubr.bf16.gmra.mrb[0].mxu0 %v3974
    %v4725 = vpop.f32.mrb[0].mxu0
    %v4726 = vadd.f32 %v4533, %v4725
    %v4727 = vpop.f32.mrb[0].mxu0
    %v4728 = vadd.f32 %v4535, %v4727
    %v4729 = vpop.f32.mrb[0].mxu0
    %v4730 = vadd.f32 %v4537, %v4729
    %v4731 = vpop.f32.mrb[0].mxu0
    %v4732 = vadd.f32 %v4539, %v4731
    %4733 = vmatprep.mubr.bf16.mxu0 %v3979
    %4734 = vmatmul.mubr.bf16.gmra.mrb[0].mxu0 %v3978
    %v4735 = vpop.f32.mrb[0].mxu0
    %v4736 = vadd.f32 %v4543, %v4735
    %v4737 = vpop.f32.mrb[0].mxu0
    %v4738 = vadd.f32 %v4545, %v4737
    %v4739 = vpop.f32.mrb[0].mxu0
    %v4740 = vadd.f32 %v4547, %v4739
    %v4741 = vpop.f32.mrb[0].mxu0
    %v4742 = vadd.f32 %v4549, %v4741
    %4743 = vmatprep.mubr.bf16.mxu0 %v3983
    %4744 = vmatmul.mubr.bf16.gmra.mrb[0].mxu0 %v3982
    %v4745 = vpop.f32.mrb[0].mxu0
    %v4746 = vadd.f32 %v4553, %v4745
    %v4747 = vpop.f32.mrb[0].mxu0
    %v4748 = vadd.f32 %v4555, %v4747
    %v4749 = vpop.f32.mrb[0].mxu0
    %v4750 = vadd.f32 %v4557, %v4749
    %v4751 = vpop.f32.mrb[0].mxu0
    %v4752 = vadd.f32 %v4559, %v4751
    %4753 = vmatprep.mubr.bf16.mxu0 %v3987
    %4754 = vmatmul.mubr.bf16.gmra.mrb[0].mxu0 %v3986
    %v4755 = vpop.f32.mrb[0].mxu0
    %v4756 = vadd.f32 %v4563, %v4755
    %v4757 = vpop.f32.mrb[0].mxu0
    %v4758 = vadd.f32 %v4565, %v4757
    %v4759 = vpop.f32.mrb[0].mxu0
    %v4760 = vadd.f32 %v4567, %v4759
    %v4761 = vpop.f32.mrb[0].mxu0
    %v4762 = vadd.f32 %v4569, %v4761
    %4763 = vmatprep.mubr.bf16.mxu0 %v3991
    %4764 = vmatmul.mubr.bf16.gmra.mrb[0].mxu0 %v3990
    %v4765 = vpop.f32.mrb[0].mxu0
    %v4766 = vadd.f32 %v4573, %v4765
    %v4767 = vpop.f32.mrb[0].mxu0
    %v4768 = vadd.f32 %v4575, %v4767
    %v4769 = vpop.f32.mrb[0].mxu0
    %v4770 = vadd.f32 %v4577, %v4769
    %v4771 = vpop.f32.mrb[0].mxu0
    %v4772 = vadd.f32 %v4579, %v4771
    %4773 = vdwg.mxu0
    %vm4774 = vcmp.gt.f32.partialorder %v4616, 0.0
    %vm4775 = vcmp.gt.f32.partialorder %v4618, 0.0
    %vm4776 = vcmp.gt.f32.partialorder %v4620, 0.0
    %vm4777 = vcmp.gt.f32.partialorder %v4622, 0.0
    %vm4778 = vcmp.gt.f32.partialorder %v4626, 0.0
    %vm4779 = vcmp.gt.f32.partialorder %v4628, 0.0
    %vm4780 = vcmp.gt.f32.partialorder %v4630, 0.0
    %vm4781 = vcmp.gt.f32.partialorder %v4632, 0.0
    %vm4782 = vcmp.gt.f32.partialorder %v4636, 0.0
    %vm4783 = vcmp.gt.f32.partialorder %v4638, 0.0
    %vm4784 = vcmp.gt.f32.partialorder %v4640, 0.0
    %vm4785 = vcmp.gt.f32.partialorder %v4642, 0.0
    %vm4786 = vcmp.gt.f32.partialorder %v4646, 0.0
    %vm4787 = vcmp.gt.f32.partialorder %v4648, 0.0
    %vm4788 = vcmp.gt.f32.partialorder %v4650, 0.0
    %vm4789 = vcmp.gt.f32.partialorder %v4652, 0.0
    %vm4790 = vcmp.gt.f32.partialorder %v4656, 0.0
    %vm4791 = vcmp.gt.f32.partialorder %v4658, 0.0
    %vm4792 = vcmp.gt.f32.partialorder %v4660, 0.0
    %vm4793 = vcmp.gt.f32.partialorder %v4662, 0.0
    %vm4794 = vcmp.gt.f32.partialorder %v4666, 0.0
    %vm4795 = vcmp.gt.f32.partialorder %v4668, 0.0
    %vm4796 = vcmp.gt.f32.partialorder %v4670, 0.0
    %vm4797 = vcmp.gt.f32.partialorder %v4672, 0.0
    %vm4798 = vcmp.gt.f32.partialorder %v4676, 0.0
    %vm4799 = vcmp.gt.f32.partialorder %v4678, 0.0
    %vm4800 = vcmp.gt.f32.partialorder %v4680, 0.0
    %vm4801 = vcmp.gt.f32.partialorder %v4682, 0.0
    %vm4802 = vcmp.gt.f32.partialorder %v4686, 0.0
    %vm4803 = vcmp.gt.f32.partialorder %v4688, 0.0
    %vm4804 = vcmp.gt.f32.partialorder %v4690, 0.0
    %vm4805 = vcmp.gt.f32.partialorder %v4692, 0.0
    %vm4806 = vcmp.gt.f32.partialorder %v4696, 0.0
    %vm4807 = vcmp.gt.f32.partialorder %v4698, 0.0
    %vm4808 = vcmp.gt.f32.partialorder %v4700, 0.0
    %vm4809 = vcmp.gt.f32.partialorder %v4702, 0.0
    %vm4810 = vcmp.gt.f32.partialorder %v4706, 0.0
    %vm4811 = vcmp.gt.f32.partialorder %v4708, 0.0
    %vm4812 = vcmp.gt.f32.partialorder %v4710, 0.0
    %vm4813 = vcmp.gt.f32.partialorder %v4712, 0.0
    %vm4814 = vcmp.gt.f32.partialorder %v4716, 0.0
    %vm4815 = vcmp.gt.f32.partialorder %v4718, 0.0
    %vm4816 = vcmp.gt.f32.partialorder %v4720, 0.0
    %vm4817 = vcmp.gt.f32.partialorder %v4722, 0.0
    %vm4818 = vcmp.gt.f32.partialorder %v4726, 0.0
    %vm4819 = vcmp.gt.f32.partialorder %v4728, 0.0
    %vm4820 = vcmp.gt.f32.partialorder %v4730, 0.0
    %vm4821 = vcmp.gt.f32.partialorder %v4732, 0.0
    %vm4822 = vcmp.gt.f32.partialorder %v4736, 0.0
    %vm4823 = vcmp.gt.f32.partialorder %v4738, 0.0
    %vm4824 = vcmp.gt.f32.partialorder %v4740, 0.0
    %vm4825 = vcmp.gt.f32.partialorder %v4742, 0.0
    %vm4826 = vcmp.gt.f32.partialorder %v4746, 0.0
    %vm4827 = vcmp.gt.f32.partialorder %v4748, 0.0
    %vm4828 = vcmp.gt.f32.partialorder %v4750, 0.0
    %vm4829 = vcmp.gt.f32.partialorder %v4752, 0.0
    %vm4830 = vcmp.gt.f32.partialorder %v4756, 0.0
    %vm4831 = vcmp.gt.f32.partialorder %v4758, 0.0
    %vm4832 = vcmp.gt.f32.partialorder %v4760, 0.0
    %vm4833 = vcmp.gt.f32.partialorder %v4762, 0.0
    %vm4834 = vcmp.gt.f32.partialorder %v4766, 0.0
    %vm4835 = vcmp.gt.f32.partialorder %v4768, 0.0
    %vm4836 = vcmp.gt.f32.partialorder %v4770, 0.0
    %vm4837 = vcmp.gt.f32.partialorder %v4772, 0.0
    %v4838 = vmul.f32 %v4616, 0.01
    %v4839 = vmul.f32 %v4618, 0.01
    %v4840 = vmul.f32 %v4620, 0.01
    %v4841 = vmul.f32 %v4622, 0.01
    %v4842 = vmul.f32 %v4626, 0.01
    %v4843 = vmul.f32 %v4628, 0.01
    %v4844 = vmul.f32 %v4630, 0.01
    %v4845 = vmul.f32 %v4632, 0.01
    %v4846 = vmul.f32 %v4636, 0.01
    %v4847 = vmul.f32 %v4638, 0.01
    %v4848 = vmul.f32 %v4640, 0.01
    %v4849 = vmul.f32 %v4642, 0.01
    %v4850 = vmul.f32 %v4646, 0.01
    %v4851 = vmul.f32 %v4648, 0.01
    %v4852 = vmul.f32 %v4650, 0.01
    %v4853 = vmul.f32 %v4652, 0.01
    %v4854 = vmul.f32 %v4656, 0.01
    %v4855 = vmul.f32 %v4658, 0.01
    %v4856 = vmul.f32 %v4660, 0.01
    %v4857 = vmul.f32 %v4662, 0.01
    %v4858 = vmul.f32 %v4666, 0.01
    %v4859 = vmul.f32 %v4668, 0.01
    %v4860 = vmul.f32 %v4670, 0.01
    %v4861 = vmul.f32 %v4672, 0.01
    %v4862 = vmul.f32 %v4676, 0.01
    %v4863 = vmul.f32 %v4678, 0.01
    %v4864 = vmul.f32 %v4680, 0.01
    %v4865 = vmul.f32 %v4682, 0.01
    %v4866 = vmul.f32 %v4686, 0.01
    %v4867 = vmul.f32 %v4688, 0.01
    %v4868 = vmul.f32 %v4690, 0.01
    %v4869 = vmul.f32 %v4692, 0.01
    %v4870 = vmul.f32 %v4696, 0.01
    %v4871 = vmul.f32 %v4698, 0.01
    %v4872 = vmul.f32 %v4700, 0.01
    %v4873 = vmul.f32 %v4702, 0.01
    %v4874 = vmul.f32 %v4706, 0.01
    %v4875 = vmul.f32 %v4708, 0.01
    %v4876 = vmul.f32 %v4710, 0.01
    %v4877 = vmul.f32 %v4712, 0.01
    %v4878 = vmul.f32 %v4716, 0.01
    %v4879 = vmul.f32 %v4718, 0.01
    %v4880 = vmul.f32 %v4720, 0.01
    %v4881 = vmul.f32 %v4722, 0.01
    %v4882 = vmul.f32 %v4726, 0.01
    %v4883 = vmul.f32 %v4728, 0.01
    %v4884 = vmul.f32 %v4730, 0.01
    %v4885 = vmul.f32 %v4732, 0.01
    %v4886 = vmul.f32 %v4736, 0.01
    %v4887 = vmul.f32 %v4738, 0.01
    %v4888 = vmul.f32 %v4740, 0.01
    %v4889 = vmul.f32 %v4742, 0.01
    %v4890 = vmul.f32 %v4746, 0.01
    %v4891 = vmul.f32 %v4748, 0.01
    %v4892 = vmul.f32 %v4750, 0.01
    %v4893 = vmul.f32 %v4752, 0.01
    %v4894 = vmul.f32 %v4756, 0.01
    %v4895 = vmul.f32 %v4758, 0.01
    %v4896 = vmul.f32 %v4760, 0.01
    %v4897 = vmul.f32 %v4762, 0.01
    %v4898 = vmul.f32 %v4766, 0.01
    %v4899 = vmul.f32 %v4768, 0.01
    %v4900 = vmul.f32 %v4770, 0.01
    %v4901 = vmul.f32 %v4772, 0.01
    %v4902 = vsel %vm4774, %v4616, %v4838
    %v4903 = vsel %vm4775, %v4618, %v4839
    %v4904 = vsel %vm4776, %v4620, %v4840
    %v4905 = vsel %vm4777, %v4622, %v4841
    %v4906 = vsel %vm4778, %v4626, %v4842
    %v4907 = vsel %vm4779, %v4628, %v4843
    %v4908 = vsel %vm4780, %v4630, %v4844
    %v4909 = vsel %vm4781, %v4632, %v4845
    %v4910 = vsel %vm4782, %v4636, %v4846
    %v4911 = vsel %vm4783, %v4638, %v4847
    %v4912 = vsel %vm4784, %v4640, %v4848
    %v4913 = vsel %vm4785, %v4642, %v4849
    %v4914 = vsel %vm4786, %v4646, %v4850
    %v4915 = vsel %vm4787, %v4648, %v4851
    %v4916 = vsel %vm4788, %v4650, %v4852
    %v4917 = vsel %vm4789, %v4652, %v4853
    %v4918 = vsel %vm4790, %v4656, %v4854
    %v4919 = vsel %vm4791, %v4658, %v4855
    %v4920 = vsel %vm4792, %v4660, %v4856
    %v4921 = vsel %vm4793, %v4662, %v4857
    %v4922 = vsel %vm4794, %v4666, %v4858
    %v4923 = vsel %vm4795, %v4668, %v4859
    %v4924 = vsel %vm4796, %v4670, %v4860
    %v4925 = vsel %vm4797, %v4672, %v4861
    %v4926 = vsel %vm4798, %v4676, %v4862
    %v4927 = vsel %vm4799, %v4678, %v4863
    %v4928 = vsel %vm4800, %v4680, %v4864
    %v4929 = vsel %vm4801, %v4682, %v4865
    %v4930 = vsel %vm4802, %v4686, %v4866
    %v4931 = vsel %vm4803, %v4688, %v4867
    %v4932 = vsel %vm4804, %v4690, %v4868
    %v4933 = vsel %vm4805, %v4692, %v4869
    %v4934 = vsel %vm4806, %v4696, %v4870
    %v4935 = vsel %vm4807, %v4698, %v4871
    %v4936 = vsel %vm4808, %v4700, %v4872
    %v4937 = vsel %vm4809, %v4702, %v4873
    %v4938 = vsel %vm4810, %v4706, %v4874
    %v4939 = vsel %vm4811, %v4708, %v4875
    %v4940 = vsel %vm4812, %v4710, %v4876
    %v4941 = vsel %vm4813, %v4712, %v4877
    %v4942 = vsel %vm4814, %v4716, %v4878
    %v4943 = vsel %vm4815, %v4718, %v4879
    %v4944 = vsel %vm4816, %v4720, %v4880
    %v4945 = vsel %vm4817, %v4722, %v4881
    %v4946 = vsel %vm4818, %v4726, %v4882
    %v4947 = vsel %vm4819, %v4728, %v4883
    %v4948 = vsel %vm4820, %v4730, %v4884
    %v4949 = vsel %vm4821, %v4732, %v4885
    %v4950 = vsel %vm4822, %v4736, %v4886
    %v4951 = vsel %vm4823, %v4738, %v4887
    %v4952 = vsel %vm4824, %v4740, %v4888
    %v4953 = vsel %vm4825, %v4742, %v4889
    %v4954 = vsel %vm4826, %v4746, %v4890
    %v4955 = vsel %vm4827, %v4748, %v4891
    %v4956 = vsel %vm4828, %v4750, %v4892
    %v4957 = vsel %vm4829, %v4752, %v4893
    %v4958 = vsel %vm4830, %v4756, %v4894
    %v4959 = vsel %vm4831, %v4758, %v4895
    %v4960 = vsel %vm4832, %v4760, %v4896
    %v4961 = vsel %vm4833, %v4762, %v4897
    %v4962 = vsel %vm4834, %v4766, %v4898
    %v4963 = vsel %vm4835, %v4768, %v4899
    %v4964 = vsel %vm4836, %v4770, %v4900
    %v4965 = vsel %vm4837, %v4772, %v4901
    %v4966 = vpack.c.bf16 %v4904, %v4902
    %v4967 = vpack.c.bf16 %v4905, %v4903
    %v4968 = vpack.c.bf16 %v4908, %v4906
    %v4969 = vpack.c.bf16 %v4909, %v4907
    %v4970 = vpack.c.bf16 %v4912, %v4910
    %v4971 = vpack.c.bf16 %v4913, %v4911
    %v4972 = vpack.c.bf16 %v4916, %v4914
    %v4973 = vpack.c.bf16 %v4917, %v4915
    %v4974 = vpack.c.bf16 %v4920, %v4918
    %v4975 = vpack.c.bf16 %v4921, %v4919
    %v4976 = vpack.c.bf16 %v4924, %v4922
    %v4977 = vpack.c.bf16 %v4925, %v4923
    %v4978 = vpack.c.bf16 %v4928, %v4926
    %v4979 = vpack.c.bf16 %v4929, %v4927
    %v4980 = vpack.c.bf16 %v4932, %v4930
    %v4981 = vpack.c.bf16 %v4933, %v4931
    %v4982 = vpack.c.bf16 %v4936, %v4934
    %v4983 = vpack.c.bf16 %v4937, %v4935
    %v4984 = vpack.c.bf16 %v4940, %v4938
    %v4985 = vpack.c.bf16 %v4941, %v4939
    %v4986 = vpack.c.bf16 %v4944, %v4942
    %v4987 = vpack.c.bf16 %v4945, %v4943
    %v4988 = vpack.c.bf16 %v4948, %v4946
    %v4989 = vpack.c.bf16 %v4949, %v4947
    %v4990 = vpack.c.bf16 %v4952, %v4950
    %v4991 = vpack.c.bf16 %v4953, %v4951
    %v4992 = vpack.c.bf16 %v4956, %v4954
    %v4993 = vpack.c.bf16 %v4957, %v4955
    %v4994 = vpack.c.bf16 %v4960, %v4958
    %v4995 = vpack.c.bf16 %v4961, %v4959
    %v4996 = vpack.c.bf16 %v4964, %v4962
    %v4997 = vpack.c.bf16 %v4965, %v4963
    %v4998 = vld [vmem:[%s5] sm:$0xf]
    %v4999 = vld [vmem:[%s5 + $0x4] sm:$0xf]
    %v5000 = vld [vmem:[%s5 + $0x8] sm:$0xf]
    %v5001 = vld [vmem:[%s5 + $0xc] sm:$0xf]
    %v5002 = vld [vmem:[%s5 + $0x10] sm:$0xf]
    %v5003 = vld [vmem:[%s5 + $0x14] sm:$0xf]
    %v5004 = vld [vmem:[%s5 + $0x18] sm:$0xf]
    %v5005 = vld [vmem:[%s5 + $0x1c] sm:$0xf]
    %v5006 = vld [vmem:[%s5 + $0x20] sm:$0xf]
    %v5007 = vld [vmem:[%s5 + $0x24] sm:$0xf]
    %v5008 = vld [vmem:[%s5 + $0x28] sm:$0xf]
    %v5009 = vld [vmem:[%s5 + $0x2c] sm:$0xf]
    %v5010 = vld [vmem:[%s5 + $0x30] sm:$0xf]
    %v5011 = vld [vmem:[%s5 + $0x34] sm:$0xf]
    %v5012 = vld [vmem:[%s5 + $0x38] sm:$0xf]
    %v5013 = vld [vmem:[%s5 + $0x3c] sm:$0xf]
    %v5014 = vld [vmem:[%s5 + $0x40] sm:$0xf]
    %v5015 = vld [vmem:[%s5 + $0x44] sm:$0xf]
    %v5016 = vld [vmem:[%s5 + $0x48] sm:$0xf]
    %v5017 = vld [vmem:[%s5 + $0x4c] sm:$0xf]
    %v5018 = vld [vmem:[%s5 + $0x50] sm:$0xf]
    %v5019 = vld [vmem:[%s5 + $0x54] sm:$0xf]
    %v5020 = vld [vmem:[%s5 + $0x58] sm:$0xf]
    %v5021 = vld [vmem:[%s5 + $0x5c] sm:$0xf]
    %v5022 = vld [vmem:[%s5 + $0x60] sm:$0xf]
    %v5023 = vld [vmem:[%s5 + $0x64] sm:$0xf]
    %v5024 = vld [vmem:[%s5 + $0x68] sm:$0xf]
    %v5025 = vld [vmem:[%s5 + $0x6c] sm:$0xf]
    %v5026 = vld [vmem:[%s5 + $0x70] sm:$0xf]
    %v5027 = vld [vmem:[%s5 + $0x74] sm:$0xf]
    %v5028 = vld [vmem:[%s5 + $0x78] sm:$0xf]
    %v5029 = vld [vmem:[%s5 + $0x7c] sm:$0xf]
    %v5030 = vld [vmem:[#allocation7] sm:$0x1]
    %v5032 = vlaneseq
    %v5033 = vshrl.u32 %v5032, 7
    %v5034 = vsub.s32 0, %v5033
    %v5035 = vrot.slane %v5030, %v5034
    %v5069 = vunpack.c.l.b16 %v4998
    %v5070 = vunpack.c.l.b16 %v4999
    %v5071 = vunpack.c.l.b16 %v5000
    %v5072 = vunpack.c.l.b16 %v5001
    %v5073 = vunpack.c.l.b16 %v5002
    %v5074 = vunpack.c.l.b16 %v5003
    %v5075 = vunpack.c.l.b16 %v5004
    %v5076 = vunpack.c.l.b16 %v5005
    %v5077 = vunpack.c.l.b16 %v5006
    %v5078 = vunpack.c.l.b16 %v5007
    %v5079 = vunpack.c.l.b16 %v5008
    %v5080 = vunpack.c.l.b16 %v5009
    %v5081 = vunpack.c.l.b16 %v5010
    %v5082 = vunpack.c.l.b16 %v5011
    %v5083 = vunpack.c.l.b16 %v5012
    %v5084 = vunpack.c.l.b16 %v5013
    %v5085 = vunpack.c.l.b16 %v5014
    %v5086 = vunpack.c.l.b16 %v5015
    %v5087 = vunpack.c.l.b16 %v5016
    %v5088 = vunpack.c.l.b16 %v5017
    %v5089 = vunpack.c.l.b16 %v5018
    %v5090 = vunpack.c.l.b16 %v5019
    %v5091 = vunpack.c.l.b16 %v5020
    %v5092 = vunpack.c.l.b16 %v5021
    %v5093 = vunpack.c.l.b16 %v5022
    %v5094 = vunpack.c.l.b16 %v5023
    %v5095 = vunpack.c.l.b16 %v5024
    %v5096 = vunpack.c.l.b16 %v5025
    %v5097 = vunpack.c.l.b16 %v5026
    %v5098 = vunpack.c.l.b16 %v5027
    %v5099 = vunpack.c.l.b16 %v5028
    %v5100 = vunpack.c.l.b16 %v5029
    %v5101 = vpack.c.b16 %v5070, %v5069
    %v5102 = vpack.c.b16 %v5072, %v5071
    %v5103 = vpack.c.b16 %v5074, %v5073
    %v5104 = vpack.c.b16 %v5076, %v5075
    %v5105 = vpack.c.b16 %v5078, %v5077
    %v5106 = vpack.c.b16 %v5080, %v5079
    %v5107 = vpack.c.b16 %v5082, %v5081
    %v5108 = vpack.c.b16 %v5084, %v5083
    %v5109 = vpack.c.b16 %v5086, %v5085
    %v5110 = vpack.c.b16 %v5088, %v5087
    %v5111 = vpack.c.b16 %v5090, %v5089
    %v5112 = vpack.c.b16 %v5092, %v5091
    %v5113 = vpack.c.b16 %v5094, %v5093
    %v5114 = vpack.c.b16 %v5096, %v5095
    %v5115 = vpack.c.b16 %v5098, %v5097
    %v5116 = vpack.c.b16 %v5100, %v5099
    %5133 = vmatprep.subr.bf16.mxu0 0
    %5134 = vmatpush1.bf16.msra.mxu0 %v5101
    %5135 = vmatprep.subr.bf16.mxu0 0
    %5136 = vmatpush1.bf16.msra.mxu0 %v5102
    %5137 = vmatprep.subr.bf16.mxu0 0
    %5138 = vmatpush1.bf16.msra.mxu0 %v5103
    %5139 = vmatprep.subr.bf16.mxu0 0
    %5140 = vmatpush1.bf16.msra.mxu0 %v5104
    %5141 = vmatprep.subr.bf16.mxu0 0
    %5142 = vmatpush1.bf16.msra.mxu0 %v5105
    %5143 = vmatprep.subr.bf16.mxu0 0
    %5144 = vmatpush1.bf16.msra.mxu0 %v5106
    %5145 = vmatprep.subr.bf16.mxu0 0
    %5146 = vmatpush1.bf16.msra.mxu0 %v5107
    %5147 = vmatprep.subr.bf16.mxu0 0
    %5148 = vmatpush1.bf16.msra.mxu0 %v5108
    %5149 = vmatprep.subr.bf16.mxu0 0
    %5150 = vmatpush1.bf16.msra.mxu0 %v5109
    %5151 = vmatprep.subr.bf16.mxu0 0
    %5152 = vmatpush1.bf16.msra.mxu0 %v5110
    %5153 = vmatprep.subr.bf16.mxu0 0
    %5154 = vmatpush1.bf16.msra.mxu0 %v5111
    %5155 = vmatprep.subr.bf16.mxu0 0
    %5156 = vmatpush1.bf16.msra.mxu0 %v5112
    %5157 = vmatprep.subr.bf16.mxu0 0
    %5158 = vmatpush1.bf16.msra.mxu0 %v5113
    %5159 = vmatprep.subr.bf16.mxu0 0
    %5160 = vmatpush1.bf16.msra.mxu0 %v5114
    %5161 = vmatprep.subr.bf16.mxu0 0
    %5162 = vmatpush1.bf16.msra.mxu0 %v5115
    %5163 = vmatprep.subr.bf16.mxu0 0
    %5164 = vmatpush1.bf16.msra.mxu0 %v5116
    %5165 = vmatprep.mubr.bf16.mxu0 %v4967
    %5166 = vmatmul.mubr.bf16.gmra.mrb[0].mxu0 %v4966
    %v5167 = vpop.f32.mrb[0].mxu0
    %v5168 = vadd.f32 %v5035, %v5167
    %v5169 = vpop.f32.mrb[0].mxu0
    %v5170 = vpop.f32.mrb[0].mxu0
    %v5171 = vadd.f32 %v5035, %v5170
    %v5172 = vpop.f32.mrb[0].mxu0
    %5173 = vmatprep.mubr.bf16.mxu0 %v4969
    %5174 = vmatmul.mubr.bf16.gmra.mrb[0].mxu0 %v4968
    %v5175 = vpop.f32.mrb[0].mxu0
    %v5176 = vadd.f32 %v5035, %v5175
    %v5177 = vpop.f32.mrb[0].mxu0
    %v5178 = vpop.f32.mrb[0].mxu0
    %v5179 = vadd.f32 %v5035, %v5178
    %v5180 = vpop.f32.mrb[0].mxu0
    %5181 = vmatprep.mubr.bf16.mxu0 %v4971
    %5182 = vmatmul.mubr.bf16.gmra.mrb[0].mxu0 %v4970
    %v5183 = vpop.f32.mrb[0].mxu0
    %v5184 = vadd.f32 %v5035, %v5183
    %v5185 = vpop.f32.mrb[0].mxu0
    %v5186 = vpop.f32.mrb[0].mxu0
    %v5187 = vadd.f32 %v5035, %v5186
    %v5188 = vpop.f32.mrb[0].mxu0
    %5189 = vmatprep.mubr.bf16.mxu0 %v4973
    %5190 = vmatmul.mubr.bf16.gmra.mrb[0].mxu0 %v4972
    %v5191 = vpop.f32.mrb[0].mxu0
    %v5192 = vadd.f32 %v5035, %v5191
    %v5193 = vpop.f32.mrb[0].mxu0
    %v5194 = vpop.f32.mrb[0].mxu0
    %v5195 = vadd.f32 %v5035, %v5194
    %v5196 = vpop.f32.mrb[0].mxu0
    %5197 = vmatprep.mubr.bf16.mxu0 %v4975
    %5198 = vmatmul.mubr.bf16.gmra.mrb[0].mxu0 %v4974
    %v5199 = vpop.f32.mrb[0].mxu0
    %v5200 = vadd.f32 %v5035, %v5199
    %v5201 = vpop.f32.mrb[0].mxu0
    %v5202 = vpop.f32.mrb[0].mxu0
    %v5203 = vadd.f32 %v5035, %v5202
    %v5204 = vpop.f32.mrb[0].mxu0
    %5205 = vmatprep.mubr.bf16.mxu0 %v4977
    %5206 = vmatmul.mubr.bf16.gmra.mrb[0].mxu0 %v4976
    %v5207 = vpop.f32.mrb[0].mxu0
    %v5208 = vadd.f32 %v5035, %v5207
    %v5209 = vpop.f32.mrb[0].mxu0
    %v5210 = vpop.f32.mrb[0].mxu0
    %v5211 = vadd.f32 %v5035, %v5210
    %v5212 = vpop.f32.mrb[0].mxu0
    %5213 = vmatprep.mubr.bf16.mxu0 %v4979
    %5214 = vmatmul.mubr.bf16.gmra.mrb[0].mxu0 %v4978
    %v5215 = vpop.f32.mrb[0].mxu0
    %v5216 = vadd.f32 %v5035, %v5215
    %v5217 = vpop.f32.mrb[0].mxu0
    %v5218 = vpop.f32.mrb[0].mxu0
    %v5219 = vadd.f32 %v5035, %v5218
    %v5220 = vpop.f32.mrb[0].mxu0
    %5221 = vmatprep.mubr.bf16.mxu0 %v4981
    %5222 = vmatmul.mubr.bf16.gmra.mrb[0].mxu0 %v4980
    %v5223 = vpop.f32.mrb[0].mxu0
    %v5224 = vadd.f32 %v5035, %v5223
    %v5225 = vpop.f32.mrb[0].mxu0
    %v5226 = vpop.f32.mrb[0].mxu0
    %v5227 = vadd.f32 %v5035, %v5226
    %v5228 = vpop.f32.mrb[0].mxu0
    %5229 = vmatprep.mubr.bf16.mxu0 %v4983
    %5230 = vmatmul.mubr.bf16.gmra.mrb[0].mxu0 %v4982
    %v5231 = vpop.f32.mrb[0].mxu0
    %v5232 = vadd.f32 %v5035, %v5231
    %v5233 = vpop.f32.mrb[0].mxu0
    %v5234 = vpop.f32.mrb[0].mxu0
    %v5235 = vadd.f32 %v5035, %v5234
    %v5236 = vpop.f32.mrb[0].mxu0
    %5237 = vmatprep.mubr.bf16.mxu0 %v4985
    %5238 = vmatmul.mubr.bf16.gmra.mrb[0].mxu0 %v4984
    %v5239 = vpop.f32.mrb[0].mxu0
    %v5240 = vadd.f32 %v5035, %v5239
    %v5241 = vpop.f32.mrb[0].mxu0
    %v5242 = vpop.f32.mrb[0].mxu0
    %v5243 = vadd.f32 %v5035, %v5242
    %v5244 = vpop.f32.mrb[0].mxu0
    %5245 = vmatprep.mubr.bf16.mxu0 %v4987
    %5246 = vmatmul.mubr.bf16.gmra.mrb[0].mxu0 %v4986
    %v5247 = vpop.f32.mrb[0].mxu0
    %v5248 = vadd.f32 %v5035, %v5247
    %v5249 = vpop.f32.mrb[0].mxu0
    %v5250 = vpop.f32.mrb[0].mxu0
    %v5251 = vadd.f32 %v5035, %v5250
    %v5252 = vpop.f32.mrb[0].mxu0
    %5253 = vmatprep.mubr.bf16.mxu0 %v4989
    %5254 = vmatmul.mubr.bf16.gmra.mrb[0].mxu0 %v4988
    %v5255 = vpop.f32.mrb[0].mxu0
    %v5256 = vadd.f32 %v5035, %v5255
    %v5257 = vpop.f32.mrb[0].mxu0
    %v5258 = vpop.f32.mrb[0].mxu0
    %v5259 = vadd.f32 %v5035, %v5258
    %v5260 = vpop.f32.mrb[0].mxu0
    %5261 = vmatprep.mubr.bf16.mxu0 %v4991
    %5262 = vmatmul.mubr.bf16.gmra.mrb[0].mxu0 %v4990
    %v5263 = vpop.f32.mrb[0].mxu0
    %v5264 = vadd.f32 %v5035, %v5263
    %v5265 = vpop.f32.mrb[0].mxu0
    %v5266 = vpop.f32.mrb[0].mxu0
    %v5267 = vadd.f32 %v5035, %v5266
    %v5268 = vpop.f32.mrb[0].mxu0
    %5269 = vmatprep.mubr.bf16.mxu0 %v4993
    %5270 = vmatmul.mubr.bf16.gmra.mrb[0].mxu0 %v4992
    %v5271 = vpop.f32.mrb[0].mxu0
    %v5272 = vadd.f32 %v5035, %v5271
    %v5273 = vpop.f32.mrb[0].mxu0
    %v5274 = vpop.f32.mrb[0].mxu0
    %v5275 = vadd.f32 %v5035, %v5274
    %v5276 = vpop.f32.mrb[0].mxu0
    %5277 = vmatprep.mubr.bf16.mxu0 %v4995
    %5278 = vmatmul.mubr.bf16.gmra.mrb[0].mxu0 %v4994
    %v5279 = vpop.f32.mrb[0].mxu0
    %v5280 = vadd.f32 %v5035, %v5279
    %v5281 = vpop.f32.mrb[0].mxu0
    %v5282 = vpop.f32.mrb[0].mxu0
    %v5283 = vadd.f32 %v5035, %v5282
    %v5284 = vpop.f32.mrb[0].mxu0
    %5285 = vmatprep.mubr.bf16.mxu0 %v4997
    %5286 = vmatmul.mubr.bf16.gmra.mrb[0].mxu0 %v4996
    %v5287 = vpop.f32.mrb[0].mxu0
    %v5288 = vadd.f32 %v5035, %v5287
    %v5289 = vpop.f32.mrb[0].mxu0
    %v5290 = vpop.f32.mrb[0].mxu0
    %v5291 = vadd.f32 %v5035, %v5290
    %v5292 = vpop.f32.mrb[0].mxu0
    %5293 = vdwg.mxu0
    %v5294 = vxor.u32 %v5168, 2147483648
    %v5295 = vxor.u32 %v5171, 2147483648
    %v5296 = vxor.u32 %v5176, 2147483648
    %v5297 = vxor.u32 %v5179, 2147483648
    %v5298 = vxor.u32 %v5184, 2147483648
    %v5299 = vxor.u32 %v5187, 2147483648
    %v5300 = vxor.u32 %v5192, 2147483648
    %v5301 = vxor.u32 %v5195, 2147483648
    %v5302 = vxor.u32 %v5200, 2147483648
    %v5303 = vxor.u32 %v5203, 2147483648
    %v5304 = vxor.u32 %v5208, 2147483648
    %v5305 = vxor.u32 %v5211, 2147483648
    %v5306 = vxor.u32 %v5216, 2147483648
    %v5307 = vxor.u32 %v5219, 2147483648
    %v5308 = vxor.u32 %v5224, 2147483648
    %v5309 = vxor.u32 %v5227, 2147483648
    %v5310 = vxor.u32 %v5232, 2147483648
    %v5311 = vxor.u32 %v5235, 2147483648
    %v5312 = vxor.u32 %v5240, 2147483648
    %v5313 = vxor.u32 %v5243, 2147483648
    %v5314 = vxor.u32 %v5248, 2147483648
    %v5315 = vxor.u32 %v5251, 2147483648
    %v5316 = vxor.u32 %v5256, 2147483648
    %v5317 = vxor.u32 %v5259, 2147483648
    %v5318 = vxor.u32 %v5264, 2147483648
    %v5319 = vxor.u32 %v5267, 2147483648
    %v5320 = vxor.u32 %v5272, 2147483648
    %v5321 = vxor.u32 %v5275, 2147483648
    %v5322 = vxor.u32 %v5280, 2147483648
    %v5323 = vxor.u32 %v5283, 2147483648
    %v5324 = vxor.u32 %v5288, 2147483648
    %v5325 = vxor.u32 %v5291, 2147483648
    %v5326 = vmul.f32 %v5294, 1.442695
    %v5327 = vpow.pop %v5326
    %v5328 = vmul.f32 %v5295, 1.442695
    %v5329 = vpow.pop %v5328
    %v5330 = vmul.f32 %v5296, 1.442695
    %v5331 = vpow.pop %v5330
    %v5332 = vmul.f32 %v5297, 1.442695
    %v5333 = vpow.pop %v5332
    %v5334 = vmul.f32 %v5298, 1.442695
    %v5335 = vpow.pop %v5334
    %v5336 = vmul.f32 %v5299, 1.442695
    %v5337 = vpow.pop %v5336
    %v5338 = vmul.f32 %v5300, 1.442695
    %v5339 = vpow.pop %v5338
    %v5340 = vmul.f32 %v5301, 1.442695
    %v5341 = vpow.pop %v5340
    %v5342 = vmul.f32 %v5302, 1.442695
    %v5343 = vpow.pop %v5342
    %v5344 = vmul.f32 %v5303, 1.442695
    %v5345 = vpow.pop %v5344
    %v5346 = vmul.f32 %v5304, 1.442695
    %v5347 = vpow.pop %v5346
    %v5348 = vmul.f32 %v5305, 1.442695
    %v5349 = vpow.pop %v5348
    %v5350 = vmul.f32 %v5306, 1.442695
    %v5351 = vpow.pop %v5350
    %v5352 = vmul.f32 %v5307, 1.442695
    %v5353 = vpow.pop %v5352
    %v5354 = vmul.f32 %v5308, 1.442695
    %v5355 = vpow.pop %v5354
    %v5356 = vmul.f32 %v5309, 1.442695
    %v5357 = vpow.pop %v5356
    %v5358 = vmul.f32 %v5310, 1.442695
    %v5359 = vpow.pop %v5358
    %v5360 = vmul.f32 %v5311, 1.442695
    %v5361 = vpow.pop %v5360
    %v5362 = vmul.f32 %v5312, 1.442695
    %v5363 = vpow.pop %v5362
    %v5364 = vmul.f32 %v5313, 1.442695
    %v5365 = vpow.pop %v5364
    %v5366 = vmul.f32 %v5314, 1.442695
    %v5367 = vpow.pop %v5366
    %v5368 = vmul.f32 %v5315, 1.442695
    %v5369 = vpow.pop %v5368
    %v5370 = vmul.f32 %v5316, 1.442695
    %v5371 = vpow.pop %v5370
    %v5372 = vmul.f32 %v5317, 1.442695
    %v5373 = vpow.pop %v5372
    %v5374 = vmul.f32 %v5318, 1.442695
    %v5375 = vpow.pop %v5374
    %v5376 = vmul.f32 %v5319, 1.442695
    %v5377 = vpow.pop %v5376
    %v5378 = vmul.f32 %v5320, 1.442695
    %v5379 = vpow.pop %v5378
    %v5380 = vmul.f32 %v5321, 1.442695
    %v5381 = vpow.pop %v5380
    %v5382 = vmul.f32 %v5322, 1.442695
    %v5383 = vpow.pop %v5382
    %v5384 = vmul.f32 %v5323, 1.442695
    %v5385 = vpow.pop %v5384
    %v5386 = vmul.f32 %v5324, 1.442695
    %v5387 = vpow.pop %v5386
    %v5388 = vmul.f32 %v5325, 1.442695
    %v5389 = vpow.pop %v5388
    %v5390 = vadd.f32 %v5327, 1.0
    %v5391 = vadd.f32 %v5329, 1.0
    %v5392 = vadd.f32 %v5331, 1.0
    %v5393 = vadd.f32 %v5333, 1.0
    %v5394 = vadd.f32 %v5335, 1.0
    %v5395 = vadd.f32 %v5337, 1.0
    %v5396 = vadd.f32 %v5339, 1.0
    %v5397 = vadd.f32 %v5341, 1.0
    %v5398 = vadd.f32 %v5343, 1.0
    %v5399 = vadd.f32 %v5345, 1.0
    %v5400 = vadd.f32 %v5347, 1.0
    %v5401 = vadd.f32 %v5349, 1.0
    %v5402 = vadd.f32 %v5351, 1.0
    %v5403 = vadd.f32 %v5353, 1.0
    %v5404 = vadd.f32 %v5355, 1.0
    %v5405 = vadd.f32 %v5357, 1.0
    %v5406 = vadd.f32 %v5359, 1.0
    %v5407 = vadd.f32 %v5361, 1.0
    %v5408 = vadd.f32 %v5363, 1.0
    %v5409 = vadd.f32 %v5365, 1.0
    %v5410 = vadd.f32 %v5367, 1.0
    %v5411 = vadd.f32 %v5369, 1.0
    %v5412 = vadd.f32 %v5371, 1.0
    %v5413 = vadd.f32 %v5373, 1.0
    %v5414 = vadd.f32 %v5375, 1.0
    %v5415 = vadd.f32 %v5377, 1.0
    %v5416 = vadd.f32 %v5379, 1.0
    %v5417 = vadd.f32 %v5381, 1.0
    %v5418 = vadd.f32 %v5383, 1.0
    %v5419 = vadd.f32 %v5385, 1.0
    %v5420 = vadd.f32 %v5387, 1.0
    %v5421 = vadd.f32 %v5389, 1.0
    %v5422 = vrcp.pop %v5390
    %v5423 = vmul.f32 1.0, %v5422
    %v5424 = vrcp.pop %v5391
    %v5425 = vmul.f32 1.0, %v5424
    %v5426 = vrcp.pop %v5392
    %v5427 = vmul.f32 1.0, %v5426
    %v5428 = vrcp.pop %v5393
    %v5429 = vmul.f32 1.0, %v5428
    %v5430 = vrcp.pop %v5394
    %v5431 = vmul.f32 1.0, %v5430
    %v5432 = vrcp.pop %v5395
    %v5433 = vmul.f32 1.0, %v5432
    %v5434 = vrcp.pop %v5396
    %v5435 = vmul.f32 1.0, %v5434
    %v5436 = vrcp.pop %v5397
    %v5437 = vmul.f32 1.0, %v5436
    %v5438 = vrcp.pop %v5398
    %v5439 = vmul.f32 1.0, %v5438
    %v5440 = vrcp.pop %v5399
    %v5441 = vmul.f32 1.0, %v5440
    %v5442 = vrcp.pop %v5400
    %v5443 = vmul.f32 1.0, %v5442
    %v5444 = vrcp.pop %v5401
    %v5445 = vmul.f32 1.0, %v5444
    %v5446 = vrcp.pop %v5402
    %v5447 = vmul.f32 1.0, %v5446
    %v5448 = vrcp.pop %v5403
    %v5449 = vmul.f32 1.0, %v5448
    %v5450 = vrcp.pop %v5404
    %v5451 = vmul.f32 1.0, %v5450
    %v5452 = vrcp.pop %v5405
    %v5453 = vmul.f32 1.0, %v5452
    %v5454 = vrcp.pop %v5406
    %v5455 = vmul.f32 1.0, %v5454
    %v5456 = vrcp.pop %v5407
    %v5457 = vmul.f32 1.0, %v5456
    %v5458 = vrcp.pop %v5408
    %v5459 = vmul.f32 1.0, %v5458
    %v5460 = vrcp.pop %v5409
    %v5461 = vmul.f32 1.0, %v5460
    %v5462 = vrcp.pop %v5410
    %v5463 = vmul.f32 1.0, %v5462
    %v5464 = vrcp.pop %v5411
    %v5465 = vmul.f32 1.0, %v5464
    %v5466 = vrcp.pop %v5412
    %v5467 = vmul.f32 1.0, %v5466
    %v5468 = vrcp.pop %v5413
    %v5469 = vmul.f32 1.0, %v5468
    %v5470 = vrcp.pop %v5414
    %v5471 = vmul.f32 1.0, %v5470
    %v5472 = vrcp.pop %v5415
    %v5473 = vmul.f32 1.0, %v5472
    %v5474 = vrcp.pop %v5416
    %v5475 = vmul.f32 1.0, %v5474
    %v5476 = vrcp.pop %v5417
    %v5477 = vmul.f32 1.0, %v5476
    %v5478 = vrcp.pop %v5418
    %v5479 = vmul.f32 1.0, %v5478
    %v5480 = vrcp.pop %v5419
    %v5481 = vmul.f32 1.0, %v5480
    %v5482 = vrcp.pop %v5420
    %v5483 = vmul.f32 1.0, %v5482
    %v5484 = vrcp.pop %v5421
    %v5485 = vmul.f32 1.0, %v5484
    %5486 = vst [vmem:[#allocation8] sm:$0xff] %v5423
    %5487 = vst [vmem:[#allocation8 + $0x8] sm:$0xff] %v5425
    %5488 = vst [vmem:[#allocation8 + $0x10] sm:$0xff] %v5427
    %5489 = vst [vmem:[#allocation8 + $0x18] sm:$0xff] %v5429
    %5490 = vst [vmem:[#allocation8 + $0x20] sm:$0xff] %v5431
    %5491 = vst [vmem:[#allocation8 + $0x28] sm:$0xff] %v5433
    %5492 = vst [vmem:[#allocation8 + $0x30] sm:$0xff] %v5435
    %5493 = vst [vmem:[#allocation8 + $0x38] sm:$0xff] %v5437
    %5494 = vst [vmem:[#allocation8 + $0x40] sm:$0xff] %v5439
    %5495 = vst [vmem:[#allocation8 + $0x48] sm:$0xff] %v5441
    %5496 = vst [vmem:[#allocation8 + $0x50] sm:$0xff] %v5443
    %5497 = vst [vmem:[#allocation8 + $0x58] sm:$0xff] %v5445
    %5498 = vst [vmem:[#allocation8 + $0x60] sm:$0xff] %v5447
    %5499 = vst [vmem:[#allocation8 + $0x68] sm:$0xff] %v5449
    %5500 = vst [vmem:[#allocation8 + $0x70] sm:$0xff] %v5451
    %5501 = vst [vmem:[#allocation8 + $0x78] sm:$0xff] %v5453
    %5502 = vst [vmem:[#allocation8 + $0x80] sm:$0xff] %v5455
    %5503 = vst [vmem:[#allocation8 + $0x88] sm:$0xff] %v5457
    %5504 = vst [vmem:[#allocation8 + $0x90] sm:$0xff] %v5459
    %5505 = vst [vmem:[#allocation8 + $0x98] sm:$0xff] %v5461
    %5506 = vst [vmem:[#allocation8 + $0xa0] sm:$0xff] %v5463
    %5507 = vst [vmem:[#allocation8 + $0xa8] sm:$0xff] %v5465
    %5508 = vst [vmem:[#allocation8 + $0xb0] sm:$0xff] %v5467
    %5509 = vst [vmem:[#allocation8 + $0xb8] sm:$0xff] %v5469
    %5510 = vst [vmem:[#allocation8 + $0xc0] sm:$0xff] %v5471
    %5511 = vst [vmem:[#allocation8 + $0xc8] sm:$0xff] %v5473
    %5512 = vst [vmem:[#allocation8 + $0xd0] sm:$0xff] %v5475
    %5513 = vst [vmem:[#allocation8 + $0xd8] sm:$0xff] %v5477
    %5514 = vst [vmem:[#allocation8 + $0xe0] sm:$0xff] %v5479
    %5515 = vst [vmem:[#allocation8 + $0xe8] sm:$0xff] %v5481
    %5516 = vst [vmem:[#allocation8 + $0xf0] sm:$0xff] %v5483
    %5517 = vst [vmem:[#allocation8 + $0xf8] sm:$0xff] %v5485
    // Predicated region
    $region42: #{tpu_custom_call.1} parent=1 // pred_check
      _
    $region43: #{tpu_custom_call.1} parent=1 // pred_check_branch
      %5519 = sbr.rel (0) target = $region45
    $region44: #{tpu_custom_call.1} parent=1 // pred_region
      %s5521 = ssub.s32 4096, 4096
      %5522 = vsyncadd [#allocation4], %s5521
      %s5523 = sshll.u32 [#allocation8], 4
      %s5524 = int_to_ptr.vmem [resolvable:$true] %s5523
      %5529 = dma.vmem_to_hbm [thread:$0]  %s5524, 4096, %s7, [#allocation4], 128, 128, 8
    $region45: #{tpu_custom_call.1} parent=1 // pred_fallthru
      _
    // Predicated region
    $region46: #{tpu_custom_call.1} parent=1 // pred_check
      _
    $region47: #{tpu_custom_call.1} parent=1 // pred_check_branch
      %5531 = sbr.rel (0) target = $region49
    $region48: #{tpu_custom_call.1} parent=1 // pred_region
      %5532 = dma.done [#allocation4], 4096
    $region49: #{tpu_custom_call.1} parent=1 // pred_fallthru
      _
    %5533 = vsyncpa [#allocation3], 1
    %5534 = vsyncpa [#allocation6], 1
    %5535 = vsyncpa [#allocation4], 1

</llo_original>
